<compile_context>
chip_gen: v5e
topology: v5e:2x2
jax: 0.10.0
libtpu: 0.0.40
codegen_flags: <defaults>
</compile_context>

<pallas_src>
import functools

import jax
import jax.numpy as jnp
from jax.experimental import pallas as pl
from jax.experimental.pallas import tpu as pltpu

LANE = 128
_VMEM_LIMIT = 32 * 1024 * 1024  # explicit scoped-VMEM budget with headroom


def _round_up(x, m):
    return (x + m - 1) // m * m


def _pick_row_tile(h):
    """Largest divisor of H up to max(8, H//4): enough parallel blocks, small VMEM."""
    cap = min(h, max(8, h // 4))
    for cand in range(cap, 0, -1):
        if h % cand == 0:
            return cand
    return h


# ----------------------------------------------------------------------------
# Kernel 1: fused [BN-apply+ReLU of input] -> 3x3 conv (one K=9*Cin matmul)
#           -> bias -> write y + per-block (sum, sum-of-squares) stats.
# ----------------------------------------------------------------------------
def _conv_bn_stats_kernel(xp_ref, xc_ref, xn_ref, w_ref, b_ref, s_ref, t_ref,
                          y_ref, stats_ref, *, fuse_input_bn_relu):
    # xp_ref: (1, 1,  W, Cin)  halo row above (clamped)
    # xc_ref: (1, TH, W, Cin)  current row block
    # xn_ref: (1, 1,  W, Cin)  halo row below (clamped)
    # w_ref:  (9*Cin, Cout)    b_ref: (1, Cout)
    # s_ref/t_ref: (1, Cin)    previous layer's BN scale/shift (if fused)
    # y_ref:  (1, TH, W, Cout) stats_ref: (1, 1, 8, Cout)  row0=sum, row1=sumsq
    TH, W, Cin = xc_ref.shape[1], xc_ref.shape[2], xc_ref.shape[3]
    Cout = y_ref.shape[3]
    ti = pl.program_id(1)
    n_ti = pl.num_programs(1)

    def prep(v):
        v = v.astype(jnp.float32)
        if fuse_input_bn_relu:
            s = s_ref[0][None, None, :].astype(jnp.float32)
            t = t_ref[0][None, None, :].astype(jnp.float32)
            v = jnp.maximum(v * s + t, 0.0)
        return v

    cur = prep(xc_ref[0])                         # (TH, W, Cin)
    top = prep(xp_ref[0])                         # (1,  W, Cin)
    bot = prep(xn_ref[0])                         # (1,  W, Cin)
    zero_row = jnp.zeros_like(top)
    # Zero padding lives in post-activation space -> literal zeros at the edges.
    top = jnp.where(ti > 0, top, zero_row)
    bot = jnp.where(ti < n_ti - 1, bot, zero_row)

    xh = jnp.concatenate([top, cur, bot], axis=0)         # (TH+2, W, Cin)
    zcol = jnp.zeros((TH + 2, 1, Cin), jnp.float32)
    xh = jnp.concatenate([zcol, xh, zcol], axis=1)        # (TH+2, W+2, Cin)

    # im2col over the 3x3 taps -> one lane-dense K = 9*Cin MXU matmul.
    cols = [xh[kh:kh + TH, kw:kw + W, :] for kh in range(3) for kw in range(3)]
    patch = jnp.concatenate(cols, axis=-1).reshape(TH * W, 9 * Cin)
    acc = jnp.dot(patch, w_ref[...].astype(jnp.float32),
                  preferred_element_type=jnp.float32)     # (TH*W, Cout)
    acc = acc + b_ref[0][None, :].astype(jnp.float32)

    y_ref[...] = acc.reshape(1, TH, W, Cout).astype(y_ref.dtype)

    ssum = jnp.sum(acc, axis=0)                           # (Cout,)
    ssq = jnp.sum(acc * acc, axis=0)                      # (Cout,)
    stats = jnp.concatenate(
        [ssum[None, :], ssq[None, :], jnp.zeros((6, Cout), jnp.float32)], axis=0)
    stats_ref[...] = stats.reshape(1, 1, 8, Cout)


def _conv_bn_stats(x_p, w_r, b_p, in_scale, in_shift, fuse_input_bn_relu,
                   row_tile):
    """x_p: (N,H,W,Cin_p) NHWC channel-padded. w_r: (9*Cin_p, Cout_p)."""
    N, H, W, Cin_p = x_p.shape
    Cout_p = w_r.shape[1]
    n_th = H // row_tile
    kernel = functools.partial(_conv_bn_stats_kernel,
                               fuse_input_bn_relu=fuse_input_bn_relu)

    y, stats = pl.pallas_call(
        kernel,
        out_shape=(
            jax.ShapeDtypeStruct((N, H, W, Cout_p), jnp.float32),
            jax.ShapeDtypeStruct((N, n_th, 8, Cout_p), jnp.float32),
        ),
        grid_spec=pltpu.PrefetchScalarGridSpec(
            num_scalar_prefetch=0,
            grid=(N, n_th),
            in_specs=[
                # halo row above (1-row block; index is a row index, clamped)
                pl.BlockSpec((1, 1, W, Cin_p),
                             lambda n, t: (n, jnp.maximum(t * row_tile - 1, 0), 0, 0)),
                # current TH-row block
                pl.BlockSpec((1, row_tile, W, Cin_p), lambda n, t: (n, t, 0, 0)),
                # halo row below (clamped to last row)
                pl.BlockSpec((1, 1, W, Cin_p),
                             lambda n, t: (n, jnp.minimum((t + 1) * row_tile, H - 1), 0, 0)),
                pl.BlockSpec((9 * Cin_p, Cout_p), lambda n, t: (0, 0)),
                pl.BlockSpec((1, Cout_p), lambda n, t: (0, 0)),
                pl.BlockSpec((1, Cin_p), lambda n, t: (0, 0)),
                pl.BlockSpec((1, Cin_p), lambda n, t: (0, 0)),
            ],
            out_specs=[
                pl.BlockSpec((1, row_tile, W, Cout_p), lambda n, t: (n, t, 0, 0)),
                pl.BlockSpec((1, 1, 8, Cout_p), lambda n, t: (n, t, 0, 0)),
            ],
        ),
        compiler_params=pltpu.CompilerParams(
            dimension_semantics=("parallel", "parallel"),
            vmem_limit_bytes=_VMEM_LIMIT),
    )(x_p, x_p, x_p, w_r, b_p, in_scale, in_shift)
    return y, stats


# ----------------------------------------------------------------------------
# Kernel 2: lane-dense elementwise BN-apply + ReLU (final epilogue only).
# ----------------------------------------------------------------------------
def _bn_relu_kernel(y_ref, s_ref, t_ref, o_ref):
    y = y_ref[...].astype(jnp.float32)                       # (1, TH, W, C)
    s = s_ref[0][None, None, None, :].astype(jnp.float32)
    t = t_ref[0][None, None, None, :].astype(jnp.float32)
    o_ref[...] = jnp.maximum(y * s + t, 0.0).astype(o_ref.dtype)


def _bn_relu(y, scale, shift, row_tile):
    N, H, W, C = y.shape
    n_th = H // row_tile
    return pl.pallas_call(
        _bn_relu_kernel,
        out_shape=jax.ShapeDtypeStruct((N, H, W, C), jnp.float32),
        grid_spec=pltpu.PrefetchScalarGridSpec(
            num_scalar_prefetch=0,
            grid=(N, n_th),
            in_specs=[
                pl.BlockSpec((1, row_tile, W, C), lambda n, t: (n, t, 0, 0)),
                pl.BlockSpec((1, C), lambda n, t: (0, 0)),
                pl.BlockSpec((1, C), lambda n, t: (0, 0)),
            ],
            out_specs=pl.BlockSpec((1, row_tile, W, C), lambda n, t: (n, t, 0, 0)),
        ),
        compiler_params=pltpu.CompilerParams(
            dimension_semantics=("parallel", "parallel"),
            vmem_limit_bytes=_VMEM_LIMIT),
    )(y, scale, shift)


# ----------------------------------------------------------------------------
# BN stats finalization (tiny per-channel glue on the per-block partials).
# ----------------------------------------------------------------------------
def _bn_scale_shift(stats, count, gamma_p, beta_p, eps):
    ssum = jnp.sum(stats[:, :, 0, :], axis=(0, 1))
    ssq = jnp.sum(stats[:, :, 1, :], axis=(0, 1))
    mean = ssum / count
    var = jnp.maximum(ssq / count - mean * mean, 0.0)   # biased (train-mode) var
    scale = gamma_p * jax.lax.rsqrt(var + eps)
    shift = beta_p - mean * scale
    c = gamma_p.shape[0]
    return scale.reshape(1, c), shift.reshape(1, c)


# ----------------------------------------------------------------------------
# Parameter packing helpers (done once, outside the hot path).
# ----------------------------------------------------------------------------
def _pad_vec(v, c_p):
    return jnp.pad(v.astype(jnp.float32), (0, c_p - v.shape[0]))


def _pack_weight(w_hwio, cin_p, cout_p):
    kh, kw, cin, cout = w_hwio.shape
    w = jnp.pad(w_hwio.astype(jnp.float32),
                ((0, 0), (0, 0), (0, cin_p - cin), (0, cout_p - cout)))
    return w.reshape(kh * kw * cin_p, cout_p)   # K = 9*Cin_p, lane-dense Cout_p


# ----------------------------------------------------------------------------
# DoubleConv forward: Conv -> BN -> ReLU -> Conv -> BN -> ReLU
# ----------------------------------------------------------------------------
def double_conv(x_nchw, params, eps=1e-5):
    N, Cin, H, W = x_nchw.shape
    Cout = params["w1"].shape[-1]
    Cin_p = _round_up(Cin, LANE)
    Cout_p = _round_up(Cout, LANE)
    row_tile = _pick_row_tile(H)

    # NCHW -> NHWC once at the boundary; pad channels to a lane-dense multiple
    # of 128 (no-op for realistic channel counts that are already 128-aligned).
    x = jnp.transpose(x_nchw, (0, 2, 3, 1))
    x = jnp.pad(x, ((0, 0), (0, 0), (0, 0), (0, Cin_p - Cin))).astype(jnp.float32)

    w1 = _pack_weight(params["w1"], Cin_p, Cout_p)
    b1 = _pad_vec(params["b1"], Cout_p).reshape(1, Cout_p)
    g1 = _pad_vec(params["g1"], Cout_p)
    be1 = _pad_vec(params["beta1"], Cout_p)
    w2 = _pack_weight(params["w2"], Cout_p, Cout_p)
    b2 = _pad_vec(params["b2"], Cout_p).reshape(1, Cout_p)
    g2 = _pad_vec(params["g2"], Cout_p)
    be2 = _pad_vec(params["beta2"], Cout_p)

    dummy_scale = jnp.ones((1, Cin_p), jnp.float32)
    dummy_shift = jnp.zeros((1, Cin_p), jnp.float32)
    count = float(N * H * W)

    # Layer 1: conv + bias, emit BN1 partial stats.
    y1, st1 = _conv_bn_stats(x, w1, b1, dummy_scale, dummy_shift,
                             fuse_input_bn_relu=False, row_tile=row_tile)
    s1, t1 = _bn_scale_shift(st1, count, g1, be1, eps)

    # Layer 2: BN1-apply + ReLU fused into the conv prologue, emit BN2 stats.
    y2, st2 = _conv_bn_stats(y1, w2, b2, s1, t1,
                             fuse_input_bn_relu=True, row_tile=row_tile)
    s2, t2 = _bn_scale_shift(st2, count, g2, be2, eps)

    # Final BN2-apply + ReLU epilogue.
    out = _bn_relu(y2, s2, t2, row_tile)

    out = out[..., :Cout]
    return jnp.transpose(out, (0, 3, 1, 2))     # NHWC -> NCHW


def init_params(key, cin, cout):
    ks = jax.random.split(key, 6)
    lim1 = 1.0 / (cin * 9) ** 0.5
    lim2 = 1.0 / (cout * 9) ** 0.5
    return {
        "w1": jax.random.uniform(ks[0], (3, 3, cin, cout), jnp.float32, -lim1, lim1),
        "b1": jax.random.uniform(ks[1], (cout,), jnp.float32, -lim1, lim1),
        "g1": jnp.ones((cout,), jnp.float32),
        "beta1": jnp.zeros((cout,), jnp.float32),
        "w2": jax.random.uniform(ks[2], (3, 3, cout, cout), jnp.float32, -lim2, lim2),
        "b2": jax.random.uniform(ks[3], (cout,), jnp.float32, -lim2, lim2),
        "g2": jnp.ones((cout,), jnp.float32),
        "beta2": jnp.zeros((cout,), jnp.float32),
    }


# Pure-JAX reference (training-mode BatchNorm, biased batch variance).
def _ref_double_conv(x_nchw, params, eps=1e-5):
    x = jnp.transpose(x_nchw, (0, 2, 3, 1))

    def conv(x, w, b):
        return jax.lax.conv_general_dilated(
            x, w, window_strides=(1, 1), padding=((1, 1), (1, 1)),
            dimension_numbers=("NHWC", "HWIO", "NHWC")) + b[None, None, None, :]

    def bn_relu_ref(y, g, bt):
        m = jnp.mean(y, axis=(0, 1, 2))
        v = jnp.mean((y - m) ** 2, axis=(0, 1, 2))
        return jnp.maximum((y - m) / jnp.sqrt(v + eps) * g + bt, 0.0)

    y = bn_relu_ref(conv(x, params["w1"], params["b1"]), params["g1"], params["beta1"])
    y = bn_relu_ref(conv(y, params["w2"], params["b2"]), params["g2"], params["beta2"])
    return jnp.transpose(y, (0, 3, 1, 2))


if __name__ == "__main__":
    key = jax.random.PRNGKey(0)
    kx, kp = jax.random.split(key)

    N, Cin, Cout, H, W = 2, 4, 8, 16, 16
    x = jax.random.normal(kx, (N, Cin, H, W), jnp.float32)
    params = init_params(kp, Cin, Cout)

    fwd = jax.jit(double_conv)
    out = jax.block_until_ready(fwd(x, params))

    ref = _ref_double_conv(x, params)
    assert out.shape == (N, Cout, H, W)
    assert jnp.allclose(out, ref, atol=1e-3, rtol=1e-3), "mismatch vs reference"

    print("KERNEL_OK")
</pallas_src>

<mosaic_0001>
module attributes {stable_mosaic.version = 11 : i64} {
  func.func @_conv_bn_stats_kernel(%arg0: i32, %arg1: i32, %arg2: memref<1x1x16x128xf32, #tpu.memory_space<vmem>>, %arg3: memref<1x8x16x128xf32, #tpu.memory_space<vmem>>, %arg4: memref<1x1x16x128xf32, #tpu.memory_space<vmem>>, %arg5: memref<1152x128xf32, #tpu.memory_space<vmem>>, %arg6: memref<1x128xf32, #tpu.memory_space<vmem>>, %arg7: memref<1x128xf32, #tpu.memory_space<vmem>>, %arg8: memref<1x128xf32, #tpu.memory_space<vmem>>, %arg9: memref<1x8x16x128xf32, #tpu.memory_space<vmem>>, %arg10: memref<1x1x8x128xf32, #tpu.memory_space<vmem>>) attributes {dimension_semantics = [#tpu.dimension_semantics<parallel>, #tpu.dimension_semantics<parallel>], iteration_bounds = array<i64: 2, 2>, scalar_prefetch = 0 : i64, scratch_operands = 0 : i64, tpu.core_type = #tpu.core_type<tc>, window_params = [{transform_indices = @transform_0, window_bounds = array<i64: 1, 1, 16, 128>}, {transform_indices = @transform_1, window_bounds = array<i64: 1, 8, 16, 128>}, {transform_indices = @transform_2, window_bounds = array<i64: 1, 1, 16, 128>}, {pipeline_mode = #tpu.pipeline_mode<synchronous>, transform_indices = @transform_3, window_bounds = array<i64: 1152, 128>}, {pipeline_mode = #tpu.pipeline_mode<synchronous>, transform_indices = @transform_4, window_bounds = array<i64: 1, 128>}, {pipeline_mode = #tpu.pipeline_mode<synchronous>, transform_indices = @transform_5, window_bounds = array<i64: 1, 128>}, {pipeline_mode = #tpu.pipeline_mode<synchronous>, transform_indices = @transform_6, window_bounds = array<i64: 1, 128>}, {transform_indices = @transform_7, window_bounds = array<i64: 1, 8, 16, 128>}, {transform_indices = @transform_8, window_bounds = array<i64: 1, 1, 8, 128>}]} {
    %c0 = arith.constant 0 : index
    %c0_0 = arith.constant 0 : index
    %c0_1 = arith.constant 0 : index
    %c0_2 = arith.constant 0 : index
    %0 = vector.load %arg3[%c0, %c0_0, %c0_1, %c0_2] : memref<1x8x16x128xf32, #tpu.memory_space<vmem>>, vector<1x8x16x128xf32>
    %1 = vector.shape_cast %0 : vector<1x8x16x128xf32> to vector<8x16x128xf32>
    %c0_3 = arith.constant 0 : index
    %c0_4 = arith.constant 0 : index
    %2 = vector.load %arg7[%c0_3, %c0_4] : memref<1x128xf32, #tpu.memory_space<vmem>>, vector<1x128xf32>
    %3 = vector.shape_cast %2 : vector<1x128xf32> to vector<128xf32>
    %4 = vector.shape_cast %3 : vector<128xf32> to vector<1x1x128xf32>
    %c0_5 = arith.constant 0 : index
    %c0_6 = arith.constant 0 : index
    %5 = vector.load %arg8[%c0_5, %c0_6] : memref<1x128xf32, #tpu.memory_space<vmem>>, vector<1x128xf32>
    %6 = vector.shape_cast %5 : vector<1x128xf32> to vector<128xf32>
    %7 = vector.shape_cast %6 : vector<128xf32> to vector<1x1x128xf32>
    %8 = vector.broadcast %4 : vector<1x1x128xf32> to vector<8x16x128xf32>
    %9 = arith.mulf %1, %8 : vector<8x16x128xf32>
    %10 = vector.broadcast %7 : vector<1x1x128xf32> to vector<8x16x128xf32>
    %11 = arith.addf %9, %10 : vector<8x16x128xf32>
    %cst = arith.constant 0.000000e+00 : f32
    %12 = vector.broadcast %cst : f32 to vector<8x16x128xf32>
    %13 = arith.maximumf %11, %12 : vector<8x16x128xf32>
    %c0_7 = arith.constant 0 : index
    %c0_8 = arith.constant 0 : index
    %c0_9 = arith.constant 0 : index
    %c0_10 = arith.constant 0 : index
    %14 = vector.load %arg2[%c0_7, %c0_8, %c0_9, %c0_10] : memref<1x1x16x128xf32, #tpu.memory_space<vmem>>, vector<1x1x16x128xf32>
    %15 = vector.shape_cast %14 : vector<1x1x16x128xf32> to vector<1x16x128xf32>
    %c0_11 = arith.constant 0 : index
    %c0_12 = arith.constant 0 : index
    %16 = vector.load %arg7[%c0_11, %c0_12] : memref<1x128xf32, #tpu.memory_space<vmem>>, vector<1x128xf32>
    %17 = vector.shape_cast %16 : vector<1x128xf32> to vector<128xf32>
    %18 = vector.shape_cast %17 : vector<128xf32> to vector<1x1x128xf32>
    %c0_13 = arith.constant 0 : index
    %c0_14 = arith.constant 0 : index
    %19 = vector.load %arg8[%c0_13, %c0_14] : memref<1x128xf32, #tpu.memory_space<vmem>>, vector<1x128xf32>
    %20 = vector.shape_cast %19 : vector<1x128xf32> to vector<128xf32>
    %21 = vector.shape_cast %20 : vector<128xf32> to vector<1x1x128xf32>
    %22 = vector.broadcast %18 : vector<1x1x128xf32> to vector<1x16x128xf32>
    %23 = arith.mulf %15, %22 : vector<1x16x128xf32>
    %24 = vector.broadcast %21 : vector<1x1x128xf32> to vector<1x16x128xf32>
    %25 = arith.addf %23, %24 : vector<1x16x128xf32>
    %cst_15 = arith.constant 0.000000e+00 : f32
    %26 = vector.broadcast %cst_15 : f32 to vector<1x16x128xf32>
    %27 = arith.maximumf %25, %26 : vector<1x16x128xf32>
    %c0_16 = arith.constant 0 : index
    %c0_17 = arith.constant 0 : index
    %c0_18 = arith.constant 0 : index
    %c0_19 = arith.constant 0 : index
    %28 = vector.load %arg4[%c0_16, %c0_17, %c0_18, %c0_19] : memref<1x1x16x128xf32, #tpu.memory_space<vmem>>, vector<1x1x16x128xf32>
    %29 = vector.shape_cast %28 : vector<1x1x16x128xf32> to vector<1x16x128xf32>
    %c0_20 = arith.constant 0 : index
    %c0_21 = arith.constant 0 : index
    %30 = vector.load %arg7[%c0_20, %c0_21] : memref<1x128xf32, #tpu.memory_space<vmem>>, vector<1x128xf32>
    %31 = vector.shape_cast %30 : vector<1x128xf32> to vector<128xf32>
    %32 = vector.shape_cast %31 : vector<128xf32> to vector<1x1x128xf32>
    %c0_22 = arith.constant 0 : index
    %c0_23 = arith.constant 0 : index
    %33 = vector.load %arg8[%c0_22, %c0_23] : memref<1x128xf32, #tpu.memory_space<vmem>>, vector<1x128xf32>
    %34 = vector.shape_cast %33 : vector<1x128xf32> to vector<128xf32>
    %35 = vector.shape_cast %34 : vector<128xf32> to vector<1x1x128xf32>
    %36 = vector.broadcast %32 : vector<1x1x128xf32> to vector<1x16x128xf32>
    %37 = arith.mulf %29, %36 : vector<1x16x128xf32>
    %38 = vector.broadcast %35 : vector<1x1x128xf32> to vector<1x16x128xf32>
    %39 = arith.addf %37, %38 : vector<1x16x128xf32>
    %cst_24 = arith.constant 0.000000e+00 : f32
    %40 = vector.broadcast %cst_24 : f32 to vector<1x16x128xf32>
    %41 = arith.maximumf %39, %40 : vector<1x16x128xf32>
    %cst_25 = arith.constant 0.000000e+00 : f32
    %42 = vector.broadcast %cst_25 : f32 to vector<1x16x128xf32>
    %c0_i32 = arith.constant 0 : i32
    %43 = arith.cmpi sgt, %arg1, %c0_i32 : i32
    %44 = arith.select %43, %27, %42 : vector<1x16x128xf32>
    %c1_i32 = arith.constant 1 : i32
    %45 = arith.cmpi slt, %arg1, %c1_i32 : i32
    %46 = arith.select %45, %41, %42 : vector<1x16x128xf32>
    %47 = tpu.concatenate %44, %13, %46 in 0 : vector<1x16x128xf32>, vector<8x16x128xf32>, vector<1x16x128xf32> -> vector<10x16x128xf32>
    %cst_26 = arith.constant 0.000000e+00 : f32
    %48 = vector.broadcast %cst_26 : f32 to vector<10x1x128xf32>
    %49 = tpu.concatenate %48, %47, %48 in 1 : vector<10x1x128xf32>, vector<10x16x128xf32>, vector<10x1x128xf32> -> vector<10x18x128xf32>
    %50 = vector.extract_strided_slice %49 {offsets = [0, 0, 0], sizes = [8, 16, 128], strides = [1, 1, 1]} : vector<10x18x128xf32> to vector<8x16x128xf32>
    %51 = vector.extract_strided_slice %49 {offsets = [0, 1, 0], sizes = [8, 16, 128], strides = [1, 1, 1]} : vector<10x18x128xf32> to vector<8x16x128xf32>
    %52 = vector.extract_strided_slice %49 {offsets = [0, 2, 0], sizes = [8, 16, 128], strides = [1, 1, 1]} : vector<10x18x128xf32> to vector<8x16x128xf32>
    %53 = vector.extract_strided_slice %49 {offsets = [1, 0, 0], sizes = [8, 16, 128], strides = [1, 1, 1]} : vector<10x18x128xf32> to vector<8x16x128xf32>
    %54 = vector.extract_strided_slice %49 {offsets = [1, 1, 0], sizes = [8, 16, 128], strides = [1, 1, 1]} : vector<10x18x128xf32> to vector<8x16x128xf32>
    %55 = vector.extract_strided_slice %49 {offsets = [1, 2, 0], sizes = [8, 16, 128], strides = [1, 1, 1]} : vector<10x18x128xf32> to vector<8x16x128xf32>
    %56 = vector.extract_strided_slice %49 {offsets = [2, 0, 0], sizes = [8, 16, 128], strides = [1, 1, 1]} : vector<10x18x128xf32> to vector<8x16x128xf32>
    %57 = vector.extract_strided_slice %49 {offsets = [2, 1, 0], sizes = [8, 16, 128], strides = [1, 1, 1]} : vector<10x18x128xf32> to vector<8x16x128xf32>
    %58 = vector.extract_strided_slice %49 {offsets = [2, 2, 0], sizes = [8, 16, 128], strides = [1, 1, 1]} : vector<10x18x128xf32> to vector<8x16x128xf32>
    %59 = tpu.concatenate %50, %51, %52, %53, %54, %55, %56, %57, %58 in 2 : vector<8x16x128xf32>, vector<8x16x128xf32>, vector<8x16x128xf32>, vector<8x16x128xf32>, vector<8x16x128xf32>, vector<8x16x128xf32>, vector<8x16x128xf32>, vector<8x16x128xf32>, vector<8x16x128xf32> -> vector<8x16x1152xf32>
    %60 = vector.shape_cast %59 : vector<8x16x1152xf32> to vector<128x1152xf32>
    %c0_27 = arith.constant 0 : index
    %c0_28 = arith.constant 0 : index
    %61 = vector.load %arg5[%c0_27, %c0_28] : memref<1152x128xf32, #tpu.memory_space<vmem>>, vector<1152x128xf32>
    %cst_29 = arith.constant dense<0.000000e+00> : vector<128x128xf32>
    %62 = tpu.matmul %60, %61, %cst_29 {dimension_numbers = #tpu.dot_dimension_numbers<[1], [0], [0], [1], [0, 0, 1, 1], [], []>} : vector<128x1152xf32>, vector<1152x128xf32>, vector<128x128xf32> -> vector<128x128xf32>
    %c0_30 = arith.constant 0 : index
    %c0_31 = arith.constant 0 : index
    %63 = vector.load %arg6[%c0_30, %c0_31] : memref<1x128xf32, #tpu.memory_space<vmem>>, vector<1x128xf32>
    %64 = vector.shape_cast %63 : vector<1x128xf32> to vector<128xf32>
    %65 = vector.shape_cast %64 : vector<128xf32> to vector<1x128xf32>
    %66 = vector.broadcast %65 : vector<1x128xf32> to vector<128x128xf32>
    %67 = arith.addf %62, %66 : vector<128x128xf32>
    %68 = vector.shape_cast %67 : vector<128x128xf32> to vector<1x8x16x128xf32>
    %c0_32 = arith.constant 0 : index
    %c0_33 = arith.constant 0 : index
    %c0_34 = arith.constant 0 : index
    %c0_35 = arith.constant 0 : index
    %69 = vector.load %arg9[%c0_32, %c0_33, %c0_34, %c0_35] : memref<1x8x16x128xf32, #tpu.memory_space<vmem>>, vector<1x8x16x128xf32>
    tpu.vector_store %arg9[%c0_32, %c0_33, %c0_34, %c0_35], %68 {strides = array<i32>} : memref<1x8x16x128xf32, #tpu.memory_space<vmem>>, vector<1x8x16x128xf32>,
    %cst_36 = arith.constant dense<0.000000e+00> : vector<128xf32>
    %70 = vector.multi_reduction <add>, %67, %cst_36 [0] : vector<128x128xf32> to vector<128xf32>
    %71 = arith.mulf %67, %67 : vector<128x128xf32>
    %cst_37 = arith.constant dense<0.000000e+00> : vector<128xf32>
    %72 = vector.multi_reduction <add>, %71, %cst_37 [0] : vector<128x128xf32> to vector<128xf32>
    %73 = vector.shape_cast %70 : vector<128xf32> to vector<1x128xf32>
    %74 = vector.shape_cast %72 : vector<128xf32> to vector<1x128xf32>
    %cst_38 = arith.constant 0.000000e+00 : f32
    %75 = vector.broadcast %cst_38 : f32 to vector<6x128xf32>
    %76 = tpu.concatenate %73, %74, %75 in 0 : vector<1x128xf32>, vector<1x128xf32>, vector<6x128xf32> -> vector<8x128xf32>
    %77 = vector.shape_cast %76 : vector<8x128xf32> to vector<1x1x8x128xf32>
    %c0_39 = arith.constant 0 : index
    %c0_40 = arith.constant 0 : index
    %c0_41 = arith.constant 0 : index
    %c0_42 = arith.constant 0 : index
    %78 = vector.load %arg10[%c0_39, %c0_40, %c0_41, %c0_42] : memref<1x1x8x128xf32, #tpu.memory_space<vmem>>, vector<1x1x8x128xf32>
    tpu.vector_store %arg10[%c0_39, %c0_40, %c0_41, %c0_42], %77 {strides = array<i32>} : memref<1x1x8x128xf32, #tpu.memory_space<vmem>>, vector<1x1x8x128xf32>,
    return
  }
  func.func @transform_0(%arg0: i32, %arg1: i32) -> (i32, i32, i32, i32) {
    %c8_i32 = arith.constant 8 : i32
    %0 = arith.muli %arg1, %c8_i32 : i32
    %c1_i32 = arith.constant 1 : i32
    %1 = arith.subi %0, %c1_i32 : i32
    %c0_i32 = arith.constant 0 : i32
    %2 = arith.maxsi %1, %c0_i32 : i32
    %c0_i32_0 = arith.constant 0 : i32
    %c0_i32_1 = arith.constant 0 : i32
    %c0_i32_2 = arith.constant 0 : i32
    return %arg0, %2, %c0_i32_0, %c0_i32_1 : i32, i32, i32, i32
  }
  func.func @transform_1(%arg0: i32, %arg1: i32) -> (i32, i32, i32, i32) {
    %c0_i32 = arith.constant 0 : i32
    %c0_i32_0 = arith.constant 0 : i32
    %c0_i32_1 = arith.constant 0 : i32
    return %arg0, %arg1, %c0_i32, %c0_i32_0 : i32, i32, i32, i32
  }
  func.func @transform_2(%arg0: i32, %arg1: i32) -> (i32, i32, i32, i32) {
    %c1_i32 = arith.constant 1 : i32
    %0 = arith.addi %arg1, %c1_i32 : i32
    %c8_i32 = arith.constant 8 : i32
    %1 = arith.muli %0, %c8_i32 : i32
    %c15_i32 = arith.constant 15 : i32
    %2 = arith.minsi %1, %c15_i32 : i32
    %c0_i32 = arith.constant 0 : i32
    %c0_i32_0 = arith.constant 0 : i32
    %c0_i32_1 = arith.constant 0 : i32
    return %arg0, %2, %c0_i32, %c0_i32_0 : i32, i32, i32, i32
  }
  func.func @transform_3(%arg0: i32, %arg1: i32) -> (i32, i32) {
    %c0_i32 = arith.constant 0 : i32
    %c0_i32_0 = arith.constant 0 : i32
    %c0_i32_1 = arith.constant 0 : i32
    return %c0_i32, %c0_i32_0 : i32, i32
  }
  func.func @transform_4(%arg0: i32, %arg1: i32) -> (i32, i32) {
    %c0_i32 = arith.constant 0 : i32
    %c0_i32_0 = arith.constant 0 : i32
    %c0_i32_1 = arith.constant 0 : i32
    return %c0_i32, %c0_i32_0 : i32, i32
  }
  func.func @transform_5(%arg0: i32, %arg1: i32) -> (i32, i32) {
    %c0_i32 = arith.constant 0 : i32
    %c0_i32_0 = arith.constant 0 : i32
    %c0_i32_1 = arith.constant 0 : i32
    return %c0_i32, %c0_i32_0 : i32, i32
  }
  func.func @transform_6(%arg0: i32, %arg1: i32) -> (i32, i32) {
    %c0_i32 = arith.constant 0 : i32
    %c0_i32_0 = arith.constant 0 : i32
    %c0_i32_1 = arith.constant 0 : i32
    return %c0_i32, %c0_i32_0 : i32, i32
  }
  func.func @transform_7(%arg0: i32, %arg1: i32) -> (i32, i32, i32, i32) {
    %c0_i32 = arith.constant 0 : i32
    %c0_i32_0 = arith.constant 0 : i32
    %c0_i32_1 = arith.constant 0 : i32
    return %arg0, %arg1, %c0_i32, %c0_i32_0 : i32, i32, i32, i32
  }
  func.func @transform_8(%arg0: i32, %arg1: i32) -> (i32, i32, i32, i32) {
    %c0_i32 = arith.constant 0 : i32
    %c0_i32_0 = arith.constant 0 : i32
    %c0_i32_1 = arith.constant 0 : i32
    return %arg0, %arg1, %c0_i32, %c0_i32_0 : i32, i32, i32, i32
  }
}

module attributes {stable_mosaic.version = 11 : i64} {
  func.func @_conv_bn_stats_kernel(%arg0: i32, %arg1: i32, %arg2: memref<1x1x16x128xf32, #tpu.memory_space<vmem>>, %arg3: memref<1x8x16x128xf32, #tpu.memory_space<vmem>>, %arg4: memref<1x1x16x128xf32, #tpu.memory_space<vmem>>, %arg5: memref<1152x128xf32, #tpu.memory_space<vmem>>, %arg6: memref<1x128xf32, #tpu.memory_space<vmem>>, %arg7: memref<1x128xf32, #tpu.memory_space<vmem>>, %arg8: memref<1x128xf32, #tpu.memory_space<vmem>>, %arg9: memref<1x8x16x128xf32, #tpu.memory_space<vmem>>, %arg10: memref<1x1x8x128xf32, #tpu.memory_space<vmem>>) attributes {dimension_semantics = [#tpu.dimension_semantics<parallel>, #tpu.dimension_semantics<parallel>], iteration_bounds = array<i64: 2, 2>, scalar_prefetch = 0 : i64, scratch_operands = 0 : i64, tpu.core_type = #tpu.core_type<tc>, window_params = [{transform_indices = @transform_0, window_bounds = array<i64: 1, 1, 16, 128>}, {transform_indices = @transform_1, window_bounds = array<i64: 1, 8, 16, 128>}, {transform_indices = @transform_2, window_bounds = array<i64: 1, 1, 16, 128>}, {pipeline_mode = #tpu.pipeline_mode<synchronous>, transform_indices = @transform_3, window_bounds = array<i64: 1152, 128>}, {pipeline_mode = #tpu.pipeline_mode<synchronous>, transform_indices = @transform_4, window_bounds = array<i64: 1, 128>}, {pipeline_mode = #tpu.pipeline_mode<synchronous>, transform_indices = @transform_5, window_bounds = array<i64: 1, 128>}, {pipeline_mode = #tpu.pipeline_mode<synchronous>, transform_indices = @transform_6, window_bounds = array<i64: 1, 128>}, {transform_indices = @transform_7, window_bounds = array<i64: 1, 8, 16, 128>}, {transform_indices = @transform_8, window_bounds = array<i64: 1, 1, 8, 128>}]} {
    %c0 = arith.constant 0 : index
    %c0_0 = arith.constant 0 : index
    %c0_1 = arith.constant 0 : index
    %c0_2 = arith.constant 0 : index
    %0 = vector.load %arg3[%c0, %c0_0, %c0_1, %c0_2] : memref<1x8x16x128xf32, #tpu.memory_space<vmem>>, vector<1x8x16x128xf32>
    %1 = vector.shape_cast %0 : vector<1x8x16x128xf32> to vector<8x16x128xf32>
    %c0_3 = arith.constant 0 : index
    %c0_4 = arith.constant 0 : index
    %c0_5 = arith.constant 0 : index
    %c0_6 = arith.constant 0 : index
    %2 = vector.load %arg2[%c0_3, %c0_4, %c0_5, %c0_6] : memref<1x1x16x128xf32, #tpu.memory_space<vmem>>, vector<1x1x16x128xf32>
    %3 = vector.shape_cast %2 : vector<1x1x16x128xf32> to vector<1x16x128xf32>
    %c0_7 = arith.constant 0 : index
    %c0_8 = arith.constant 0 : index
    %c0_9 = arith.constant 0 : index
    %c0_10 = arith.constant 0 : index
    %4 = vector.load %arg4[%c0_7, %c0_8, %c0_9, %c0_10] : memref<1x1x16x128xf32, #tpu.memory_space<vmem>>, vector<1x1x16x128xf32>
    %5 = vector.shape_cast %4 : vector<1x1x16x128xf32> to vector<1x16x128xf32>
    %cst = arith.constant 0.000000e+00 : f32
    %6 = vector.broadcast %cst : f32 to vector<1x16x128xf32>
    %c0_i32 = arith.constant 0 : i32
    %7 = arith.cmpi sgt, %arg1, %c0_i32 : i32
    %8 = arith.select %7, %3, %6 : vector<1x16x128xf32>
    %c1_i32 = arith.constant 1 : i32
    %9 = arith.cmpi slt, %arg1, %c1_i32 : i32
    %10 = arith.select %9, %5, %6 : vector<1x16x128xf32>
    %11 = tpu.concatenate %8, %1, %10 in 0 : vector<1x16x128xf32>, vector<8x16x128xf32>, vector<1x16x128xf32> -> vector<10x16x128xf32>
    %cst_11 = arith.constant 0.000000e+00 : f32
    %12 = vector.broadcast %cst_11 : f32 to vector<10x1x128xf32>
    %13 = tpu.concatenate %12, %11, %12 in 1 : vector<10x1x128xf32>, vector<10x16x128xf32>, vector<10x1x128xf32> -> vector<10x18x128xf32>
    %14 = vector.extract_strided_slice %13 {offsets = [0, 0, 0], sizes = [8, 16, 128], strides = [1, 1, 1]} : vector<10x18x128xf32> to vector<8x16x128xf32>
    %15 = vector.extract_strided_slice %13 {offsets = [0, 1, 0], sizes = [8, 16, 128], strides = [1, 1, 1]} : vector<10x18x128xf32> to vector<8x16x128xf32>
    %16 = vector.extract_strided_slice %13 {offsets = [0, 2, 0], sizes = [8, 16, 128], strides = [1, 1, 1]} : vector<10x18x128xf32> to vector<8x16x128xf32>
    %17 = vector.extract_strided_slice %13 {offsets = [1, 0, 0], sizes = [8, 16, 128], strides = [1, 1, 1]} : vector<10x18x128xf32> to vector<8x16x128xf32>
    %18 = vector.extract_strided_slice %13 {offsets = [1, 1, 0], sizes = [8, 16, 128], strides = [1, 1, 1]} : vector<10x18x128xf32> to vector<8x16x128xf32>
    %19 = vector.extract_strided_slice %13 {offsets = [1, 2, 0], sizes = [8, 16, 128], strides = [1, 1, 1]} : vector<10x18x128xf32> to vector<8x16x128xf32>
    %20 = vector.extract_strided_slice %13 {offsets = [2, 0, 0], sizes = [8, 16, 128], strides = [1, 1, 1]} : vector<10x18x128xf32> to vector<8x16x128xf32>
    %21 = vector.extract_strided_slice %13 {offsets = [2, 1, 0], sizes = [8, 16, 128], strides = [1, 1, 1]} : vector<10x18x128xf32> to vector<8x16x128xf32>
    %22 = vector.extract_strided_slice %13 {offsets = [2, 2, 0], sizes = [8, 16, 128], strides = [1, 1, 1]} : vector<10x18x128xf32> to vector<8x16x128xf32>
    %23 = tpu.concatenate %14, %15, %16, %17, %18, %19, %20, %21, %22 in 2 : vector<8x16x128xf32>, vector<8x16x128xf32>, vector<8x16x128xf32>, vector<8x16x128xf32>, vector<8x16x128xf32>, vector<8x16x128xf32>, vector<8x16x128xf32>, vector<8x16x128xf32>, vector<8x16x128xf32> -> vector<8x16x1152xf32>
    %24 = vector.shape_cast %23 : vector<8x16x1152xf32> to vector<128x1152xf32>
    %c0_12 = arith.constant 0 : index
    %c0_13 = arith.constant 0 : index
    %25 = vector.load %arg5[%c0_12, %c0_13] : memref<1152x128xf32, #tpu.memory_space<vmem>>, vector<1152x128xf32>
    %cst_14 = arith.constant dense<0.000000e+00> : vector<128x128xf32>
    %26 = tpu.matmul %24, %25, %cst_14 {dimension_numbers = #tpu.dot_dimension_numbers<[1], [0], [0], [1], [0, 0, 1, 1], [], []>} : vector<128x1152xf32>, vector<1152x128xf32>, vector<128x128xf32> -> vector<128x128xf32>
    %c0_15 = arith.constant 0 : index
    %c0_16 = arith.constant 0 : index
    %27 = vector.load %arg6[%c0_15, %c0_16] : memref<1x128xf32, #tpu.memory_space<vmem>>, vector<1x128xf32>
    %28 = vector.shape_cast %27 : vector<1x128xf32> to vector<128xf32>
    %29 = vector.shape_cast %28 : vector<128xf32> to vector<1x128xf32>
    %30 = vector.broadcast %29 : vector<1x128xf32> to vector<128x128xf32>
    %31 = arith.addf %26, %30 : vector<128x128xf32>
    %32 = vector.shape_cast %31 : vector<128x128xf32> to vector<1x8x16x128xf32>
    %c0_17 = arith.constant 0 : index
    %c0_18 = arith.constant 0 : index
    %c0_19 = arith.constant 0 : index
    %c0_20 = arith.constant 0 : index
    %33 = vector.load %arg9[%c0_17, %c0_18, %c0_19, %c0_20] : memref<1x8x16x128xf32, #tpu.memory_space<vmem>>, vector<1x8x16x128xf32>
    tpu.vector_store %arg9[%c0_17, %c0_18, %c0_19, %c0_20], %32 {strides = array<i32>} : memref<1x8x16x128xf32, #tpu.memory_space<vmem>>, vector<1x8x16x128xf32>,
    %cst_21 = arith.constant dense<0.000000e+00> : vector<128xf32>
    %34 = vector.multi_reduction <add>, %31, %cst_21 [0] : vector<128x128xf32> to vector<128xf32>
    %35 = arith.mulf %31, %31 : vector<128x128xf32>
    %cst_22 = arith.constant dense<0.000000e+00> : vector<128xf32>
    %36 = vector.multi_reduction <add>, %35, %cst_22 [0] : vector<128x128xf32> to vector<128xf32>
    %37 = vector.shape_cast %34 : vector<128xf32> to vector<1x128xf32>
    %38 = vector.shape_cast %36 : vector<128xf32> to vector<1x128xf32>
    %cst_23 = arith.constant 0.000000e+00 : f32
    %39 = vector.broadcast %cst_23 : f32 to vector<6x128xf32>
    %40 = tpu.concatenate %37, %38, %39 in 0 : vector<1x128xf32>, vector<1x128xf32>, vector<6x128xf32> -> vector<8x128xf32>
    %41 = vector.shape_cast %40 : vector<8x128xf32> to vector<1x1x8x128xf32>
    %c0_24 = arith.constant 0 : index
    %c0_25 = arith.constant 0 : index
    %c0_26 = arith.constant 0 : index
    %c0_27 = arith.constant 0 : index
    %42 = vector.load %arg10[%c0_24, %c0_25, %c0_26, %c0_27] : memref<1x1x8x128xf32, #tpu.memory_space<vmem>>, vector<1x1x8x128xf32>
    tpu.vector_store %arg10[%c0_24, %c0_25, %c0_26, %c0_27], %41 {strides = array<i32>} : memref<1x1x8x128xf32, #tpu.memory_space<vmem>>, vector<1x1x8x128xf32>,
    return
  }
  func.func @transform_0(%arg0: i32, %arg1: i32) -> (i32, i32, i32, i32) {
    %c8_i32 = arith.constant 8 : i32
    %0 = arith.muli %arg1, %c8_i32 : i32
    %c1_i32 = arith.constant 1 : i32
    %1 = arith.subi %0, %c1_i32 : i32
    %c0_i32 = arith.constant 0 : i32
    %2 = arith.maxsi %1, %c0_i32 : i32
    %c0_i32_0 = arith.constant 0 : i32
    %c0_i32_1 = arith.constant 0 : i32
    %c0_i32_2 = arith.constant 0 : i32
    return %arg0, %2, %c0_i32_0, %c0_i32_1 : i32, i32, i32, i32
  }
  func.func @transform_1(%arg0: i32, %arg1: i32) -> (i32, i32, i32, i32) {
    %c0_i32 = arith.constant 0 : i32
    %c0_i32_0 = arith.constant 0 : i32
    %c0_i32_1 = arith.constant 0 : i32
    return %arg0, %arg1, %c0_i32, %c0_i32_0 : i32, i32, i32, i32
  }
  func.func @transform_2(%arg0: i32, %arg1: i32) -> (i32, i32, i32, i32) {
    %c1_i32 = arith.constant 1 : i32
    %0 = arith.addi %arg1, %c1_i32 : i32
    %c8_i32 = arith.constant 8 : i32
    %1 = arith.muli %0, %c8_i32 : i32
    %c15_i32 = arith.constant 15 : i32
    %2 = arith.minsi %1, %c15_i32 : i32
    %c0_i32 = arith.constant 0 : i32
    %c0_i32_0 = arith.constant 0 : i32
    %c0_i32_1 = arith.constant 0 : i32
    return %arg0, %2, %c0_i32, %c0_i32_0 : i32, i32, i32, i32
  }
  func.func @transform_3(%arg0: i32, %arg1: i32) -> (i32, i32) {
    %c0_i32 = arith.constant 0 : i32
    %c0_i32_0 = arith.constant 0 : i32
    %c0_i32_1 = arith.constant 0 : i32
    return %c0_i32, %c0_i32_0 : i32, i32
  }
  func.func @transform_4(%arg0: i32, %arg1: i32) -> (i32, i32) {
    %c0_i32 = arith.constant 0 : i32
    %c0_i32_0 = arith.constant 0 : i32
    %c0_i32_1 = arith.constant 0 : i32
    return %c0_i32, %c0_i32_0 : i32, i32
  }
  func.func @transform_5(%arg0: i32, %arg1: i32) -> (i32, i32) {
    %c0_i32 = arith.constant 0 : i32
    %c0_i32_0 = arith.constant 0 : i32
    %c0_i32_1 = arith.constant 0 : i32
    return %c0_i32, %c0_i32_0 : i32, i32
  }
  func.func @transform_6(%arg0: i32, %arg1: i32) -> (i32, i32) {
    %c0_i32 = arith.constant 0 : i32
    %c0_i32_0 = arith.constant 0 : i32
    %c0_i32_1 = arith.constant 0 : i32
    return %c0_i32, %c0_i32_0 : i32, i32
  }
  func.func @transform_7(%arg0: i32, %arg1: i32) -> (i32, i32, i32, i32) {
    %c0_i32 = arith.constant 0 : i32
    %c0_i32_0 = arith.constant 0 : i32
    %c0_i32_1 = arith.constant 0 : i32
    return %arg0, %arg1, %c0_i32, %c0_i32_0 : i32, i32, i32, i32
  }
  func.func @transform_8(%arg0: i32, %arg1: i32) -> (i32, i32, i32, i32) {
    %c0_i32 = arith.constant 0 : i32
    %c0_i32_0 = arith.constant 0 : i32
    %c0_i32_1 = arith.constant 0 : i32
    return %arg0, %arg1, %c0_i32, %c0_i32_0 : i32, i32, i32, i32
  }
}

module attributes {stable_mosaic.version = 11 : i64} {
  func.func @_bn_relu_kernel(%arg0: i32, %arg1: i32, %arg2: memref<1x8x16x128xf32, #tpu.memory_space<vmem>>, %arg3: memref<1x128xf32, #tpu.memory_space<vmem>>, %arg4: memref<1x128xf32, #tpu.memory_space<vmem>>, %arg5: memref<1x8x16x128xf32, #tpu.memory_space<vmem>>) attributes {dimension_semantics = [#tpu.dimension_semantics<parallel>, #tpu.dimension_semantics<parallel>], iteration_bounds = array<i64: 2, 2>, scalar_prefetch = 0 : i64, scratch_operands = 0 : i64, tpu.core_type = #tpu.core_type<tc>, window_params = [{transform_indices = @transform_0, window_bounds = array<i64: 1, 8, 16, 128>}, {pipeline_mode = #tpu.pipeline_mode<synchronous>, transform_indices = @transform_1, window_bounds = array<i64: 1, 128>}, {pipeline_mode = #tpu.pipeline_mode<synchronous>, transform_indices = @transform_2, window_bounds = array<i64: 1, 128>}, {transform_indices = @transform_3, window_bounds = array<i64: 1, 8, 16, 128>}]} {
    %c0 = arith.constant 0 : index
    %c0_0 = arith.constant 0 : index
    %c0_1 = arith.constant 0 : index
    %c0_2 = arith.constant 0 : index
    %0 = vector.load %arg2[%c0, %c0_0, %c0_1, %c0_2] : memref<1x8x16x128xf32, #tpu.memory_space<vmem>>, vector<1x8x16x128xf32>
    %c0_3 = arith.constant 0 : index
    %c0_4 = arith.constant 0 : index
    %1 = vector.load %arg3[%c0_3, %c0_4] : memref<1x128xf32, #tpu.memory_space<vmem>>, vector<1x128xf32>
    %2 = vector.shape_cast %1 : vector<1x128xf32> to vector<128xf32>
    %3 = vector.shape_cast %2 : vector<128xf32> to vector<1x1x1x128xf32>
    %c0_5 = arith.constant 0 : index
    %c0_6 = arith.constant 0 : index
    %4 = vector.load %arg4[%c0_5, %c0_6] : memref<1x128xf32, #tpu.memory_space<vmem>>, vector<1x128xf32>
    %5 = vector.shape_cast %4 : vector<1x128xf32> to vector<128xf32>
    %6 = vector.shape_cast %5 : vector<128xf32> to vector<1x1x1x128xf32>
    %7 = vector.broadcast %3 : vector<1x1x1x128xf32> to vector<1x8x16x128xf32>
    %8 = arith.mulf %0, %7 : vector<1x8x16x128xf32>
    %9 = vector.broadcast %6 : vector<1x1x1x128xf32> to vector<1x8x16x128xf32>
    %10 = arith.addf %8, %9 : vector<1x8x16x128xf32>
    %cst = arith.constant 0.000000e+00 : f32
    %11 = vector.broadcast %cst : f32 to vector<1x8x16x128xf32>
    %12 = arith.maximumf %10, %11 : vector<1x8x16x128xf32>
    %c0_7 = arith.constant 0 : index
    %c0_8 = arith.constant 0 : index
    %c0_9 = arith.constant 0 : index
    %c0_10 = arith.constant 0 : index
    %13 = vector.load %arg5[%c0_7, %c0_8, %c0_9, %c0_10] : memref<1x8x16x128xf32, #tpu.memory_space<vmem>>, vector<1x8x16x128xf32>
    tpu.vector_store %arg5[%c0_7, %c0_8, %c0_9, %c0_10], %12 {strides = array<i32>} : memref<1x8x16x128xf32, #tpu.memory_space<vmem>>, vector<1x8x16x128xf32>,
    return
  }
  func.func @transform_0(%arg0: i32, %arg1: i32) -> (i32, i32, i32, i32) {
    %c0_i32 = arith.constant 0 : i32
    %c0_i32_0 = arith.constant 0 : i32
    %c0_i32_1 = arith.constant 0 : i32
    return %arg0, %arg1, %c0_i32, %c0_i32_0 : i32, i32, i32, i32
  }
  func.func @transform_1(%arg0: i32, %arg1: i32) -> (i32, i32) {
    %c0_i32 = arith.constant 0 : i32
    %c0_i32_0 = arith.constant 0 : i32
    %c0_i32_1 = arith.constant 0 : i32
    return %c0_i32, %c0_i32_0 : i32, i32
  }
  func.func @transform_2(%arg0: i32, %arg1: i32) -> (i32, i32) {
    %c0_i32 = arith.constant 0 : i32
    %c0_i32_0 = arith.constant 0 : i32
    %c0_i32_1 = arith.constant 0 : i32
    return %c0_i32, %c0_i32_0 : i32, i32
  }
  func.func @transform_3(%arg0: i32, %arg1: i32) -> (i32, i32, i32, i32) {
    %c0_i32 = arith.constant 0 : i32
    %c0_i32_0 = arith.constant 0 : i32
    %c0_i32_1 = arith.constant 0 : i32
    return %arg0, %arg1, %c0_i32, %c0_i32_0 : i32, i32, i32, i32
  }
}

</mosaic_0001>

<llo_original>
// kernel: double_conv.5
$region0: #{double_conv.5}
  #allocation0 [shape = 'u32[]', space=smem, size = 0x4, offset = 0x4, fixed_abs, tag = 'smem constant byte address 0x4 - core index']
  #allocation1 [shape = 'u32[72,128]{1,0:T(1,128)}', space=vmem, size = 0x9000, scoped, tag = 'internal scratch']
  %s0 = inlined_call_operand.vmem [shape: f32[2,16,16,128], index: 0, kind: input, shape index: {}]
  %s1 = inlined_call_operand.vmem [shape: f32[1,128], index: 1, kind: input, shape index: {}]
  %s2 = inlined_call_operand.vmem [shape: f32[1,128], index: 2, kind: input, shape index: {}]
  %s3 = inlined_call_operand.vmem [shape: f32[2,16,16,128], index: 3, kind: output, shape index: {}]
  %s4 = sld [smem:[#allocation0]]
  $region45: #{double_conv.5} parent=0
    _
  %s6 = ssub.s32 1, %s4
  %s7 = scalar_select 0, %s6, %s4
  loop: start=0, step=1, limit=6
  $region2: #{double_conv.5} parent=0 // loop_pre_header
    _
  $region3: #{double_conv.5} parent=0 // loop_header
    %s9 = sphi 0, %s13
    %p10 = scmp.ge.s32.totalorder %s9, 6
    %s16 = sphi 0, %s28
    %s17 = sphi 0, %s24
    %s18 = sphi 0, %s16
    %s19 = sphi 0, %s17
    %s20 = sphi 0, %s18
    %s21 = sphi 0, %s19
    %s33 = sphi 0, %s35
    %s36 = sphi 0, %s33
    %s37 = sphi 0, %s36
    %s53 = sphi 0, %s37
    %s57 = sphi 0, %s57
    %s59 = sphi 0, %s57
    %s60 = sphi 0, %s59
    %s74 = sphi 0, %s60
    %s78 = sphi 0, %s78
    %s80 = sphi 0, %s78
    %s81 = sphi 0, %s80
    %s95 = sphi 0, %s81
    %s103 = sphi 0, %s105
    %s106 = sphi 0, %s103
    %s107 = sphi 0, %s106
    %s123 = sphi 0, %s107
  $region4: #{double_conv.5} parent=0 // loop_header_branch
    %12 = sbr.rel (%p10) target = $region8
  $region5: #{double_conv.5} parent=0 // loop_body
    %s14 = ssub.s32 %s9, 1
    %s15 = ssub.s32 %s9, 2
    %s22 = sadd.s32 1, %s17
    %p23 = scmp.ge.s32.totalorder %s22, 2
    %s24 = scalar_select %p23, 0, %s22
    %s25 = sadd.s32 1, %s16
    %s26 = scalar_select %p23, %s25, %s16
    %p27 = scmp.ge.s32.totalorder %s26, 2
    %s28 = scalar_select %p27, 0, %s26
    %s29 = ssub.s32 %s16, %s28
    %s30 = ssub.s32 %s17, %s24
    %s31 = sor.u32 %s29, %s30
    %p32 = scmp.eq.s32.totalorder %s31, 0
    %s34 = sadd.s32 %s33, 1
    %s35 = scalar_select %p32, %s33, %s34
    %p38 = pneg %p32
    %p39 = scmp.eq.s32.totalorder %s9, 3
    %p40 = por %p38, %p39
    %p41 = scmp.ne.s32.totalorder %s33, %s36
    %p42 = scmp.eq.s32.totalorder %s9, 0
    %p43 = por %p41, %p42
    %p44 = scmp.ne.s32.totalorder %s33, %s36
    %p45 = scmp.eq.s32.totalorder %s14, 3
    %p46 = por %p44, %p45
    %p47 = scmp.ne.s32.totalorder %s36, %s37
    %p48 = scmp.eq.s32.totalorder %s14, 0
    %p49 = por %p47, %p48
    %p50 = scmp.ne.s32.totalorder %s36, %s37
    %p51 = scmp.eq.s32.totalorder %s15, 3
    %p52 = por %p50, %p51
    %p54 = scmp.ne.s32.totalorder %s37, %s53
    %p55 = scmp.eq.s32.totalorder %s15, 0
    %p56 = por %p54, %p55
    %s58 = sadd.s32 %s57, 1
    %p61 = scmp.eq.s32.totalorder %s9, 3
    %p62 = scmp.ne.s32.totalorder %s57, %s59
    %p63 = scmp.eq.s32.totalorder %s9, 0
    %p64 = por %p62, %p63
    %p65 = scmp.ne.s32.totalorder %s57, %s59
    %p66 = scmp.eq.s32.totalorder %s14, 3
    %p67 = por %p65, %p66
    %p68 = scmp.ne.s32.totalorder %s59, %s60
    %p69 = scmp.eq.s32.totalorder %s14, 0
    %p70 = por %p68, %p69
    %p71 = scmp.ne.s32.totalorder %s59, %s60
    %p72 = scmp.eq.s32.totalorder %s15, 3
    %p73 = por %p71, %p72
    %p75 = scmp.ne.s32.totalorder %s60, %s74
    %p76 = scmp.eq.s32.totalorder %s15, 0
    %p77 = por %p75, %p76
    %s79 = sadd.s32 %s78, 1
    %p82 = scmp.eq.s32.totalorder %s9, 3
    %p83 = scmp.ne.s32.totalorder %s78, %s80
    %p84 = scmp.eq.s32.totalorder %s9, 0
    %p85 = por %p83, %p84
    %p86 = scmp.ne.s32.totalorder %s78, %s80
    %p87 = scmp.eq.s32.totalorder %s14, 3
    %p88 = por %p86, %p87
    %p89 = scmp.ne.s32.totalorder %s80, %s81
    %p90 = scmp.eq.s32.totalorder %s14, 0
    %p91 = por %p89, %p90
    %p92 = scmp.ne.s32.totalorder %s80, %s81
    %p93 = scmp.eq.s32.totalorder %s15, 3
    %p94 = por %p92, %p93
    %p96 = scmp.ne.s32.totalorder %s81, %s95
    %p97 = scmp.eq.s32.totalorder %s15, 0
    %p98 = por %p96, %p97
    %s99 = ssub.s32 %s16, %s28
    %s100 = ssub.s32 %s17, %s24
    %s101 = sor.u32 %s99, %s100
    %p102 = scmp.eq.s32.totalorder %s101, 0
    %s104 = sadd.s32 %s103, 1
    %s105 = scalar_select %p102, %s103, %s104
    %p108 = pneg %p102
    %p109 = scmp.eq.s32.totalorder %s9, 3
    %p110 = por %p108, %p109
    %p111 = scmp.ne.s32.totalorder %s103, %s106
    %p112 = scmp.eq.s32.totalorder %s9, 0
    %p113 = por %p111, %p112
    %p114 = scmp.ne.s32.totalorder %s103, %s106
    %p115 = scmp.eq.s32.totalorder %s14, 3
    %p116 = por %p114, %p115
    %p117 = scmp.ne.s32.totalorder %s106, %s107
    %p118 = scmp.eq.s32.totalorder %s14, 0
    %p119 = por %p117, %p118
    %p120 = scmp.ne.s32.totalorder %s106, %s107
    %p121 = scmp.eq.s32.totalorder %s15, 3
    %p122 = por %p120, %p121
    %p124 = scmp.ne.s32.totalorder %s107, %s123
    %p125 = scmp.eq.s32.totalorder %s15, 0
    %p126 = por %p124, %p125
    %p127 = scmp.le.s32.totalorder 1, %s9
    %p128 = scmp.lt.s32.totalorder %s9, 5
    %p129 = pnand %p127, %p128
    %p130 = pneg %p129
    // Predicated region
    $region9: #{double_conv.5} parent=5 // pred_check
      _
    $region10: #{double_conv.5} parent=5 // pred_check_branch
      %132 = sbr.rel (%p129) target = $region12
    $region11: #{double_conv.5} parent=5 // pred_region
      %s133 = ssub.s32 %s9, 1
      // Predicated region
      $region13: #{double_conv.5} parent=11 // pred_check
        %p134 = pneg %p70
      $region14: #{double_conv.5} parent=11 // pred_check_branch
        %136 = sbr.rel (%p134) target = $region16
      $region15: #{double_conv.5} parent=11 // pred_region
        _
      $region16: #{double_conv.5} parent=11 // pred_fallthru
        _
      // Predicated region
      $region17: #{double_conv.5} parent=11 // pred_check
        %p137 = pneg %p91
      $region18: #{double_conv.5} parent=11 // pred_check_branch
        %139 = sbr.rel (%p137) target = $region20
      $region19: #{double_conv.5} parent=11 // pred_region
        _
      $region20: #{double_conv.5} parent=11 // pred_fallthru
        _
    $region12: #{double_conv.5} parent=5 // pred_fallthru
      _
    %p140 = scmp.lt.s32.totalorder %s9, 4
    // Predicated region
    $region21: #{double_conv.5} parent=5 // pred_check
      %p141 = pneg %p140
    $region22: #{double_conv.5} parent=5 // pred_check_branch
      %143 = sbr.rel (%p141) target = $region24
    $region23: #{double_conv.5} parent=5 // pred_region
      // Predicated region
      $region25: #{double_conv.5} parent=23 // pred_check
        %p144 = pneg %p43
      $region26: #{double_conv.5} parent=23 // pred_check_branch
        %146 = sbr.rel (%p144) target = $region28
      $region27: #{double_conv.5} parent=23 // pred_region
        %s147 = smul.u32 8, %s17
        %p148 = scmp.lt.s32.totalorder %s16, 1
        %s149 = scalar_select %p148, %s16, 1
        %p150 = scmp.lt.s32.totalorder %s147, 15
        %s151 = scalar_select %p150, %s147, 15
        %s152 = smul.addr %s151, 2
        %s153 = smul.addr %s149, 32
        %s154 = sadd.s32 %s152, %s153
        %s155 = smul.addr %s154, 8
        %s156 = scalar_lea.vmem %s0, %s155
        %s157 = smul.u32 8, %s17
      $region28: #{double_conv.5} parent=23 // pred_fallthru
        _
    $region24: #{double_conv.5} parent=5 // pred_fallthru
      _
    %p158 = scmp.le.s32.totalorder 1, %s9
    %p159 = scmp.lt.s32.totalorder %s9, 5
    %p160 = pnand %p158, %p159
    %p161 = pneg %p160
    // Predicated region
    $region29: #{double_conv.5} parent=5 // pred_check
      _
    $region30: #{double_conv.5} parent=5 // pred_check_branch
      %163 = sbr.rel (%p160) target = $region32
    $region31: #{double_conv.5} parent=5 // pred_region
      %s164 = ssub.s32 %s9, 1
      %s165 = smul.u32 8, %s19
      %p166 = scmp.lt.s32.totalorder %s18, 1
      %s167 = scalar_select %p166, %s18, 1
      %p168 = scmp.lt.s32.totalorder %s165, 15
      %s169 = scalar_select %p168, %s165, 15
      %s170 = smul.addr %s169, 2
      %s171 = smul.addr %s167, 32
      %s172 = sadd.s32 %s170, %s171
      %s173 = smul.addr %s172, 8
      %s174 = scalar_lea.vmem %s0, %s173
      %p175 = pneg %p49
      %p176 = pneg %p46
      %p177 = pneg %p70
      %p178 = pneg %p67
      %p179 = pneg %p91
      %p180 = pneg %p88
      %p181 = pneg %p119
      %p182 = pneg %p116
      %s183 = smul.u32 8, %s19
      %p184 = scmp.lt.s32.totalorder %s18, 1
      %s185 = scalar_select %p184, %s18, 1
      %p186 = scmp.lt.s32.totalorder %s183, 15
      %s187 = scalar_select %p186, %s183, 15
      %s188 = smul.addr %s187, 2
      %s189 = smul.addr %s185, 32
      %s190 = sadd.s32 %s188, %s189
      %s191 = smul.addr %s190, 8
      %s192 = scalar_lea.vmem %s3, %s191
      %s193 = smul.u32 8, %s19
      %p194 = scmp.lt.s32.totalorder %s18, 1
      %s195 = scalar_select %p194, %s18, 1
      %p196 = scmp.lt.s32.totalorder %s193, 15
      %s197 = scalar_select %p196, %s193, 15
      %s198 = smul.addr %s197, 2
      %s199 = smul.addr %s195, 32
      %s200 = sadd.s32 %s198, %s199
      %s201 = smul.addr %s200, 8
      %s202 = scalar_lea.vmem %s0, %s201
      %s203 = smul.u32 8, %s19
      %s204 = smul.u32 8, %s19
      %p205 = scmp.lt.s32.totalorder %s18, 1
      %s206 = scalar_select %p205, %s18, 1
      %p207 = scmp.lt.s32.totalorder %s204, 15
      %s208 = scalar_select %p207, %s204, 15
      %s209 = smul.addr %s208, 2
      %s210 = smul.addr %s206, 32
      %s211 = sadd.s32 %s209, %s210
      %s212 = smul.addr %s211, 8
      %s213 = scalar_lea.vmem %s3, %s212
      %s214 = smul.u32 8, %s19
      %v215 = vld [vmem:[%s202] sm:$0xff]
      %v216 = vld [vmem:[%s202 + $0x8] sm:$0xff]
      %v217 = vld [vmem:[%s202 + $0x10] sm:$0xff]
      %v218 = vld [vmem:[%s202 + $0x18] sm:$0xff]
      %v219 = vld [vmem:[%s202 + $0x20] sm:$0xff]
      %v220 = vld [vmem:[%s202 + $0x28] sm:$0xff]
      %v221 = vld [vmem:[%s202 + $0x30] sm:$0xff]
      %v222 = vld [vmem:[%s202 + $0x38] sm:$0xff]
      %v223 = vld [vmem:[%s202 + $0x40] sm:$0xff]
      %v224 = vld [vmem:[%s202 + $0x48] sm:$0xff]
      %v225 = vld [vmem:[%s202 + $0x50] sm:$0xff]
      %v226 = vld [vmem:[%s202 + $0x58] sm:$0xff]
      %v227 = vld [vmem:[%s202 + $0x60] sm:$0xff]
      %v228 = vld [vmem:[%s202 + $0x68] sm:$0xff]
      %v229 = vld [vmem:[%s202 + $0x70] sm:$0xff]
      %v230 = vld [vmem:[%s202 + $0x78] sm:$0xff]
      %v231 = vld [vmem:[%s1] sm:$0x1]
      %v232 = vld [vmem:[%s2] sm:$0x1]
      %v234 = vperm.slane %v231, 0
      %v236 = vmul.f32 %v215, %v234
      %v237 = vmul.f32 %v216, %v234
      %v238 = vmul.f32 %v217, %v234
      %v239 = vmul.f32 %v218, %v234
      %v240 = vmul.f32 %v219, %v234
      %v241 = vmul.f32 %v220, %v234
      %v242 = vmul.f32 %v221, %v234
      %v243 = vmul.f32 %v222, %v234
      %v244 = vmul.f32 %v223, %v234
      %v245 = vmul.f32 %v224, %v234
      %v246 = vmul.f32 %v225, %v234
      %v247 = vmul.f32 %v226, %v234
      %v248 = vmul.f32 %v227, %v234
      %v249 = vmul.f32 %v228, %v234
      %v250 = vmul.f32 %v229, %v234
      %v251 = vmul.f32 %v230, %v234
      %v253 = vperm.slane %v232, 0
      %v255 = vadd.f32 %v236, %v253
      %v256 = vadd.f32 %v237, %v253
      %v257 = vadd.f32 %v238, %v253
      %v258 = vadd.f32 %v239, %v253
      %v259 = vadd.f32 %v240, %v253
      %v260 = vadd.f32 %v241, %v253
      %v261 = vadd.f32 %v242, %v253
      %v262 = vadd.f32 %v243, %v253
      %v263 = vadd.f32 %v244, %v253
      %v264 = vadd.f32 %v245, %v253
      %v265 = vadd.f32 %v246, %v253
      %v266 = vadd.f32 %v247, %v253
      %v267 = vadd.f32 %v248, %v253
      %v268 = vadd.f32 %v249, %v253
      %v269 = vadd.f32 %v250, %v253
      %v270 = vadd.f32 %v251, %v253
      %v271 = vmax.f32 %v255, 0.0
      %v272 = vmax.f32 %v256, 0.0
      %v273 = vmax.f32 %v257, 0.0
      %v274 = vmax.f32 %v258, 0.0
      %v275 = vmax.f32 %v259, 0.0
      %v276 = vmax.f32 %v260, 0.0
      %v277 = vmax.f32 %v261, 0.0
      %v278 = vmax.f32 %v262, 0.0
      %v279 = vmax.f32 %v263, 0.0
      %v280 = vmax.f32 %v264, 0.0
      %v281 = vmax.f32 %v265, 0.0
      %v282 = vmax.f32 %v266, 0.0
      %v283 = vmax.f32 %v267, 0.0
      %v284 = vmax.f32 %v268, 0.0
      %v285 = vmax.f32 %v269, 0.0
      %v286 = vmax.f32 %v270, 0.0
      %287 = vst [vmem:[%s213] sm:$0xff] %v271
      %288 = vst [vmem:[%s213 + $0x8] sm:$0xff] %v272
      %289 = vst [vmem:[%s213 + $0x10] sm:$0xff] %v273
      %290 = vst [vmem:[%s213 + $0x18] sm:$0xff] %v274
      %291 = vst [vmem:[%s213 + $0x20] sm:$0xff] %v275
      %292 = vst [vmem:[%s213 + $0x28] sm:$0xff] %v276
      %293 = vst [vmem:[%s213 + $0x30] sm:$0xff] %v277
      %294 = vst [vmem:[%s213 + $0x38] sm:$0xff] %v278
      %295 = vst [vmem:[%s213 + $0x40] sm:$0xff] %v279
      %296 = vst [vmem:[%s213 + $0x48] sm:$0xff] %v280
      %297 = vst [vmem:[%s213 + $0x50] sm:$0xff] %v281
      %298 = vst [vmem:[%s213 + $0x58] sm:$0xff] %v282
      %299 = vst [vmem:[%s213 + $0x60] sm:$0xff] %v283
      %300 = vst [vmem:[%s213 + $0x68] sm:$0xff] %v284
      %301 = vst [vmem:[%s213 + $0x70] sm:$0xff] %v285
      %302 = vst [vmem:[%s213 + $0x78] sm:$0xff] %v286
      %s303 = smul.u32 8, %s19
      %p304 = scmp.lt.s32.totalorder %s18, 1
      %s305 = scalar_select %p304, %s18, 1
      %p306 = scmp.lt.s32.totalorder %s303, 15
      %s307 = scalar_select %p306, %s303, 15
      %s308 = smul.addr %s307, 2
      %s309 = smul.addr %s305, 32
      %s310 = sadd.s32 %s308, %s309
      %s311 = smul.addr %s310, 8
      %s312 = scalar_lea.vmem %s3, %s311
      // Predicated region
      $region33: #{double_conv.5} parent=31 // pred_check
        %p313 = pneg %p116
      $region34: #{double_conv.5} parent=31 // pred_check_branch
        %315 = sbr.rel (%p313) target = $region36
      $region35: #{double_conv.5} parent=31 // pred_region
        %s316 = smul.u32 8, %s19
      $region36: #{double_conv.5} parent=31 // pred_fallthru
        _
    $region32: #{double_conv.5} parent=5 // pred_fallthru
      _
    %p317 = scmp.le.s32.totalorder 2, %s9
    // Predicated region
    $region37: #{double_conv.5} parent=5 // pred_check
      %p318 = pneg %p317
    $region38: #{double_conv.5} parent=5 // pred_check_branch
      %320 = sbr.rel (%p318) target = $region40
    $region39: #{double_conv.5} parent=5 // pred_region
      %s321 = ssub.s32 %s9, 2
      // Predicated region
      $region41: #{double_conv.5} parent=39 // pred_check
        %p322 = pneg %p122
      $region42: #{double_conv.5} parent=39 // pred_check_branch
        %324 = sbr.rel (%p322) target = $region44
      $region43: #{double_conv.5} parent=39 // pred_region
        %s325 = smul.u32 8, %s21
        %p326 = scmp.lt.s32.totalorder %s20, 1
        %s327 = scalar_select %p326, %s20, 1
        %p328 = scmp.lt.s32.totalorder %s325, 15
        %s329 = scalar_select %p328, %s325, 15
        %s330 = smul.addr %s329, 2
        %s331 = smul.addr %s327, 32
        %s332 = sadd.s32 %s330, %s331
        %s333 = smul.addr %s332, 8
        %s334 = scalar_lea.vmem %s3, %s333
      $region44: #{double_conv.5} parent=39 // pred_fallthru
        _
    $region40: #{double_conv.5} parent=5 // pred_fallthru
      _
  $region6: #{double_conv.5} parent=0 // loop_footer
    %s13 = sadd.s32 1, %s9
  $region7: #{double_conv.5} parent=0 // loop_footer_branch
    %8 = sbr.rel target = $region3
  $region8: #{double_conv.5} parent=0 // loop_exit
    _

// kernel: double_conv.4
$region0: #{double_conv.4}
  #allocation0 [shape = 'u32[]', space=smem, size = 0x4, offset = 0x4, fixed_abs, tag = 'smem constant byte address 0x4 - core index']
  #allocation1 [shape = 'u32[72,128]{1,0:T(1,128)}', space=vmem, size = 0x9000, scoped, tag = 'internal scratch']
  %s0 = inlined_call_operand.vmem [shape: f32[2,16,16,128], index: 0, kind: input, shape index: {}, may-alias: {0,1,2}]
  %s1 = inlined_call_operand.vmem [shape: f32[2,16,16,128], index: 1, kind: input, shape index: {}, may-alias: {0,1,2}]
  %s2 = inlined_call_operand.vmem [shape: f32[2,16,16,128], index: 2, kind: input, shape index: {}, may-alias: {0,1,2}]
  %s3 = inlined_call_operand.vmem [shape: f32[1152,128], index: 3, kind: input, shape index: {}]
  %s4 = inlined_call_operand.vmem [shape: f32[1,128], index: 4, kind: input, shape index: {}]
  %s5 = inlined_call_operand.vmem [shape: f32[1,128], index: 5, kind: input, shape index: {}]
  %s6 = inlined_call_operand.vmem [shape: f32[1,128], index: 6, kind: input, shape index: {}]
  %s7 = inlined_call_operand.vmem [shape: f32[2,16,16,128], index: 7, kind: output, shape index: {0}]
  %s8 = inlined_call_operand.vmem [shape: f32[2,2,8,128], index: 8, kind: output, shape index: {1}]
  %9 = xla_tuple %s7, %s8
  %s10 = sld [smem:[#allocation0]]
  $region69: #{double_conv.4} parent=0
    _
  %s12 = ssub.s32 1, %s10
  %s13 = scalar_select 0, %s12, %s10
  loop: start=0, step=1, limit=6
  $region2: #{double_conv.4} parent=0 // loop_pre_header
    _
  $region3: #{double_conv.4} parent=0 // loop_header
    %s15 = sphi 0, %s19
    %p16 = scmp.ge.s32.totalorder %s15, 6
    %s22 = sphi 0, %s34
    %s23 = sphi 0, %s30
    %s24 = sphi 0, %s22
    %s25 = sphi 0, %s23
    %s26 = sphi 0, %s24
    %s27 = sphi 0, %s25
    %s47 = sphi 0, %s49
    %s50 = sphi 0, %s47
    %s51 = sphi 0, %s50
    %s67 = sphi 0, %s51
    %s75 = sphi 0, %s77
    %s78 = sphi 0, %s75
    %s79 = sphi 0, %s78
    %s95 = sphi 0, %s79
    %s111 = sphi 0, %s113
    %s114 = sphi 0, %s111
    %s115 = sphi 0, %s114
    %s131 = sphi 0, %s115
    %s135 = sphi 0, %s135
    %s137 = sphi 0, %s135
    %s138 = sphi 0, %s137
    %s152 = sphi 0, %s138
    %s156 = sphi 0, %s156
    %s158 = sphi 0, %s156
    %s159 = sphi 0, %s158
    %s173 = sphi 0, %s159
    %s177 = sphi 0, %s177
    %s179 = sphi 0, %s177
    %s180 = sphi 0, %s179
    %s194 = sphi 0, %s180
    %s198 = sphi 0, %s198
    %s200 = sphi 0, %s198
    %s201 = sphi 0, %s200
    %s215 = sphi 0, %s201
    %s223 = sphi 0, %s225
    %s226 = sphi 0, %s223
    %s227 = sphi 0, %s226
    %s243 = sphi 0, %s227
    %s251 = sphi 0, %s253
    %s254 = sphi 0, %s251
    %s255 = sphi 0, %s254
    %s271 = sphi 0, %s255
  $region4: #{double_conv.4} parent=0 // loop_header_branch
    %18 = sbr.rel (%p16) target = $region8
  $region5: #{double_conv.4} parent=0 // loop_body
    %s20 = ssub.s32 %s15, 1
    %s21 = ssub.s32 %s15, 2
    %s28 = sadd.s32 1, %s23
    %p29 = scmp.ge.s32.totalorder %s28, 2
    %s30 = scalar_select %p29, 0, %s28
    %s31 = sadd.s32 1, %s22
    %s32 = scalar_select %p29, %s31, %s22
    %p33 = scmp.ge.s32.totalorder %s32, 2
    %s34 = scalar_select %p33, 0, %s32
    %s35 = smul.u32 %s23, 8
    %s36 = ssub.s32 %s35, 1
    %p37 = scmp.gt.s32.totalorder %s36, 0
    %s38 = scalar_select %p37, %s36, 0
    %s39 = smul.u32 %s30, 8
    %s40 = ssub.s32 %s39, 1
    %p41 = scmp.gt.s32.totalorder %s40, 0
    %s42 = scalar_select %p41, %s40, 0
    %s43 = ssub.s32 %s22, %s34
    %s44 = ssub.s32 %s38, %s42
    %s45 = sor.u32 %s43, %s44
    %p46 = scmp.eq.s32.totalorder %s45, 0
    %s48 = sadd.s32 %s47, 1
    %s49 = scalar_select %p46, %s47, %s48
    %p52 = pneg %p46
    %p53 = scmp.eq.s32.totalorder %s15, 3
    %p54 = por %p52, %p53
    %p55 = scmp.ne.s32.totalorder %s47, %s50
    %p56 = scmp.eq.s32.totalorder %s15, 0
    %p57 = por %p55, %p56
    %p58 = scmp.ne.s32.totalorder %s47, %s50
    %p59 = scmp.eq.s32.totalorder %s20, 3
    %p60 = por %p58, %p59
    %p61 = scmp.ne.s32.totalorder %s50, %s51
    %p62 = scmp.eq.s32.totalorder %s20, 0
    %p63 = por %p61, %p62
    %p64 = scmp.ne.s32.totalorder %s50, %s51
    %p65 = scmp.eq.s32.totalorder %s21, 3
    %p66 = por %p64, %p65
    %p68 = scmp.ne.s32.totalorder %s51, %s67
    %p69 = scmp.eq.s32.totalorder %s21, 0
    %p70 = por %p68, %p69
    %s71 = ssub.s32 %s22, %s34
    %s72 = ssub.s32 %s23, %s30
    %s73 = sor.u32 %s71, %s72
    %p74 = scmp.eq.s32.totalorder %s73, 0
    %s76 = sadd.s32 %s75, 1
    %s77 = scalar_select %p74, %s75, %s76
    %p80 = pneg %p74
    %p81 = scmp.eq.s32.totalorder %s15, 3
    %p82 = por %p80, %p81
    %p83 = scmp.ne.s32.totalorder %s75, %s78
    %p84 = scmp.eq.s32.totalorder %s15, 0
    %p85 = por %p83, %p84
    %p86 = scmp.ne.s32.totalorder %s75, %s78
    %p87 = scmp.eq.s32.totalorder %s20, 3
    %p88 = por %p86, %p87
    %p89 = scmp.ne.s32.totalorder %s78, %s79
    %p90 = scmp.eq.s32.totalorder %s20, 0
    %p91 = por %p89, %p90
    %p92 = scmp.ne.s32.totalorder %s78, %s79
    %p93 = scmp.eq.s32.totalorder %s21, 3
    %p94 = por %p92, %p93
    %p96 = scmp.ne.s32.totalorder %s79, %s95
    %p97 = scmp.eq.s32.totalorder %s21, 0
    %p98 = por %p96, %p97
    %s99 = sadd.s32 %s23, 1
    %s100 = smul.u32 %s99, 8
    %p101 = scmp.lt.s32.totalorder %s100, 15
    %s102 = scalar_select %p101, %s100, 15
    %s103 = sadd.s32 %s30, 1
    %s104 = smul.u32 %s103, 8
    %p105 = scmp.lt.s32.totalorder %s104, 15
    %s106 = scalar_select %p105, %s104, 15
    %s107 = ssub.s32 %s22, %s34
    %s108 = ssub.s32 %s102, %s106
    %s109 = sor.u32 %s107, %s108
    %p110 = scmp.eq.s32.totalorder %s109, 0
    %s112 = sadd.s32 %s111, 1
    %s113 = scalar_select %p110, %s111, %s112
    %p116 = pneg %p110
    %p117 = scmp.eq.s32.totalorder %s15, 3
    %p118 = por %p116, %p117
    %p119 = scmp.ne.s32.totalorder %s111, %s114
    %p120 = scmp.eq.s32.totalorder %s15, 0
    %p121 = por %p119, %p120
    %p122 = scmp.ne.s32.totalorder %s111, %s114
    %p123 = scmp.eq.s32.totalorder %s20, 3
    %p124 = por %p122, %p123
    %p125 = scmp.ne.s32.totalorder %s114, %s115
    %p126 = scmp.eq.s32.totalorder %s20, 0
    %p127 = por %p125, %p126
    %p128 = scmp.ne.s32.totalorder %s114, %s115
    %p129 = scmp.eq.s32.totalorder %s21, 3
    %p130 = por %p128, %p129
    %p132 = scmp.ne.s32.totalorder %s115, %s131
    %p133 = scmp.eq.s32.totalorder %s21, 0
    %p134 = por %p132, %p133
    %s136 = sadd.s32 %s135, 1
    %p139 = scmp.eq.s32.totalorder %s15, 3
    %p140 = scmp.ne.s32.totalorder %s135, %s137
    %p141 = scmp.eq.s32.totalorder %s15, 0
    %p142 = por %p140, %p141
    %p143 = scmp.ne.s32.totalorder %s135, %s137
    %p144 = scmp.eq.s32.totalorder %s20, 3
    %p145 = por %p143, %p144
    %p146 = scmp.ne.s32.totalorder %s137, %s138
    %p147 = scmp.eq.s32.totalorder %s20, 0
    %p148 = por %p146, %p147
    %p149 = scmp.ne.s32.totalorder %s137, %s138
    %p150 = scmp.eq.s32.totalorder %s21, 3
    %p151 = por %p149, %p150
    %p153 = scmp.ne.s32.totalorder %s138, %s152
    %p154 = scmp.eq.s32.totalorder %s21, 0
    %p155 = por %p153, %p154
    %s157 = sadd.s32 %s156, 1
    %p160 = scmp.eq.s32.totalorder %s15, 3
    %p161 = scmp.ne.s32.totalorder %s156, %s158
    %p162 = scmp.eq.s32.totalorder %s15, 0
    %p163 = por %p161, %p162
    %p164 = scmp.ne.s32.totalorder %s156, %s158
    %p165 = scmp.eq.s32.totalorder %s20, 3
    %p166 = por %p164, %p165
    %p167 = scmp.ne.s32.totalorder %s158, %s159
    %p168 = scmp.eq.s32.totalorder %s20, 0
    %p169 = por %p167, %p168
    %p170 = scmp.ne.s32.totalorder %s158, %s159
    %p171 = scmp.eq.s32.totalorder %s21, 3
    %p172 = por %p170, %p171
    %p174 = scmp.ne.s32.totalorder %s159, %s173
    %p175 = scmp.eq.s32.totalorder %s21, 0
    %p176 = por %p174, %p175
    %s178 = sadd.s32 %s177, 1
    %p181 = scmp.eq.s32.totalorder %s15, 3
    %p182 = scmp.ne.s32.totalorder %s177, %s179
    %p183 = scmp.eq.s32.totalorder %s15, 0
    %p184 = por %p182, %p183
    %p185 = scmp.ne.s32.totalorder %s177, %s179
    %p186 = scmp.eq.s32.totalorder %s20, 3
    %p187 = por %p185, %p186
    %p188 = scmp.ne.s32.totalorder %s179, %s180
    %p189 = scmp.eq.s32.totalorder %s20, 0
    %p190 = por %p188, %p189
    %p191 = scmp.ne.s32.totalorder %s179, %s180
    %p192 = scmp.eq.s32.totalorder %s21, 3
    %p193 = por %p191, %p192
    %p195 = scmp.ne.s32.totalorder %s180, %s194
    %p196 = scmp.eq.s32.totalorder %s21, 0
    %p197 = por %p195, %p196
    %s199 = sadd.s32 %s198, 1
    %p202 = scmp.eq.s32.totalorder %s15, 3
    %p203 = scmp.ne.s32.totalorder %s198, %s200
    %p204 = scmp.eq.s32.totalorder %s15, 0
    %p205 = por %p203, %p204
    %p206 = scmp.ne.s32.totalorder %s198, %s200
    %p207 = scmp.eq.s32.totalorder %s20, 3
    %p208 = por %p206, %p207
    %p209 = scmp.ne.s32.totalorder %s200, %s201
    %p210 = scmp.eq.s32.totalorder %s20, 0
    %p211 = por %p209, %p210
    %p212 = scmp.ne.s32.totalorder %s200, %s201
    %p213 = scmp.eq.s32.totalorder %s21, 3
    %p214 = por %p212, %p213
    %p216 = scmp.ne.s32.totalorder %s201, %s215
    %p217 = scmp.eq.s32.totalorder %s21, 0
    %p218 = por %p216, %p217
    %s219 = ssub.s32 %s22, %s34
    %s220 = ssub.s32 %s23, %s30
    %s221 = sor.u32 %s219, %s220
    %p222 = scmp.eq.s32.totalorder %s221, 0
    %s224 = sadd.s32 %s223, 1
    %s225 = scalar_select %p222, %s223, %s224
    %p228 = pneg %p222
    %p229 = scmp.eq.s32.totalorder %s15, 3
    %p230 = por %p228, %p229
    %p231 = scmp.ne.s32.totalorder %s223, %s226
    %p232 = scmp.eq.s32.totalorder %s15, 0
    %p233 = por %p231, %p232
    %p234 = scmp.ne.s32.totalorder %s223, %s226
    %p235 = scmp.eq.s32.totalorder %s20, 3
    %p236 = por %p234, %p235
    %p237 = scmp.ne.s32.totalorder %s226, %s227
    %p238 = scmp.eq.s32.totalorder %s20, 0
    %p239 = por %p237, %p238
    %p240 = scmp.ne.s32.totalorder %s226, %s227
    %p241 = scmp.eq.s32.totalorder %s21, 3
    %p242 = por %p240, %p241
    %p244 = scmp.ne.s32.totalorder %s227, %s243
    %p245 = scmp.eq.s32.totalorder %s21, 0
    %p246 = por %p244, %p245
    %s247 = ssub.s32 %s22, %s34
    %s248 = ssub.s32 %s23, %s30
    %s249 = sor.u32 %s247, %s248
    %p250 = scmp.eq.s32.totalorder %s249, 0
    %s252 = sadd.s32 %s251, 1
    %s253 = scalar_select %p250, %s251, %s252
    %p256 = pneg %p250
    %p257 = scmp.eq.s32.totalorder %s15, 3
    %p258 = por %p256, %p257
    %p259 = scmp.ne.s32.totalorder %s251, %s254
    %p260 = scmp.eq.s32.totalorder %s15, 0
    %p261 = por %p259, %p260
    %p262 = scmp.ne.s32.totalorder %s251, %s254
    %p263 = scmp.eq.s32.totalorder %s20, 3
    %p264 = por %p262, %p263
    %p265 = scmp.ne.s32.totalorder %s254, %s255
    %p266 = scmp.eq.s32.totalorder %s20, 0
    %p267 = por %p265, %p266
    %p268 = scmp.ne.s32.totalorder %s254, %s255
    %p269 = scmp.eq.s32.totalorder %s21, 3
    %p270 = por %p268, %p269
    %p272 = scmp.ne.s32.totalorder %s255, %s271
    %p273 = scmp.eq.s32.totalorder %s21, 0
    %p274 = por %p272, %p273
    %p275 = scmp.le.s32.totalorder 1, %s15
    %p276 = scmp.lt.s32.totalorder %s15, 5
    %p277 = pnand %p275, %p276
    %p278 = pneg %p277
    // Predicated region
    $region9: #{double_conv.4} parent=5 // pred_check
      _
    $region10: #{double_conv.4} parent=5 // pred_check_branch
      %280 = sbr.rel (%p277) target = $region12
    $region11: #{double_conv.4} parent=5 // pred_region
      %s281 = ssub.s32 %s15, 1
      // Predicated region
      $region13: #{double_conv.4} parent=11 // pred_check
        %p282 = pneg %p148
      $region14: #{double_conv.4} parent=11 // pred_check_branch
        %284 = sbr.rel (%p282) target = $region16
      $region15: #{double_conv.4} parent=11 // pred_region
        _
      $region16: #{double_conv.4} parent=11 // pred_fallthru
        _
      // Predicated region
      $region17: #{double_conv.4} parent=11 // pred_check
        %p285 = pneg %p169
      $region18: #{double_conv.4} parent=11 // pred_check_branch
        %287 = sbr.rel (%p285) target = $region20
      $region19: #{double_conv.4} parent=11 // pred_region
        _
      $region20: #{double_conv.4} parent=11 // pred_fallthru
        _
      // Predicated region
      $region21: #{double_conv.4} parent=11 // pred_check
        %p288 = pneg %p190
      $region22: #{double_conv.4} parent=11 // pred_check_branch
        %290 = sbr.rel (%p288) target = $region24
      $region23: #{double_conv.4} parent=11 // pred_region
        _
      $region24: #{double_conv.4} parent=11 // pred_fallthru
        _
      // Predicated region
      $region25: #{double_conv.4} parent=11 // pred_check
        %p291 = pneg %p211
      $region26: #{double_conv.4} parent=11 // pred_check_branch
        %293 = sbr.rel (%p291) target = $region28
      $region27: #{double_conv.4} parent=11 // pred_region
        _
      $region28: #{double_conv.4} parent=11 // pred_fallthru
        _
    $region12: #{double_conv.4} parent=5 // pred_fallthru
      _
    %p294 = scmp.lt.s32.totalorder %s15, 4
    // Predicated region
    $region29: #{double_conv.4} parent=5 // pred_check
      %p295 = pneg %p294
    $region30: #{double_conv.4} parent=5 // pred_check_branch
      %297 = sbr.rel (%p295) target = $region32
    $region31: #{double_conv.4} parent=5 // pred_region
      // Predicated region
      $region33: #{double_conv.4} parent=31 // pred_check
        %p298 = pneg %p57
      $region34: #{double_conv.4} parent=31 // pred_check_branch
        %300 = sbr.rel (%p298) target = $region36
      $region35: #{double_conv.4} parent=31 // pred_region
        %s301 = smul.u32 %s23, 8
        %s302 = ssub.s32 %s301, 1
        %p303 = scmp.gt.s32.totalorder %s302, 0
        %s304 = scalar_select %p303, %s302, 0
        %p305 = scmp.lt.s32.totalorder %s22, 1
        %s306 = scalar_select %p305, %s22, 1
        %p307 = scmp.lt.s32.totalorder %s304, 15
        %s308 = scalar_select %p307, %s304, 15
        %s309 = smul.addr %s308, 2
        %s310 = smul.addr %s306, 32
        %s311 = sadd.s32 %s309, %s310
        %s312 = smul.addr %s311, 8
        %s313 = scalar_lea.vmem %s0, %s312
        %s314 = smul.u32 %s23, 8
        %s315 = ssub.s32 %s314, 1
        %p316 = scmp.gt.s32.totalorder %s315, 0
        %s317 = scalar_select %p316, %s315, 0
      $region36: #{double_conv.4} parent=31 // pred_fallthru
        _
      // Predicated region
      $region37: #{double_conv.4} parent=31 // pred_check
        %p318 = pneg %p85
      $region38: #{double_conv.4} parent=31 // pred_check_branch
        %320 = sbr.rel (%p318) target = $region40
      $region39: #{double_conv.4} parent=31 // pred_region
        %s321 = smul.u32 8, %s23
        %p322 = scmp.lt.s32.totalorder %s22, 1
        %s323 = scalar_select %p322, %s22, 1
        %p324 = scmp.lt.s32.totalorder %s321, 15
        %s325 = scalar_select %p324, %s321, 15
        %s326 = smul.addr %s325, 2
        %s327 = smul.addr %s323, 32
        %s328 = sadd.s32 %s326, %s327
        %s329 = smul.addr %s328, 8
        %s330 = scalar_lea.vmem %s1, %s329
        %s331 = smul.u32 8, %s23
      $region40: #{double_conv.4} parent=31 // pred_fallthru
        _
      // Predicated region
      $region41: #{double_conv.4} parent=31 // pred_check
        %p332 = pneg %p121
      $region42: #{double_conv.4} parent=31 // pred_check_branch
        %334 = sbr.rel (%p332) target = $region44
      $region43: #{double_conv.4} parent=31 // pred_region
        %s335 = sadd.s32 %s23, 1
        %s336 = smul.u32 %s335, 8
        %p337 = scmp.lt.s32.totalorder %s336, 15
        %s338 = scalar_select %p337, %s336, 15
        %p339 = scmp.lt.s32.totalorder %s22, 1
        %s340 = scalar_select %p339, %s22, 1
        %p341 = scmp.lt.s32.totalorder %s338, 15
        %s342 = scalar_select %p341, %s338, 15
        %s343 = smul.addr %s342, 2
        %s344 = smul.addr %s340, 32
        %s345 = sadd.s32 %s343, %s344
        %s346 = smul.addr %s345, 8
        %s347 = scalar_lea.vmem %s2, %s346
        %s348 = sadd.s32 %s23, 1
        %s349 = smul.u32 %s348, 8
        %p350 = scmp.lt.s32.totalorder %s349, 15
        %s351 = scalar_select %p350, %s349, 15
      $region44: #{double_conv.4} parent=31 // pred_fallthru
        _
    $region32: #{double_conv.4} parent=5 // pred_fallthru
      _
    %p352 = scmp.le.s32.totalorder 1, %s15
    %p353 = scmp.lt.s32.totalorder %s15, 5
    %p354 = pnand %p352, %p353
    %p355 = pneg %p354
    // Predicated region
    $region45: #{double_conv.4} parent=5 // pred_check
      _
    $region46: #{double_conv.4} parent=5 // pred_check_branch
      %357 = sbr.rel (%p354) target = $region48
    $region47: #{double_conv.4} parent=5 // pred_region
      %s358 = ssub.s32 %s15, 1
      %s359 = smul.u32 %s25, 8
      %s360 = ssub.s32 %s359, 1
      %p361 = scmp.gt.s32.totalorder %s360, 0
      %s362 = scalar_select %p361, %s360, 0
      %p363 = scmp.lt.s32.totalorder %s24, 1
      %s364 = scalar_select %p363, %s24, 1
      %p365 = scmp.lt.s32.totalorder %s362, 15
      %s366 = scalar_select %p365, %s362, 15
      %s367 = smul.addr %s366, 2
      %s368 = smul.addr %s364, 32
      %s369 = sadd.s32 %s367, %s368
      %s370 = smul.addr %s369, 8
      %s371 = scalar_lea.vmem %s0, %s370
      %p372 = pneg %p63
      %p373 = pneg %p60
      %s374 = smul.u32 8, %s25
      %p375 = scmp.lt.s32.totalorder %s24, 1
      %s376 = scalar_select %p375, %s24, 1
      %p377 = scmp.lt.s32.totalorder %s374, 15
      %s378 = scalar_select %p377, %s374, 15
      %s379 = smul.addr %s378, 2
      %s380 = smul.addr %s376, 32
      %s381 = sadd.s32 %s379, %s380
      %s382 = smul.addr %s381, 8
      %s383 = scalar_lea.vmem %s1, %s382
      %p384 = pneg %p91
      %p385 = pneg %p88
      %s386 = sadd.s32 %s25, 1
      %s387 = smul.u32 %s386, 8
      %p388 = scmp.lt.s32.totalorder %s387, 15
      %s389 = scalar_select %p388, %s387, 15
      %p390 = scmp.lt.s32.totalorder %s24, 1
      %s391 = scalar_select %p390, %s24, 1
      %p392 = scmp.lt.s32.totalorder %s389, 15
      %s393 = scalar_select %p392, %s389, 15
      %s394 = smul.addr %s393, 2
      %s395 = smul.addr %s391, 32
      %s396 = sadd.s32 %s394, %s395
      %s397 = smul.addr %s396, 8
      %s398 = scalar_lea.vmem %s2, %s397
      %p399 = pneg %p127
      %p400 = pneg %p124
      %p401 = pneg %p148
      %p402 = pneg %p145
      %p403 = pneg %p169
      %p404 = pneg %p166
      %p405 = pneg %p190
      %p406 = pneg %p187
      %p407 = pneg %p211
      %p408 = pneg %p208
      %p409 = pneg %p239
      %p410 = pneg %p236
      %s411 = smul.u32 8, %s25
      %p412 = scmp.lt.s32.totalorder %s24, 1
      %s413 = scalar_select %p412, %s24, 1
      %p414 = scmp.lt.s32.totalorder %s411, 15
      %s415 = scalar_select %p414, %s411, 15
      %s416 = smul.addr %s415, 2
      %s417 = smul.addr %s413, 32
      %s418 = sadd.s32 %s416, %s417
      %s419 = smul.addr %s418, 8
      %s420 = scalar_lea.vmem %s7, %s419
      %p421 = pneg %p267
      %p422 = pneg %p264
      %p423 = scmp.lt.s32.totalorder %s24, 1
      %s424 = scalar_select %p423, %s24, 1
      %p425 = scmp.lt.s32.totalorder %s25, 1
      %s426 = scalar_select %p425, %s25, 1
      %s427 = smul.addr %s424, 2
      %s428 = sadd.s32 %s426, %s427
      %s429 = smul.addr %s428, 8
      %s430 = scalar_lea.vmem %s8, %s429
      %s431 = smul.u32 %s25, 8
      %s432 = ssub.s32 %s431, 1
      %p433 = scmp.gt.s32.totalorder %s432, 0
      %s434 = scalar_select %p433, %s432, 0
      %p435 = scmp.lt.s32.totalorder %s24, 1
      %s436 = scalar_select %p435, %s24, 1
      %p437 = scmp.lt.s32.totalorder %s434, 15
      %s438 = scalar_select %p437, %s434, 15
      %s439 = smul.addr %s438, 2
      %s440 = smul.addr %s436, 32
      %s441 = sadd.s32 %s439, %s440
      %s442 = smul.addr %s441, 8
      %s443 = scalar_lea.vmem %s0, %s442
      %s444 = smul.u32 %s25, 8
      %s445 = ssub.s32 %s444, 1
      %p446 = scmp.gt.s32.totalorder %s445, 0
      %s447 = scalar_select %p446, %s445, 0
      %s448 = smul.u32 8, %s25
      %p449 = scmp.lt.s32.totalorder %s24, 1
      %s450 = scalar_select %p449, %s24, 1
      %p451 = scmp.lt.s32.totalorder %s448, 15
      %s452 = scalar_select %p451, %s448, 15
      %s453 = smul.addr %s452, 2
      %s454 = smul.addr %s450, 32
      %s455 = sadd.s32 %s453, %s454
      %s456 = smul.addr %s455, 8
      %s457 = scalar_lea.vmem %s1, %s456
      %s458 = smul.u32 8, %s25
      %s459 = sadd.s32 %s25, 1
      %s460 = smul.u32 %s459, 8
      %p461 = scmp.lt.s32.totalorder %s460, 15
      %s462 = scalar_select %p461, %s460, 15
      %p463 = scmp.lt.s32.totalorder %s24, 1
      %s464 = scalar_select %p463, %s24, 1
      %p465 = scmp.lt.s32.totalorder %s462, 15
      %s466 = scalar_select %p465, %s462, 15
      %s467 = smul.addr %s466, 2
      %s468 = smul.addr %s464, 32
      %s469 = sadd.s32 %s467, %s468
      %s470 = smul.addr %s469, 8
      %s471 = scalar_lea.vmem %s2, %s470
      %s472 = sadd.s32 %s25, 1
      %s473 = smul.u32 %s472, 8
      %p474 = scmp.lt.s32.totalorder %s473, 15
      %s475 = scalar_select %p474, %s473, 15
      %s476 = smul.u32 8, %s25
      %p477 = scmp.lt.s32.totalorder %s24, 1
      %s478 = scalar_select %p477, %s24, 1
      %p479 = scmp.lt.s32.totalorder %s476, 15
      %s480 = scalar_select %p479, %s476, 15
      %s481 = smul.addr %s480, 2
      %s482 = smul.addr %s478, 32
      %s483 = sadd.s32 %s481, %s482
      %s484 = smul.addr %s483, 8
      %s485 = scalar_lea.vmem %s7, %s484
      %s486 = smul.u32 8, %s25
      %p487 = scmp.lt.s32.totalorder %s24, 1
      %s488 = scalar_select %p487, %s24, 1
      %p489 = scmp.lt.s32.totalorder %s25, 1
      %s490 = scalar_select %p489, %s25, 1
      %s491 = smul.addr %s488, 2
      %s492 = sadd.s32 %s490, %s491
      %s493 = smul.addr %s492, 8
      %s494 = scalar_lea.vmem %s8, %s493
      %v495 = vld [vmem:[%s457] sm:$0xff]
      %v496 = vld [vmem:[%s457 + $0x8] sm:$0xff]
      %v497 = vld [vmem:[%s457 + $0x10] sm:$0xff]
      %v498 = vld [vmem:[%s457 + $0x18] sm:$0xff]
      %v499 = vld [vmem:[%s457 + $0x20] sm:$0xff]
      %v500 = vld [vmem:[%s457 + $0x28] sm:$0xff]
      %v501 = vld [vmem:[%s457 + $0x30] sm:$0xff]
      %v502 = vld [vmem:[%s457 + $0x38] sm:$0xff]
      %v503 = vld [vmem:[%s457 + $0x40] sm:$0xff]
      %v504 = vld [vmem:[%s457 + $0x48] sm:$0xff]
      %v505 = vld [vmem:[%s457 + $0x50] sm:$0xff]
      %v506 = vld [vmem:[%s457 + $0x58] sm:$0xff]
      %v507 = vld [vmem:[%s457 + $0x60] sm:$0xff]
      %v508 = vld [vmem:[%s457 + $0x68] sm:$0xff]
      %v509 = vld [vmem:[%s457 + $0x70] sm:$0xff]
      %v510 = vld [vmem:[%s457 + $0x78] sm:$0xff]
      %v511 = vld [vmem:[%s5] sm:$0x1]
      %v512 = vld [vmem:[%s6] sm:$0x1]
      %v514 = vperm.slane %v511, 0
      %v516 = vmul.f32 %v495, %v514
      %v517 = vmul.f32 %v496, %v514
      %v518 = vmul.f32 %v497, %v514
      %v519 = vmul.f32 %v498, %v514
      %v520 = vmul.f32 %v499, %v514
      %v521 = vmul.f32 %v500, %v514
      %v522 = vmul.f32 %v501, %v514
      %v523 = vmul.f32 %v502, %v514
      %v524 = vmul.f32 %v503, %v514
      %v525 = vmul.f32 %v504, %v514
      %v526 = vmul.f32 %v505, %v514
      %v527 = vmul.f32 %v506, %v514
      %v528 = vmul.f32 %v507, %v514
      %v529 = vmul.f32 %v508, %v514
      %v530 = vmul.f32 %v509, %v514
      %v531 = vmul.f32 %v510, %v514
      %v533 = vperm.slane %v512, 0
      %v535 = vadd.f32 %v516, %v533
      %v536 = vadd.f32 %v517, %v533
      %v537 = vadd.f32 %v518, %v533
      %v538 = vadd.f32 %v519, %v533
      %v539 = vadd.f32 %v520, %v533
      %v540 = vadd.f32 %v521, %v533
      %v541 = vadd.f32 %v522, %v533
      %v542 = vadd.f32 %v523, %v533
      %v543 = vadd.f32 %v524, %v533
      %v544 = vadd.f32 %v525, %v533
      %v545 = vadd.f32 %v526, %v533
      %v546 = vadd.f32 %v527, %v533
      %v547 = vadd.f32 %v528, %v533
      %v548 = vadd.f32 %v529, %v533
      %v549 = vadd.f32 %v530, %v533
      %v550 = vadd.f32 %v531, %v533
      %v551 = vmax.f32 %v535, 0.0
      %v552 = vmax.f32 %v536, 0.0
      %v553 = vmax.f32 %v537, 0.0
      %v554 = vmax.f32 %v538, 0.0
      %v555 = vmax.f32 %v539, 0.0
      %v556 = vmax.f32 %v540, 0.0
      %v557 = vmax.f32 %v541, 0.0
      %v558 = vmax.f32 %v542, 0.0
      %v559 = vmax.f32 %v543, 0.0
      %v560 = vmax.f32 %v544, 0.0
      %v561 = vmax.f32 %v545, 0.0
      %v562 = vmax.f32 %v546, 0.0
      %v563 = vmax.f32 %v547, 0.0
      %v564 = vmax.f32 %v548, 0.0
      %v565 = vmax.f32 %v549, 0.0
      %v566 = vmax.f32 %v550, 0.0
      %v567 = vld [vmem:[%s443] sm:$0xff]
      %v568 = vld [vmem:[%s443 + $0x8] sm:$0xff]
      %v569 = vmul.f32 %v567, %v514
      %v570 = vmul.f32 %v568, %v514
      %v571 = vadd.f32 %v569, %v533
      %v572 = vadd.f32 %v570, %v533
      %v573 = vmax.f32 %v571, 0.0
      %v574 = vmax.f32 %v572, 0.0
      %v575 = vld [vmem:[%s471] sm:$0xff]
      %v576 = vld [vmem:[%s471 + $0x8] sm:$0xff]
      %v577 = vmul.f32 %v575, %v514
      %v578 = vmul.f32 %v576, %v514
      %v579 = vadd.f32 %v577, %v533
      %v580 = vadd.f32 %v578, %v533
      %v581 = vmax.f32 %v579, 0.0
      %v582 = vmax.f32 %v580, 0.0
      %p583 = scmp.gt.s32.totalorder %s25, 0
      %s584 = scalar_select %p583, 1, 0
      %v585 = vstv %s584
      %vm586 = vcmp.eq.s32.totalorder %v585, 1
      %v587 = vsel %vm586, %v573, 0.0
      %v588 = vsel %vm586, %v574, 0.0
      %p589 = scmp.lt.s32.totalorder %s25, 1
      %s590 = scalar_select %p589, 1, 0
      %v591 = vstv %s590
      %vm592 = vcmp.eq.s32.totalorder %v591, 1
      %v593 = vsel %vm592, %v581, 0.0
      %v594 = vsel %vm592, %v582, 0.0
      %vm615 = vcmask 1040384
      %v616 = vrot.slane %v587, 7
      %v617 = vrot.slane %v588, 7
      %v618 = vsel %vm615, %v616, %v617
      %v619 = vrot.slane %v551, 7
      %v620 = vrot.slane %v552, 7
      %v621 = vsel %vm615, %v619, %v620
      %v622 = vrot.slane %v553, 7
      %v623 = vrot.slane %v554, 7
      %v624 = vsel %vm615, %v622, %v623
      %v625 = vrot.slane %v555, 7
      %v626 = vrot.slane %v556, 7
      %v627 = vsel %vm615, %v625, %v626
      %v628 = vrot.slane %v557, 7
      %v629 = vrot.slane %v558, 7
      %v630 = vsel %vm615, %v628, %v629
      %v631 = vrot.slane %v559, 7
      %v632 = vrot.slane %v560, 7
      %v633 = vsel %vm615, %v631, %v632
      %v634 = vrot.slane %v561, 7
      %v635 = vrot.slane %v562, 7
      %v636 = vsel %vm615, %v634, %v635
      %v637 = vrot.slane %v563, 7
      %v638 = vrot.slane %v564, 7
      %v639 = vsel %vm615, %v637, %v638
      %v640 = vrot.slane %v565, 7
      %v641 = vrot.slane %v566, 7
      %v642 = vsel %vm615, %v640, %v641
      %v643 = vrot.slane %v593, 7
      %v644 = vrot.slane %v594, 7
      %v645 = vsel %vm615, %v643, %v644
      %v676 = vsel %vm615, 0.0, %v616
      %v677 = vsel %vm615, 0.0, %v619
      %v678 = vsel %vm615, 0.0, %v622
      %v679 = vsel %vm615, 0.0, %v625
      %v680 = vsel %vm615, 0.0, %v628
      %v681 = vsel %vm615, 0.0, %v631
      %v682 = vsel %vm615, 0.0, %v634
      %v683 = vsel %vm615, 0.0, %v637
      %v684 = vsel %vm615, 0.0, %v640
      %v685 = vsel %vm615, 0.0, %v643
      %v686 = vsel %vm615, %v617, 0.0
      %v687 = vsel %vm615, %v620, 0.0
      %v688 = vsel %vm615, %v623, 0.0
      %v689 = vsel %vm615, %v626, 0.0
      %v690 = vsel %vm615, %v629, 0.0
      %v691 = vsel %vm615, %v632, 0.0
      %v692 = vsel %vm615, %v635, 0.0
      %v693 = vsel %vm615, %v638, 0.0
      %v694 = vsel %vm615, %v641, 0.0
      %v695 = vsel %vm615, %v644, 0.0
      %vm712 = vcmask 1046528
      %v713 = vrot.slane %v676, 1
      %v714 = vrot.slane %v618, 1
      %v715 = vsel %vm712, %v713, %v714
      %v716 = vrot.slane %v686, 1
      %v717 = vsel %vm712, %v714, %v716
      %v718 = vrot.slane %v677, 1
      %v719 = vrot.slane %v621, 1
      %v720 = vsel %vm712, %v718, %v719
      %v721 = vrot.slane %v687, 1
      %v722 = vsel %vm712, %v719, %v721
      %v723 = vrot.slane %v678, 1
      %v724 = vrot.slane %v624, 1
      %v725 = vsel %vm712, %v723, %v724
      %v726 = vrot.slane %v688, 1
      %v727 = vsel %vm712, %v724, %v726
      %v728 = vrot.slane %v679, 1
      %v729 = vrot.slane %v627, 1
      %v730 = vsel %vm712, %v728, %v729
      %v731 = vrot.slane %v689, 1
      %v732 = vsel %vm712, %v729, %v731
      %v733 = vrot.slane %v680, 1
      %v734 = vrot.slane %v630, 1
      %v735 = vsel %vm712, %v733, %v734
      %v736 = vrot.slane %v690, 1
      %v737 = vsel %vm712, %v734, %v736
      %v738 = vrot.slane %v681, 1
      %v739 = vrot.slane %v633, 1
      %v740 = vsel %vm712, %v738, %v739
      %v741 = vrot.slane %v691, 1
      %v742 = vsel %vm712, %v739, %v741
      %v743 = vrot.slane %v682, 1
      %v744 = vrot.slane %v636, 1
      %v745 = vsel %vm712, %v743, %v744
      %v746 = vrot.slane %v692, 1
      %v747 = vsel %vm712, %v744, %v746
      %v748 = vrot.slane %v683, 1
      %v749 = vrot.slane %v639, 1
      %v750 = vsel %vm712, %v748, %v749
      %v751 = vrot.slane %v693, 1
      %v752 = vsel %vm712, %v749, %v751
      %vm769 = vcmask 1045504
      %v770 = vrot.slane %v676, 2
      %v771 = vrot.slane %v618, 2
      %v772 = vsel %vm769, %v770, %v771
      %v773 = vrot.slane %v686, 2
      %v774 = vsel %vm769, %v771, %v773
      %v775 = vrot.slane %v677, 2
      %v776 = vrot.slane %v621, 2
      %v777 = vsel %vm769, %v775, %v776
      %v778 = vrot.slane %v687, 2
      %v779 = vsel %vm769, %v776, %v778
      %v780 = vrot.slane %v678, 2
      %v781 = vrot.slane %v624, 2
      %v782 = vsel %vm769, %v780, %v781
      %v783 = vrot.slane %v688, 2
      %v784 = vsel %vm769, %v781, %v783
      %v785 = vrot.slane %v679, 2
      %v786 = vrot.slane %v627, 2
      %v787 = vsel %vm769, %v785, %v786
      %v788 = vrot.slane %v689, 2
      %v789 = vsel %vm769, %v786, %v788
      %v790 = vrot.slane %v680, 2
      %v791 = vrot.slane %v630, 2
      %v792 = vsel %vm769, %v790, %v791
      %v793 = vrot.slane %v690, 2
      %v794 = vsel %vm769, %v791, %v793
      %v795 = vrot.slane %v681, 2
      %v796 = vrot.slane %v633, 2
      %v797 = vsel %vm769, %v795, %v796
      %v798 = vrot.slane %v691, 2
      %v799 = vsel %vm769, %v796, %v798
      %v800 = vrot.slane %v682, 2
      %v801 = vrot.slane %v636, 2
      %v802 = vsel %vm769, %v800, %v801
      %v803 = vrot.slane %v692, 2
      %v804 = vsel %vm769, %v801, %v803
      %v805 = vrot.slane %v683, 2
      %v806 = vrot.slane %v639, 2
      %v807 = vsel %vm769, %v805, %v806
      %v808 = vrot.slane %v693, 2
      %v809 = vsel %vm769, %v806, %v808
      %v828 = vrot.slane %v684, 1
      %v829 = vrot.slane %v642, 1
      %v830 = vsel %vm712, %v828, %v829
      %v831 = vrot.slane %v694, 1
      %v832 = vsel %vm712, %v829, %v831
      %v835 = vrot.slane %v684, 2
      %v836 = vrot.slane %v642, 2
      %v837 = vsel %vm769, %v835, %v836
      %v838 = vrot.slane %v694, 2
      %v839 = vsel %vm769, %v836, %v838
      %v844 = vrot.slane %v685, 1
      %v845 = vrot.slane %v645, 1
      %v846 = vsel %vm712, %v844, %v845
      %v847 = vrot.slane %v695, 1
      %v848 = vsel %vm712, %v845, %v847
      %v851 = vrot.slane %v685, 2
      %v852 = vrot.slane %v645, 2
      %v853 = vsel %vm769, %v851, %v852
      %v854 = vrot.slane %v695, 2
      %v855 = vsel %vm769, %v852, %v854
      %v858 = vld [vmem:[%s3] sm:$0xff]
      %v859 = vld [vmem:[%s3 + $0x8] sm:$0xff]
      %v860 = vld [vmem:[%s3 + $0x10] sm:$0xff]
      %v861 = vld [vmem:[%s3 + $0x18] sm:$0xff]
      %v862 = vld [vmem:[%s3 + $0x20] sm:$0xff]
      %v863 = vld [vmem:[%s3 + $0x28] sm:$0xff]
      %v864 = vld [vmem:[%s3 + $0x30] sm:$0xff]
      %v865 = vld [vmem:[%s3 + $0x38] sm:$0xff]
      %v866 = vld [vmem:[%s3 + $0x40] sm:$0xff]
      %v867 = vld [vmem:[%s3 + $0x48] sm:$0xff]
      %v868 = vld [vmem:[%s3 + $0x50] sm:$0xff]
      %v869 = vld [vmem:[%s3 + $0x58] sm:$0xff]
      %v870 = vld [vmem:[%s3 + $0x60] sm:$0xff]
      %v871 = vld [vmem:[%s3 + $0x68] sm:$0xff]
      %v872 = vld [vmem:[%s3 + $0x70] sm:$0xff]
      %v873 = vld [vmem:[%s3 + $0x78] sm:$0xff]
      %v874 = vld [vmem:[%s3 + $0x80] sm:$0xff]
      %v875 = vld [vmem:[%s3 + $0x88] sm:$0xff]
      %v876 = vld [vmem:[%s3 + $0x90] sm:$0xff]
      %v877 = vld [vmem:[%s3 + $0x98] sm:$0xff]
      %v878 = vld [vmem:[%s3 + $0xa0] sm:$0xff]
      %v879 = vld [vmem:[%s3 + $0xa8] sm:$0xff]
      %v880 = vld [vmem:[%s3 + $0xb0] sm:$0xff]
      %v881 = vld [vmem:[%s3 + $0xb8] sm:$0xff]
      %v882 = vld [vmem:[%s3 + $0xc0] sm:$0xff]
      %v883 = vld [vmem:[%s3 + $0xc8] sm:$0xff]
      %v884 = vld [vmem:[%s3 + $0xd0] sm:$0xff]
      %v885 = vld [vmem:[%s3 + $0xd8] sm:$0xff]
      %v886 = vld [vmem:[%s3 + $0xe0] sm:$0xff]
      %v887 = vld [vmem:[%s3 + $0xe8] sm:$0xff]
      %v888 = vld [vmem:[%s3 + $0xf0] sm:$0xff]
      %v889 = vld [vmem:[%s3 + $0xf8] sm:$0xff]
      %v890 = vld [vmem:[%s3 + $0x100] sm:$0xff]
      %v891 = vld [vmem:[%s3 + $0x108] sm:$0xff]
      %v892 = vld [vmem:[%s3 + $0x110] sm:$0xff]
      %v893 = vld [vmem:[%s3 + $0x118] sm:$0xff]
      %v894 = vld [vmem:[%s3 + $0x120] sm:$0xff]
      %v895 = vld [vmem:[%s3 + $0x128] sm:$0xff]
      %v896 = vld [vmem:[%s3 + $0x130] sm:$0xff]
      %v897 = vld [vmem:[%s3 + $0x138] sm:$0xff]
      %v898 = vld [vmem:[%s3 + $0x140] sm:$0xff]
      %v899 = vld [vmem:[%s3 + $0x148] sm:$0xff]
      %v900 = vld [vmem:[%s3 + $0x150] sm:$0xff]
      %v901 = vld [vmem:[%s3 + $0x158] sm:$0xff]
      %v902 = vld [vmem:[%s3 + $0x160] sm:$0xff]
      %v903 = vld [vmem:[%s3 + $0x168] sm:$0xff]
      %v904 = vld [vmem:[%s3 + $0x170] sm:$0xff]
      %v905 = vld [vmem:[%s3 + $0x178] sm:$0xff]
      %v906 = vld [vmem:[%s3 + $0x180] sm:$0xff]
      %v907 = vld [vmem:[%s3 + $0x188] sm:$0xff]
      %v908 = vld [vmem:[%s3 + $0x190] sm:$0xff]
      %v909 = vld [vmem:[%s3 + $0x198] sm:$0xff]
      %v910 = vld [vmem:[%s3 + $0x1a0] sm:$0xff]
      %v911 = vld [vmem:[%s3 + $0x1a8] sm:$0xff]
      %v912 = vld [vmem:[%s3 + $0x1b0] sm:$0xff]
      %v913 = vld [vmem:[%s3 + $0x1b8] sm:$0xff]
      %v914 = vld [vmem:[%s3 + $0x1c0] sm:$0xff]
      %v915 = vld [vmem:[%s3 + $0x1c8] sm:$0xff]
      %v916 = vld [vmem:[%s3 + $0x1d0] sm:$0xff]
      %v917 = vld [vmem:[%s3 + $0x1d8] sm:$0xff]
      %v918 = vld [vmem:[%s3 + $0x1e0] sm:$0xff]
      %v919 = vld [vmem:[%s3 + $0x1e8] sm:$0xff]
      %v920 = vld [vmem:[%s3 + $0x1f0] sm:$0xff]
      %v921 = vld [vmem:[%s3 + $0x1f8] sm:$0xff]
      %v922 = vld [vmem:[%s3 + $0x200] sm:$0xff]
      %v923 = vld [vmem:[%s3 + $0x208] sm:$0xff]
      %v924 = vld [vmem:[%s3 + $0x210] sm:$0xff]
      %v925 = vld [vmem:[%s3 + $0x218] sm:$0xff]
      %v926 = vld [vmem:[%s3 + $0x220] sm:$0xff]
      %v927 = vld [vmem:[%s3 + $0x228] sm:$0xff]
      %v928 = vld [vmem:[%s3 + $0x230] sm:$0xff]
      %v929 = vld [vmem:[%s3 + $0x238] sm:$0xff]
      %v930 = vld [vmem:[%s3 + $0x240] sm:$0xff]
      %v931 = vld [vmem:[%s3 + $0x248] sm:$0xff]
      %v932 = vld [vmem:[%s3 + $0x250] sm:$0xff]
      %v933 = vld [vmem:[%s3 + $0x258] sm:$0xff]
      %v934 = vld [vmem:[%s3 + $0x260] sm:$0xff]
      %v935 = vld [vmem:[%s3 + $0x268] sm:$0xff]
      %v936 = vld [vmem:[%s3 + $0x270] sm:$0xff]
      %v937 = vld [vmem:[%s3 + $0x278] sm:$0xff]
      %v938 = vld [vmem:[%s3 + $0x280] sm:$0xff]
      %v939 = vld [vmem:[%s3 + $0x288] sm:$0xff]
      %v940 = vld [vmem:[%s3 + $0x290] sm:$0xff]
      %v941 = vld [vmem:[%s3 + $0x298] sm:$0xff]
      %v942 = vld [vmem:[%s3 + $0x2a0] sm:$0xff]
      %v943 = vld [vmem:[%s3 + $0x2a8] sm:$0xff]
      %v944 = vld [vmem:[%s3 + $0x2b0] sm:$0xff]
      %v945 = vld [vmem:[%s3 + $0x2b8] sm:$0xff]
      %v946 = vld [vmem:[%s3 + $0x2c0] sm:$0xff]
      %v947 = vld [vmem:[%s3 + $0x2c8] sm:$0xff]
      %v948 = vld [vmem:[%s3 + $0x2d0] sm:$0xff]
      %v949 = vld [vmem:[%s3 + $0x2d8] sm:$0xff]
      %v950 = vld [vmem:[%s3 + $0x2e0] sm:$0xff]
      %v951 = vld [vmem:[%s3 + $0x2e8] sm:$0xff]
      %v952 = vld [vmem:[%s3 + $0x2f0] sm:$0xff]
      %v953 = vld [vmem:[%s3 + $0x2f8] sm:$0xff]
      %v954 = vld [vmem:[%s3 + $0x300] sm:$0xff]
      %v955 = vld [vmem:[%s3 + $0x308] sm:$0xff]
      %v956 = vld [vmem:[%s3 + $0x310] sm:$0xff]
      %v957 = vld [vmem:[%s3 + $0x318] sm:$0xff]
      %v958 = vld [vmem:[%s3 + $0x320] sm:$0xff]
      %v959 = vld [vmem:[%s3 + $0x328] sm:$0xff]
      %v960 = vld [vmem:[%s3 + $0x330] sm:$0xff]
      %v961 = vld [vmem:[%s3 + $0x338] sm:$0xff]
      %v962 = vld [vmem:[%s3 + $0x340] sm:$0xff]
      %v963 = vld [vmem:[%s3 + $0x348] sm:$0xff]
      %v964 = vld [vmem:[%s3 + $0x350] sm:$0xff]
      %v965 = vld [vmem:[%s3 + $0x358] sm:$0xff]
      %v966 = vld [vmem:[%s3 + $0x360] sm:$0xff]
      %v967 = vld [vmem:[%s3 + $0x368] sm:$0xff]
      %v968 = vld [vmem:[%s3 + $0x370] sm:$0xff]
      %v969 = vld [vmem:[%s3 + $0x378] sm:$0xff]
      %v970 = vld [vmem:[%s3 + $0x380] sm:$0xff]
      %v971 = vld [vmem:[%s3 + $0x388] sm:$0xff]
      %v972 = vld [vmem:[%s3 + $0x390] sm:$0xff]
      %v973 = vld [vmem:[%s3 + $0x398] sm:$0xff]
      %v974 = vld [vmem:[%s3 + $0x3a0] sm:$0xff]
      %v975 = vld [vmem:[%s3 + $0x3a8] sm:$0xff]
      %v976 = vld [vmem:[%s3 + $0x3b0] sm:$0xff]
      %v977 = vld [vmem:[%s3 + $0x3b8] sm:$0xff]
      %v978 = vld [vmem:[%s3 + $0x3c0] sm:$0xff]
      %v979 = vld [vmem:[%s3 + $0x3c8] sm:$0xff]
      %v980 = vld [vmem:[%s3 + $0x3d0] sm:$0xff]
      %v981 = vld [vmem:[%s3 + $0x3d8] sm:$0xff]
      %v982 = vld [vmem:[%s3 + $0x3e0] sm:$0xff]
      %v983 = vld [vmem:[%s3 + $0x3e8] sm:$0xff]
      %v984 = vld [vmem:[%s3 + $0x3f0] sm:$0xff]
      %v985 = vld [vmem:[%s3 + $0x3f8] sm:$0xff]
      %v986 = vld [vmem:[%s3 + $0x400] sm:$0xff]
      %v987 = vld [vmem:[%s3 + $0x408] sm:$0xff]
      %v988 = vld [vmem:[%s3 + $0x410] sm:$0xff]
      %v989 = vld [vmem:[%s3 + $0x418] sm:$0xff]
      %v990 = vld [vmem:[%s3 + $0x420] sm:$0xff]
      %v991 = vld [vmem:[%s3 + $0x428] sm:$0xff]
      %v992 = vld [vmem:[%s3 + $0x430] sm:$0xff]
      %v993 = vld [vmem:[%s3 + $0x438] sm:$0xff]
      %v994 = vld [vmem:[%s3 + $0x440] sm:$0xff]
      %v995 = vld [vmem:[%s3 + $0x448] sm:$0xff]
      %v996 = vld [vmem:[%s3 + $0x450] sm:$0xff]
      %v997 = vld [vmem:[%s3 + $0x458] sm:$0xff]
      %v998 = vld [vmem:[%s3 + $0x460] sm:$0xff]
      %v999 = vld [vmem:[%s3 + $0x468] sm:$0xff]
      %v1000 = vld [vmem:[%s3 + $0x470] sm:$0xff]
      %v1001 = vld [vmem:[%s3 + $0x478] sm:$0xff]
      %v1002 = vld [vmem:[%s4] sm:$0x1]
      %v1004 = vperm.slane %v1002, 0
      %1006 = vmatpush.msra.mxu0 %v873
      %1007 = vmatpush.msra.mxu0 %v872
      %1008 = vmatpush.msra.mxu0 %v871
      %1009 = vmatpush.msra.mxu0 %v870
      %1010 = vmatpush.msra.mxu0 %v869
      %1011 = vmatpush.msra.mxu0 %v868
      %1012 = vmatpush.msra.mxu0 %v867
      %1013 = vmatpush.msra.mxu0 %v866
      %1014 = vmatpush.msra.mxu0 %v865
      %1015 = vmatpush.msra.mxu0 %v864
      %1016 = vmatpush.msra.mxu0 %v863
      %1017 = vmatpush.msra.mxu0 %v862
      %1018 = vmatpush.msra.mxu0 %v861
      %1019 = vmatpush.msra.mxu0 %v860
      %1020 = vmatpush.msra.mxu0 %v859
      %1021 = vmatpush.msra.mxu0 %v858
      %1022 = vmatmul.f32.gmra.mxu0 %v676
      %v1023 = vpop.f32.mrf.mxu0
      %v1024 = vadd.f32 %v1004, %v1023
      %1025 = vmatmul.f32.gmra.mxu0 %v618
      %v1026 = vpop.f32.mrf.mxu0
      %v1027 = vadd.f32 %v1004, %v1026
      %1028 = vmatmul.f32.gmra.mxu0 %v677
      %v1029 = vpop.f32.mrf.mxu0
      %v1030 = vadd.f32 %v1004, %v1029
      %1031 = vmatmul.f32.gmra.mxu0 %v621
      %v1032 = vpop.f32.mrf.mxu0
      %v1033 = vadd.f32 %v1004, %v1032
      %1034 = vmatmul.f32.gmra.mxu0 %v678
      %v1035 = vpop.f32.mrf.mxu0
      %v1036 = vadd.f32 %v1004, %v1035
      %1037 = vmatmul.f32.gmra.mxu0 %v624
      %v1038 = vpop.f32.mrf.mxu0
      %v1039 = vadd.f32 %v1004, %v1038
      %1040 = vmatmul.f32.gmra.mxu0 %v679
      %v1041 = vpop.f32.mrf.mxu0
      %v1042 = vadd.f32 %v1004, %v1041
      %1043 = vmatmul.f32.gmra.mxu0 %v627
      %v1044 = vpop.f32.mrf.mxu0
      %v1045 = vadd.f32 %v1004, %v1044
      %1046 = vmatmul.f32.gmra.mxu0 %v680
      %v1047 = vpop.f32.mrf.mxu0
      %v1048 = vadd.f32 %v1004, %v1047
      %1049 = vmatmul.f32.gmra.mxu0 %v630
      %v1050 = vpop.f32.mrf.mxu0
      %v1051 = vadd.f32 %v1004, %v1050
      %1052 = vmatmul.f32.gmra.mxu0 %v681
      %v1053 = vpop.f32.mrf.mxu0
      %v1054 = vadd.f32 %v1004, %v1053
      %1055 = vmatmul.f32.gmra.mxu0 %v633
      %v1056 = vpop.f32.mrf.mxu0
      %v1057 = vadd.f32 %v1004, %v1056
      %1058 = vmatmul.f32.gmra.mxu0 %v682
      %v1059 = vpop.f32.mrf.mxu0
      %v1060 = vadd.f32 %v1004, %v1059
      %1061 = vmatmul.f32.gmra.mxu0 %v636
      %v1062 = vpop.f32.mrf.mxu0
      %v1063 = vadd.f32 %v1004, %v1062
      %1064 = vmatmul.f32.gmra.mxu0 %v683
      %v1065 = vpop.f32.mrf.mxu0
      %v1066 = vadd.f32 %v1004, %v1065
      %1067 = vmatmul.f32.gmra.mxu0 %v639
      %v1068 = vpop.f32.mrf.mxu0
      %v1069 = vadd.f32 %v1004, %v1068
      %1070 = vdwg.mxu0
      %1071 = vmatpush.msra.mxu0 %v889
      %1072 = vmatpush.msra.mxu0 %v888
      %1073 = vmatpush.msra.mxu0 %v887
      %1074 = vmatpush.msra.mxu0 %v886
      %1075 = vmatpush.msra.mxu0 %v885
      %1076 = vmatpush.msra.mxu0 %v884
      %1077 = vmatpush.msra.mxu0 %v883
      %1078 = vmatpush.msra.mxu0 %v882
      %1079 = vmatpush.msra.mxu0 %v881
      %1080 = vmatpush.msra.mxu0 %v880
      %1081 = vmatpush.msra.mxu0 %v879
      %1082 = vmatpush.msra.mxu0 %v878
      %1083 = vmatpush.msra.mxu0 %v877
      %1084 = vmatpush.msra.mxu0 %v876
      %1085 = vmatpush.msra.mxu0 %v875
      %1086 = vmatpush.msra.mxu0 %v874
      %1087 = vmatmul.f32.gmra.mxu0 %v715
      %v1088 = vpop.f32.mrf.mxu0
      %v1089 = vadd.f32 %v1024, %v1088
      %1090 = vmatmul.f32.gmra.mxu0 %v717
      %v1091 = vpop.f32.mrf.mxu0
      %v1092 = vadd.f32 %v1027, %v1091
      %1093 = vmatmul.f32.gmra.mxu0 %v720
      %v1094 = vpop.f32.mrf.mxu0
      %v1095 = vadd.f32 %v1030, %v1094
      %1096 = vmatmul.f32.gmra.mxu0 %v722
      %v1097 = vpop.f32.mrf.mxu0
      %v1098 = vadd.f32 %v1033, %v1097
      %1099 = vmatmul.f32.gmra.mxu0 %v725
      %v1100 = vpop.f32.mrf.mxu0
      %v1101 = vadd.f32 %v1036, %v1100
      %1102 = vmatmul.f32.gmra.mxu0 %v727
      %v1103 = vpop.f32.mrf.mxu0
      %v1104 = vadd.f32 %v1039, %v1103
      %1105 = vmatmul.f32.gmra.mxu0 %v730
      %v1106 = vpop.f32.mrf.mxu0
      %v1107 = vadd.f32 %v1042, %v1106
      %1108 = vmatmul.f32.gmra.mxu0 %v732
      %v1109 = vpop.f32.mrf.mxu0
      %v1110 = vadd.f32 %v1045, %v1109
      %1111 = vmatmul.f32.gmra.mxu0 %v735
      %v1112 = vpop.f32.mrf.mxu0
      %v1113 = vadd.f32 %v1048, %v1112
      %1114 = vmatmul.f32.gmra.mxu0 %v737
      %v1115 = vpop.f32.mrf.mxu0
      %v1116 = vadd.f32 %v1051, %v1115
      %1117 = vmatmul.f32.gmra.mxu0 %v740
      %v1118 = vpop.f32.mrf.mxu0
      %v1119 = vadd.f32 %v1054, %v1118
      %1120 = vmatmul.f32.gmra.mxu0 %v742
      %v1121 = vpop.f32.mrf.mxu0
      %v1122 = vadd.f32 %v1057, %v1121
      %1123 = vmatmul.f32.gmra.mxu0 %v745
      %v1124 = vpop.f32.mrf.mxu0
      %v1125 = vadd.f32 %v1060, %v1124
      %1126 = vmatmul.f32.gmra.mxu0 %v747
      %v1127 = vpop.f32.mrf.mxu0
      %v1128 = vadd.f32 %v1063, %v1127
      %1129 = vmatmul.f32.gmra.mxu0 %v750
      %v1130 = vpop.f32.mrf.mxu0
      %v1131 = vadd.f32 %v1066, %v1130
      %1132 = vmatmul.f32.gmra.mxu0 %v752
      %v1133 = vpop.f32.mrf.mxu0
      %v1134 = vadd.f32 %v1069, %v1133
      %1135 = vdwg.mxu0
      %1136 = vmatpush.msra.mxu0 %v905
      %1137 = vmatpush.msra.mxu0 %v904
      %1138 = vmatpush.msra.mxu0 %v903
      %1139 = vmatpush.msra.mxu0 %v902
      %1140 = vmatpush.msra.mxu0 %v901
      %1141 = vmatpush.msra.mxu0 %v900
      %1142 = vmatpush.msra.mxu0 %v899
      %1143 = vmatpush.msra.mxu0 %v898
      %1144 = vmatpush.msra.mxu0 %v897
      %1145 = vmatpush.msra.mxu0 %v896
      %1146 = vmatpush.msra.mxu0 %v895
      %1147 = vmatpush.msra.mxu0 %v894
      %1148 = vmatpush.msra.mxu0 %v893
      %1149 = vmatpush.msra.mxu0 %v892
      %1150 = vmatpush.msra.mxu0 %v891
      %1151 = vmatpush.msra.mxu0 %v890
      %1152 = vmatmul.f32.gmra.mxu0 %v772
      %v1153 = vpop.f32.mrf.mxu0
      %v1154 = vadd.f32 %v1089, %v1153
      %1155 = vmatmul.f32.gmra.mxu0 %v774
      %v1156 = vpop.f32.mrf.mxu0
      %v1157 = vadd.f32 %v1092, %v1156
      %1158 = vmatmul.f32.gmra.mxu0 %v777
      %v1159 = vpop.f32.mrf.mxu0
      %v1160 = vadd.f32 %v1095, %v1159
      %1161 = vmatmul.f32.gmra.mxu0 %v779
      %v1162 = vpop.f32.mrf.mxu0
      %v1163 = vadd.f32 %v1098, %v1162
      %1164 = vmatmul.f32.gmra.mxu0 %v782
      %v1165 = vpop.f32.mrf.mxu0
      %v1166 = vadd.f32 %v1101, %v1165
      %1167 = vmatmul.f32.gmra.mxu0 %v784
      %v1168 = vpop.f32.mrf.mxu0
      %v1169 = vadd.f32 %v1104, %v1168
      %1170 = vmatmul.f32.gmra.mxu0 %v787
      %v1171 = vpop.f32.mrf.mxu0
      %v1172 = vadd.f32 %v1107, %v1171
      %1173 = vmatmul.f32.gmra.mxu0 %v789
      %v1174 = vpop.f32.mrf.mxu0
      %v1175 = vadd.f32 %v1110, %v1174
      %1176 = vmatmul.f32.gmra.mxu0 %v792
      %v1177 = vpop.f32.mrf.mxu0
      %v1178 = vadd.f32 %v1113, %v1177
      %1179 = vmatmul.f32.gmra.mxu0 %v794
      %v1180 = vpop.f32.mrf.mxu0
      %v1181 = vadd.f32 %v1116, %v1180
      %1182 = vmatmul.f32.gmra.mxu0 %v797
      %v1183 = vpop.f32.mrf.mxu0
      %v1184 = vadd.f32 %v1119, %v1183
      %1185 = vmatmul.f32.gmra.mxu0 %v799
      %v1186 = vpop.f32.mrf.mxu0
      %v1187 = vadd.f32 %v1122, %v1186
      %1188 = vmatmul.f32.gmra.mxu0 %v802
      %v1189 = vpop.f32.mrf.mxu0
      %v1190 = vadd.f32 %v1125, %v1189
      %1191 = vmatmul.f32.gmra.mxu0 %v804
      %v1192 = vpop.f32.mrf.mxu0
      %v1193 = vadd.f32 %v1128, %v1192
      %1194 = vmatmul.f32.gmra.mxu0 %v807
      %v1195 = vpop.f32.mrf.mxu0
      %v1196 = vadd.f32 %v1131, %v1195
      %1197 = vmatmul.f32.gmra.mxu0 %v809
      %v1198 = vpop.f32.mrf.mxu0
      %v1199 = vadd.f32 %v1134, %v1198
      %1200 = vdwg.mxu0
      %1201 = vmatpush.msra.mxu0 %v921
      %1202 = vmatpush.msra.mxu0 %v920
      %1203 = vmatpush.msra.mxu0 %v919
      %1204 = vmatpush.msra.mxu0 %v918
      %1205 = vmatpush.msra.mxu0 %v917
      %1206 = vmatpush.msra.mxu0 %v916
      %1207 = vmatpush.msra.mxu0 %v915
      %1208 = vmatpush.msra.mxu0 %v914
      %1209 = vmatpush.msra.mxu0 %v913
      %1210 = vmatpush.msra.mxu0 %v912
      %1211 = vmatpush.msra.mxu0 %v911
      %1212 = vmatpush.msra.mxu0 %v910
      %1213 = vmatpush.msra.mxu0 %v909
      %1214 = vmatpush.msra.mxu0 %v908
      %1215 = vmatpush.msra.mxu0 %v907
      %1216 = vmatpush.msra.mxu0 %v906
      %1217 = vmatmul.f32.gmra.mxu0 %v677
      %v1218 = vpop.f32.mrf.mxu0
      %v1219 = vadd.f32 %v1154, %v1218
      %1220 = vmatmul.f32.gmra.mxu0 %v621
      %v1221 = vpop.f32.mrf.mxu0
      %v1222 = vadd.f32 %v1157, %v1221
      %1223 = vmatmul.f32.gmra.mxu0 %v678
      %v1224 = vpop.f32.mrf.mxu0
      %v1225 = vadd.f32 %v1160, %v1224
      %1226 = vmatmul.f32.gmra.mxu0 %v624
      %v1227 = vpop.f32.mrf.mxu0
      %v1228 = vadd.f32 %v1163, %v1227
      %1229 = vmatmul.f32.gmra.mxu0 %v679
      %v1230 = vpop.f32.mrf.mxu0
      %v1231 = vadd.f32 %v1166, %v1230
      %1232 = vmatmul.f32.gmra.mxu0 %v627
      %v1233 = vpop.f32.mrf.mxu0
      %v1234 = vadd.f32 %v1169, %v1233
      %1235 = vmatmul.f32.gmra.mxu0 %v680
      %v1236 = vpop.f32.mrf.mxu0
      %v1237 = vadd.f32 %v1172, %v1236
      %1238 = vmatmul.f32.gmra.mxu0 %v630
      %v1239 = vpop.f32.mrf.mxu0
      %v1240 = vadd.f32 %v1175, %v1239
      %1241 = vmatmul.f32.gmra.mxu0 %v681
      %v1242 = vpop.f32.mrf.mxu0
      %v1243 = vadd.f32 %v1178, %v1242
      %1244 = vmatmul.f32.gmra.mxu0 %v633
      %v1245 = vpop.f32.mrf.mxu0
      %v1246 = vadd.f32 %v1181, %v1245
      %1247 = vmatmul.f32.gmra.mxu0 %v682
      %v1248 = vpop.f32.mrf.mxu0
      %v1249 = vadd.f32 %v1184, %v1248
      %1250 = vmatmul.f32.gmra.mxu0 %v636
      %v1251 = vpop.f32.mrf.mxu0
      %v1252 = vadd.f32 %v1187, %v1251
      %1253 = vmatmul.f32.gmra.mxu0 %v683
      %v1254 = vpop.f32.mrf.mxu0
      %v1255 = vadd.f32 %v1190, %v1254
      %1256 = vmatmul.f32.gmra.mxu0 %v639
      %v1257 = vpop.f32.mrf.mxu0
      %v1258 = vadd.f32 %v1193, %v1257
      %1259 = vmatmul.f32.gmra.mxu0 %v684
      %v1260 = vpop.f32.mrf.mxu0
      %v1261 = vadd.f32 %v1196, %v1260
      %1262 = vmatmul.f32.gmra.mxu0 %v642
      %v1263 = vpop.f32.mrf.mxu0
      %v1264 = vadd.f32 %v1199, %v1263
      %1265 = vdwg.mxu0
      %1266 = vmatpush.msra.mxu0 %v937
      %1267 = vmatpush.msra.mxu0 %v936
      %1268 = vmatpush.msra.mxu0 %v935
      %1269 = vmatpush.msra.mxu0 %v934
      %1270 = vmatpush.msra.mxu0 %v933
      %1271 = vmatpush.msra.mxu0 %v932
      %1272 = vmatpush.msra.mxu0 %v931
      %1273 = vmatpush.msra.mxu0 %v930
      %1274 = vmatpush.msra.mxu0 %v929
      %1275 = vmatpush.msra.mxu0 %v928
      %1276 = vmatpush.msra.mxu0 %v927
      %1277 = vmatpush.msra.mxu0 %v926
      %1278 = vmatpush.msra.mxu0 %v925
      %1279 = vmatpush.msra.mxu0 %v924
      %1280 = vmatpush.msra.mxu0 %v923
      %1281 = vmatpush.msra.mxu0 %v922
      %1282 = vmatmul.f32.gmra.mxu0 %v720
      %v1283 = vpop.f32.mrf.mxu0
      %v1284 = vadd.f32 %v1219, %v1283
      %1285 = vmatmul.f32.gmra.mxu0 %v722
      %v1286 = vpop.f32.mrf.mxu0
      %v1287 = vadd.f32 %v1222, %v1286
      %1288 = vmatmul.f32.gmra.mxu0 %v725
      %v1289 = vpop.f32.mrf.mxu0
      %v1290 = vadd.f32 %v1225, %v1289
      %1291 = vmatmul.f32.gmra.mxu0 %v727
      %v1292 = vpop.f32.mrf.mxu0
      %v1293 = vadd.f32 %v1228, %v1292
      %1294 = vmatmul.f32.gmra.mxu0 %v730
      %v1295 = vpop.f32.mrf.mxu0
      %v1296 = vadd.f32 %v1231, %v1295
      %1297 = vmatmul.f32.gmra.mxu0 %v732
      %v1298 = vpop.f32.mrf.mxu0
      %v1299 = vadd.f32 %v1234, %v1298
      %1300 = vmatmul.f32.gmra.mxu0 %v735
      %v1301 = vpop.f32.mrf.mxu0
      %v1302 = vadd.f32 %v1237, %v1301
      %1303 = vmatmul.f32.gmra.mxu0 %v737
      %v1304 = vpop.f32.mrf.mxu0
      %v1305 = vadd.f32 %v1240, %v1304
      %1306 = vmatmul.f32.gmra.mxu0 %v740
      %v1307 = vpop.f32.mrf.mxu0
      %v1308 = vadd.f32 %v1243, %v1307
      %1309 = vmatmul.f32.gmra.mxu0 %v742
      %v1310 = vpop.f32.mrf.mxu0
      %v1311 = vadd.f32 %v1246, %v1310
      %1312 = vmatmul.f32.gmra.mxu0 %v745
      %v1313 = vpop.f32.mrf.mxu0
      %v1314 = vadd.f32 %v1249, %v1313
      %1315 = vmatmul.f32.gmra.mxu0 %v747
      %v1316 = vpop.f32.mrf.mxu0
      %v1317 = vadd.f32 %v1252, %v1316
      %1318 = vmatmul.f32.gmra.mxu0 %v750
      %v1319 = vpop.f32.mrf.mxu0
      %v1320 = vadd.f32 %v1255, %v1319
      %1321 = vmatmul.f32.gmra.mxu0 %v752
      %v1322 = vpop.f32.mrf.mxu0
      %v1323 = vadd.f32 %v1258, %v1322
      %1324 = vmatmul.f32.gmra.mxu0 %v830
      %v1325 = vpop.f32.mrf.mxu0
      %v1326 = vadd.f32 %v1261, %v1325
      %1327 = vmatmul.f32.gmra.mxu0 %v832
      %v1328 = vpop.f32.mrf.mxu0
      %v1329 = vadd.f32 %v1264, %v1328
      %1330 = vdwg.mxu0
      %1331 = vmatpush.msra.mxu0 %v953
      %1332 = vmatpush.msra.mxu0 %v952
      %1333 = vmatpush.msra.mxu0 %v951
      %1334 = vmatpush.msra.mxu0 %v950
      %1335 = vmatpush.msra.mxu0 %v949
      %1336 = vmatpush.msra.mxu0 %v948
      %1337 = vmatpush.msra.mxu0 %v947
      %1338 = vmatpush.msra.mxu0 %v946
      %1339 = vmatpush.msra.mxu0 %v945
      %1340 = vmatpush.msra.mxu0 %v944
      %1341 = vmatpush.msra.mxu0 %v943
      %1342 = vmatpush.msra.mxu0 %v942
      %1343 = vmatpush.msra.mxu0 %v941
      %1344 = vmatpush.msra.mxu0 %v940
      %1345 = vmatpush.msra.mxu0 %v939
      %1346 = vmatpush.msra.mxu0 %v938
      %1347 = vmatmul.f32.gmra.mxu0 %v777
      %v1348 = vpop.f32.mrf.mxu0
      %v1349 = vadd.f32 %v1284, %v1348
      %1350 = vmatmul.f32.gmra.mxu0 %v779
      %v1351 = vpop.f32.mrf.mxu0
      %v1352 = vadd.f32 %v1287, %v1351
      %1353 = vmatmul.f32.gmra.mxu0 %v782
      %v1354 = vpop.f32.mrf.mxu0
      %v1355 = vadd.f32 %v1290, %v1354
      %1356 = vmatmul.f32.gmra.mxu0 %v784
      %v1357 = vpop.f32.mrf.mxu0
      %v1358 = vadd.f32 %v1293, %v1357
      %1359 = vmatmul.f32.gmra.mxu0 %v787
      %v1360 = vpop.f32.mrf.mxu0
      %v1361 = vadd.f32 %v1296, %v1360
      %1362 = vmatmul.f32.gmra.mxu0 %v789
      %v1363 = vpop.f32.mrf.mxu0
      %v1364 = vadd.f32 %v1299, %v1363
      %1365 = vmatmul.f32.gmra.mxu0 %v792
      %v1366 = vpop.f32.mrf.mxu0
      %v1367 = vadd.f32 %v1302, %v1366
      %1368 = vmatmul.f32.gmra.mxu0 %v794
      %v1369 = vpop.f32.mrf.mxu0
      %v1370 = vadd.f32 %v1305, %v1369
      %1371 = vmatmul.f32.gmra.mxu0 %v797
      %v1372 = vpop.f32.mrf.mxu0
      %v1373 = vadd.f32 %v1308, %v1372
      %1374 = vmatmul.f32.gmra.mxu0 %v799
      %v1375 = vpop.f32.mrf.mxu0
      %v1376 = vadd.f32 %v1311, %v1375
      %1377 = vmatmul.f32.gmra.mxu0 %v802
      %v1378 = vpop.f32.mrf.mxu0
      %v1379 = vadd.f32 %v1314, %v1378
      %1380 = vmatmul.f32.gmra.mxu0 %v804
      %v1381 = vpop.f32.mrf.mxu0
      %v1382 = vadd.f32 %v1317, %v1381
      %1383 = vmatmul.f32.gmra.mxu0 %v807
      %v1384 = vpop.f32.mrf.mxu0
      %v1385 = vadd.f32 %v1320, %v1384
      %1386 = vmatmul.f32.gmra.mxu0 %v809
      %v1387 = vpop.f32.mrf.mxu0
      %v1388 = vadd.f32 %v1323, %v1387
      %1389 = vmatmul.f32.gmra.mxu0 %v837
      %v1390 = vpop.f32.mrf.mxu0
      %v1391 = vadd.f32 %v1326, %v1390
      %1392 = vmatmul.f32.gmra.mxu0 %v839
      %v1393 = vpop.f32.mrf.mxu0
      %v1394 = vadd.f32 %v1329, %v1393
      %1395 = vdwg.mxu0
      %1396 = vmatpush.msra.mxu0 %v969
      %1397 = vmatpush.msra.mxu0 %v968
      %1398 = vmatpush.msra.mxu0 %v967
      %1399 = vmatpush.msra.mxu0 %v966
      %1400 = vmatpush.msra.mxu0 %v965
      %1401 = vmatpush.msra.mxu0 %v964
      %1402 = vmatpush.msra.mxu0 %v963
      %1403 = vmatpush.msra.mxu0 %v962
      %1404 = vmatpush.msra.mxu0 %v961
      %1405 = vmatpush.msra.mxu0 %v960
      %1406 = vmatpush.msra.mxu0 %v959
      %1407 = vmatpush.msra.mxu0 %v958
      %1408 = vmatpush.msra.mxu0 %v957
      %1409 = vmatpush.msra.mxu0 %v956
      %1410 = vmatpush.msra.mxu0 %v955
      %1411 = vmatpush.msra.mxu0 %v954
      %1412 = vmatmul.f32.gmra.mxu0 %v678
      %v1413 = vpop.f32.mrf.mxu0
      %v1414 = vadd.f32 %v1349, %v1413
      %1415 = vmatmul.f32.gmra.mxu0 %v624
      %v1416 = vpop.f32.mrf.mxu0
      %v1417 = vadd.f32 %v1352, %v1416
      %1418 = vmatmul.f32.gmra.mxu0 %v679
      %v1419 = vpop.f32.mrf.mxu0
      %v1420 = vadd.f32 %v1355, %v1419
      %1421 = vmatmul.f32.gmra.mxu0 %v627
      %v1422 = vpop.f32.mrf.mxu0
      %v1423 = vadd.f32 %v1358, %v1422
      %1424 = vmatmul.f32.gmra.mxu0 %v680
      %v1425 = vpop.f32.mrf.mxu0
      %v1426 = vadd.f32 %v1361, %v1425
      %1427 = vmatmul.f32.gmra.mxu0 %v630
      %v1428 = vpop.f32.mrf.mxu0
      %v1429 = vadd.f32 %v1364, %v1428
      %1430 = vmatmul.f32.gmra.mxu0 %v681
      %v1431 = vpop.f32.mrf.mxu0
      %v1432 = vadd.f32 %v1367, %v1431
      %1433 = vmatmul.f32.gmra.mxu0 %v633
      %v1434 = vpop.f32.mrf.mxu0
      %v1435 = vadd.f32 %v1370, %v1434
      %1436 = vmatmul.f32.gmra.mxu0 %v682
      %v1437 = vpop.f32.mrf.mxu0
      %v1438 = vadd.f32 %v1373, %v1437
      %1439 = vmatmul.f32.gmra.mxu0 %v636
      %v1440 = vpop.f32.mrf.mxu0
      %v1441 = vadd.f32 %v1376, %v1440
      %1442 = vmatmul.f32.gmra.mxu0 %v683
      %v1443 = vpop.f32.mrf.mxu0
      %v1444 = vadd.f32 %v1379, %v1443
      %1445 = vmatmul.f32.gmra.mxu0 %v639
      %v1446 = vpop.f32.mrf.mxu0
      %v1447 = vadd.f32 %v1382, %v1446
      %1448 = vmatmul.f32.gmra.mxu0 %v684
      %v1449 = vpop.f32.mrf.mxu0
      %v1450 = vadd.f32 %v1385, %v1449
      %1451 = vmatmul.f32.gmra.mxu0 %v642
      %v1452 = vpop.f32.mrf.mxu0
      %v1453 = vadd.f32 %v1388, %v1452
      %1454 = vmatmul.f32.gmra.mxu0 %v685
      %v1455 = vpop.f32.mrf.mxu0
      %v1456 = vadd.f32 %v1391, %v1455
      %1457 = vmatmul.f32.gmra.mxu0 %v645
      %v1458 = vpop.f32.mrf.mxu0
      %v1459 = vadd.f32 %v1394, %v1458
      %1460 = vdwg.mxu0
      %1461 = vmatpush.msra.mxu0 %v985
      %1462 = vmatpush.msra.mxu0 %v984
      %1463 = vmatpush.msra.mxu0 %v983
      %1464 = vmatpush.msra.mxu0 %v982
      %1465 = vmatpush.msra.mxu0 %v981
      %1466 = vmatpush.msra.mxu0 %v980
      %1467 = vmatpush.msra.mxu0 %v979
      %1468 = vmatpush.msra.mxu0 %v978
      %1469 = vmatpush.msra.mxu0 %v977
      %1470 = vmatpush.msra.mxu0 %v976
      %1471 = vmatpush.msra.mxu0 %v975
      %1472 = vmatpush.msra.mxu0 %v974
      %1473 = vmatpush.msra.mxu0 %v973
      %1474 = vmatpush.msra.mxu0 %v972
      %1475 = vmatpush.msra.mxu0 %v971
      %1476 = vmatpush.msra.mxu0 %v970
      %1477 = vmatmul.f32.gmra.mxu0 %v725
      %v1478 = vpop.f32.mrf.mxu0
      %v1479 = vadd.f32 %v1414, %v1478
      %1480 = vmatmul.f32.gmra.mxu0 %v727
      %v1481 = vpop.f32.mrf.mxu0
      %v1482 = vadd.f32 %v1417, %v1481
      %1483 = vmatmul.f32.gmra.mxu0 %v730
      %v1484 = vpop.f32.mrf.mxu0
      %v1485 = vadd.f32 %v1420, %v1484
      %1486 = vmatmul.f32.gmra.mxu0 %v732
      %v1487 = vpop.f32.mrf.mxu0
      %v1488 = vadd.f32 %v1423, %v1487
      %1489 = vmatmul.f32.gmra.mxu0 %v735
      %v1490 = vpop.f32.mrf.mxu0
      %v1491 = vadd.f32 %v1426, %v1490
      %1492 = vmatmul.f32.gmra.mxu0 %v737
      %v1493 = vpop.f32.mrf.mxu0
      %v1494 = vadd.f32 %v1429, %v1493
      %1495 = vmatmul.f32.gmra.mxu0 %v740
      %v1496 = vpop.f32.mrf.mxu0
      %v1497 = vadd.f32 %v1432, %v1496
      %1498 = vmatmul.f32.gmra.mxu0 %v742
      %v1499 = vpop.f32.mrf.mxu0
      %v1500 = vadd.f32 %v1435, %v1499
      %1501 = vmatmul.f32.gmra.mxu0 %v745
      %v1502 = vpop.f32.mrf.mxu0
      %v1503 = vadd.f32 %v1438, %v1502
      %1504 = vmatmul.f32.gmra.mxu0 %v747
      %v1505 = vpop.f32.mrf.mxu0
      %v1506 = vadd.f32 %v1441, %v1505
      %1507 = vmatmul.f32.gmra.mxu0 %v750
      %v1508 = vpop.f32.mrf.mxu0
      %v1509 = vadd.f32 %v1444, %v1508
      %1510 = vmatmul.f32.gmra.mxu0 %v752
      %v1511 = vpop.f32.mrf.mxu0
      %v1512 = vadd.f32 %v1447, %v1511
      %1513 = vmatmul.f32.gmra.mxu0 %v830
      %v1514 = vpop.f32.mrf.mxu0
      %v1515 = vadd.f32 %v1450, %v1514
      %1516 = vmatmul.f32.gmra.mxu0 %v832
      %v1517 = vpop.f32.mrf.mxu0
      %v1518 = vadd.f32 %v1453, %v1517
      %1519 = vmatmul.f32.gmra.mxu0 %v846
      %v1520 = vpop.f32.mrf.mxu0
      %v1521 = vadd.f32 %v1456, %v1520
      %1522 = vmatmul.f32.gmra.mxu0 %v848
      %v1523 = vpop.f32.mrf.mxu0
      %v1524 = vadd.f32 %v1459, %v1523
      %1525 = vdwg.mxu0
      %1526 = vmatpush.msra.mxu0 %v1001
      %1527 = vmatpush.msra.mxu0 %v1000
      %1528 = vmatpush.msra.mxu0 %v999
      %1529 = vmatpush.msra.mxu0 %v998
      %1530 = vmatpush.msra.mxu0 %v997
      %1531 = vmatpush.msra.mxu0 %v996
      %1532 = vmatpush.msra.mxu0 %v995
      %1533 = vmatpush.msra.mxu0 %v994
      %1534 = vmatpush.msra.mxu0 %v993
      %1535 = vmatpush.msra.mxu0 %v992
      %1536 = vmatpush.msra.mxu0 %v991
      %1537 = vmatpush.msra.mxu0 %v990
      %1538 = vmatpush.msra.mxu0 %v989
      %1539 = vmatpush.msra.mxu0 %v988
      %1540 = vmatpush.msra.mxu0 %v987
      %1541 = vmatpush.msra.mxu0 %v986
      %1542 = vmatmul.f32.gmra.mxu0 %v782
      %v1543 = vpop.f32.mrf.mxu0
      %v1544 = vadd.f32 %v1479, %v1543
      %1545 = vmatmul.f32.gmra.mxu0 %v784
      %v1546 = vpop.f32.mrf.mxu0
      %v1547 = vadd.f32 %v1482, %v1546
      %1548 = vmatmul.f32.gmra.mxu0 %v787
      %v1549 = vpop.f32.mrf.mxu0
      %v1550 = vadd.f32 %v1485, %v1549
      %1551 = vmatmul.f32.gmra.mxu0 %v789
      %v1552 = vpop.f32.mrf.mxu0
      %v1553 = vadd.f32 %v1488, %v1552
      %1554 = vmatmul.f32.gmra.mxu0 %v792
      %v1555 = vpop.f32.mrf.mxu0
      %v1556 = vadd.f32 %v1491, %v1555
      %1557 = vmatmul.f32.gmra.mxu0 %v794
      %v1558 = vpop.f32.mrf.mxu0
      %v1559 = vadd.f32 %v1494, %v1558
      %1560 = vmatmul.f32.gmra.mxu0 %v797
      %v1561 = vpop.f32.mrf.mxu0
      %v1562 = vadd.f32 %v1497, %v1561
      %1563 = vmatmul.f32.gmra.mxu0 %v799
      %v1564 = vpop.f32.mrf.mxu0
      %v1565 = vadd.f32 %v1500, %v1564
      %1566 = vmatmul.f32.gmra.mxu0 %v802
      %v1567 = vpop.f32.mrf.mxu0
      %v1568 = vadd.f32 %v1503, %v1567
      %1569 = vmatmul.f32.gmra.mxu0 %v804
      %v1570 = vpop.f32.mrf.mxu0
      %v1571 = vadd.f32 %v1506, %v1570
      %1572 = vmatmul.f32.gmra.mxu0 %v807
      %v1573 = vpop.f32.mrf.mxu0
      %v1574 = vadd.f32 %v1509, %v1573
      %1575 = vmatmul.f32.gmra.mxu0 %v809
      %v1576 = vpop.f32.mrf.mxu0
      %v1577 = vadd.f32 %v1512, %v1576
      %1578 = vmatmul.f32.gmra.mxu0 %v837
      %v1579 = vpop.f32.mrf.mxu0
      %v1580 = vadd.f32 %v1515, %v1579
      %1581 = vmatmul.f32.gmra.mxu0 %v839
      %v1582 = vpop.f32.mrf.mxu0
      %v1583 = vadd.f32 %v1518, %v1582
      %1584 = vmatmul.f32.gmra.mxu0 %v853
      %v1585 = vpop.f32.mrf.mxu0
      %v1586 = vadd.f32 %v1521, %v1585
      %1587 = vmatmul.f32.gmra.mxu0 %v855
      %v1588 = vpop.f32.mrf.mxu0
      %v1589 = vadd.f32 %v1524, %v1588
      %1590 = vdwg.mxu0
      %1591 = vst [vmem:[%s485] sm:$0xff] %v1544
      %1592 = vst [vmem:[%s485 + $0x8] sm:$0xff] %v1547
      %1593 = vst [vmem:[%s485 + $0x10] sm:$0xff] %v1550
      %1594 = vst [vmem:[%s485 + $0x18] sm:$0xff] %v1553
      %1595 = vst [vmem:[%s485 + $0x20] sm:$0xff] %v1556
      %1596 = vst [vmem:[%s485 + $0x28] sm:$0xff] %v1559
      %1597 = vst [vmem:[%s485 + $0x30] sm:$0xff] %v1562
      %1598 = vst [vmem:[%s485 + $0x38] sm:$0xff] %v1565
      %1599 = vst [vmem:[%s485 + $0x40] sm:$0xff] %v1568
      %1600 = vst [vmem:[%s485 + $0x48] sm:$0xff] %v1571
      %1601 = vst [vmem:[%s485 + $0x50] sm:$0xff] %v1574
      %1602 = vst [vmem:[%s485 + $0x58] sm:$0xff] %v1577
      %1603 = vst [vmem:[%s485 + $0x60] sm:$0xff] %v1580
      %1604 = vst [vmem:[%s485 + $0x68] sm:$0xff] %v1583
      %1605 = vst [vmem:[%s485 + $0x70] sm:$0xff] %v1586
      %1606 = vst [vmem:[%s485 + $0x78] sm:$0xff] %v1589
      %v1607 = vadd.f32 %v1544, %v1547
      %v1608 = vadd.f32 %v1607, %v1550
      %v1609 = vadd.f32 %v1608, %v1553
      %v1610 = vadd.f32 %v1609, %v1556
      %v1611 = vadd.f32 %v1610, %v1559
      %v1612 = vadd.f32 %v1611, %v1562
      %v1613 = vadd.f32 %v1612, %v1565
      %v1614 = vadd.f32 %v1613, %v1568
      %v1615 = vadd.f32 %v1614, %v1571
      %v1616 = vadd.f32 %v1615, %v1574
      %v1617 = vadd.f32 %v1616, %v1577
      %v1618 = vadd.f32 %v1617, %v1580
      %v1619 = vadd.f32 %v1618, %v1583
      %v1620 = vadd.f32 %v1619, %v1586
      %v1621 = vadd.f32 %v1620, %v1589
      %v1622 = vrot.slane %v1621, 4
      %v1623 = vadd.f32 %v1621, %v1622
      %v1624 = vrot.slane %v1623, 2
      %v1625 = vadd.f32 %v1623, %v1624
      %v1626 = vrot.slane %v1625, 1
      %v1627 = vadd.f32 %v1625, %v1626
      %v1628 = vmul.f32 %v1544, %v1544
      %v1629 = vmul.f32 %v1547, %v1547
      %v1630 = vmul.f32 %v1550, %v1550
      %v1631 = vmul.f32 %v1553, %v1553
      %v1632 = vmul.f32 %v1556, %v1556
      %v1633 = vmul.f32 %v1559, %v1559
      %v1634 = vmul.f32 %v1562, %v1562
      %v1635 = vmul.f32 %v1565, %v1565
      %v1636 = vmul.f32 %v1568, %v1568
      %v1637 = vmul.f32 %v1571, %v1571
      %v1638 = vmul.f32 %v1574, %v1574
      %v1639 = vmul.f32 %v1577, %v1577
      %v1640 = vmul.f32 %v1580, %v1580
      %v1641 = vmul.f32 %v1583, %v1583
      %v1642 = vmul.f32 %v1586, %v1586
      %v1643 = vmul.f32 %v1589, %v1589
      %v1644 = vadd.f32 %v1628, %v1629
      %v1645 = vadd.f32 %v1644, %v1630
      %v1646 = vadd.f32 %v1645, %v1631
      %v1647 = vadd.f32 %v1646, %v1632
      %v1648 = vadd.f32 %v1647, %v1633
      %v1649 = vadd.f32 %v1648, %v1634
      %v1650 = vadd.f32 %v1649, %v1635
      %v1651 = vadd.f32 %v1650, %v1636
      %v1652 = vadd.f32 %v1651, %v1637
      %v1653 = vadd.f32 %v1652, %v1638
      %v1654 = vadd.f32 %v1653, %v1639
      %v1655 = vadd.f32 %v1654, %v1640
      %v1656 = vadd.f32 %v1655, %v1641
      %v1657 = vadd.f32 %v1656, %v1642
      %v1658 = vadd.f32 %v1657, %v1643
      %v1659 = vrot.slane %v1658, 4
      %v1660 = vadd.f32 %v1658, %v1659
      %v1661 = vrot.slane %v1660, 2
      %v1662 = vadd.f32 %v1660, %v1661
      %v1663 = vrot.slane %v1662, 1
      %v1664 = vadd.f32 %v1662, %v1663
      %v1665 = vsel %vm615, %v1627, %v1664
      %vm1666 = vcmask 1041408
      %v1667 = vsel %vm1666, %v1665, 0.0
      %1668 = vst [vmem:[%s494] sm:$0xff] %v1667
      %s1669 = smul.u32 8, %s25
      %p1670 = scmp.lt.s32.totalorder %s24, 1
      %s1671 = scalar_select %p1670, %s24, 1
      %p1672 = scmp.lt.s32.totalorder %s1669, 15
      %s1673 = scalar_select %p1672, %s1669, 15
      %s1674 = smul.addr %s1673, 2
      %s1675 = smul.addr %s1671, 32
      %s1676 = sadd.s32 %s1674, %s1675
      %s1677 = smul.addr %s1676, 8
      %s1678 = scalar_lea.vmem %s7, %s1677
      %p1679 = scmp.lt.s32.totalorder %s24, 1
      %s1680 = scalar_select %p1679, %s24, 1
      %p1681 = scmp.lt.s32.totalorder %s25, 1
      %s1682 = scalar_select %p1681, %s25, 1
      %s1683 = smul.addr %s1680, 2
      %s1684 = sadd.s32 %s1682, %s1683
      %s1685 = smul.addr %s1684, 8
      %s1686 = scalar_lea.vmem %s8, %s1685
      // Predicated region
      $region49: #{double_conv.4} parent=47 // pred_check
        %p1687 = pneg %p236
      $region50: #{double_conv.4} parent=47 // pred_check_branch
        %1689 = sbr.rel (%p1687) target = $region52
      $region51: #{double_conv.4} parent=47 // pred_region
        %s1690 = smul.u32 8, %s25
      $region52: #{double_conv.4} parent=47 // pred_fallthru
        _
      // Predicated region
      $region53: #{double_conv.4} parent=47 // pred_check
        %p1691 = pneg %p264
      $region54: #{double_conv.4} parent=47 // pred_check_branch
        %1693 = sbr.rel (%p1691) target = $region56
      $region55: #{double_conv.4} parent=47 // pred_region
        _
      $region56: #{double_conv.4} parent=47 // pred_fallthru
        _
    $region48: #{double_conv.4} parent=5 // pred_fallthru
      _
    %p1694 = scmp.le.s32.totalorder 2, %s15
    // Predicated region
    $region57: #{double_conv.4} parent=5 // pred_check
      %p1695 = pneg %p1694
    $region58: #{double_conv.4} parent=5 // pred_check_branch
      %1697 = sbr.rel (%p1695) target = $region60
    $region59: #{double_conv.4} parent=5 // pred_region
      %s1698 = ssub.s32 %s15, 2
      // Predicated region
      $region61: #{double_conv.4} parent=59 // pred_check
        %p1699 = pneg %p242
      $region62: #{double_conv.4} parent=59 // pred_check_branch
        %1701 = sbr.rel (%p1699) target = $region64
      $region63: #{double_conv.4} parent=59 // pred_region
        %s1702 = smul.u32 8, %s27
        %p1703 = scmp.lt.s32.totalorder %s26, 1
        %s1704 = scalar_select %p1703, %s26, 1
        %p1705 = scmp.lt.s32.totalorder %s1702, 15
        %s1706 = scalar_select %p1705, %s1702, 15
        %s1707 = smul.addr %s1706, 2
        %s1708 = smul.addr %s1704, 32
        %s1709 = sadd.s32 %s1707, %s1708
        %s1710 = smul.addr %s1709, 8
        %s1711 = scalar_lea.vmem %s7, %s1710
      $region64: #{double_conv.4} parent=59 // pred_fallthru
        _
      // Predicated region
      $region65: #{double_conv.4} parent=59 // pred_check
        %p1712 = pneg %p270
      $region66: #{double_conv.4} parent=59 // pred_check_branch
        %1714 = sbr.rel (%p1712) target = $region68
      $region67: #{double_conv.4} parent=59 // pred_region
        %p1715 = scmp.lt.s32.totalorder %s26, 1
        %s1716 = scalar_select %p1715, %s26, 1
        %p1717 = scmp.lt.s32.totalorder %s27, 1
        %s1718 = scalar_select %p1717, %s27, 1
        %s1719 = smul.addr %s1716, 2
        %s1720 = sadd.s32 %s1718, %s1719
        %s1721 = smul.addr %s1720, 8
        %s1722 = scalar_lea.vmem %s8, %s1721
      $region68: #{double_conv.4} parent=59 // pred_fallthru
        _
    $region60: #{double_conv.4} parent=5 // pred_fallthru
      _
  $region6: #{double_conv.4} parent=0 // loop_footer
    %s19 = sadd.s32 1, %s15
  $region7: #{double_conv.4} parent=0 // loop_footer_branch
    %14 = sbr.rel target = $region3
  $region8: #{double_conv.4} parent=0 // loop_exit
    _

// kernel: double_conv.3
$region0: #{double_conv.3}
  #allocation0 [shape = 'u32[]', space=smem, size = 0x4, offset = 0x4, fixed_abs, tag = 'smem constant byte address 0x4 - core index']
  #allocation1 [shape = 'u32[72,128]{1,0:T(1,128)}', space=vmem, size = 0x9000, scoped, tag = 'internal scratch']
  %s0 = inlined_call_operand.vmem [shape: f32[2,16,16,128], index: 0, kind: input, shape index: {}, may-alias: {0,1,2}]
  %s1 = inlined_call_operand.vmem [shape: f32[2,16,16,128], index: 1, kind: input, shape index: {}, may-alias: {0,1,2}]
  %s2 = inlined_call_operand.vmem [shape: f32[2,16,16,128], index: 2, kind: input, shape index: {}, may-alias: {0,1,2}]
  %s3 = inlined_call_operand.vmem [shape: f32[1152,128], index: 3, kind: input, shape index: {}]
  %s4 = inlined_call_operand.vmem [shape: f32[1,128], index: 4, kind: input, shape index: {}]
  %s5 = inlined_call_operand.vmem [shape: f32[1,128], index: 5, kind: input, shape index: {}]
  %s6 = inlined_call_operand.vmem [shape: f32[1,128], index: 6, kind: input, shape index: {}]
  %s7 = inlined_call_operand.vmem [shape: f32[2,16,16,128], index: 7, kind: output, shape index: {0}]
  %s8 = inlined_call_operand.vmem [shape: f32[2,2,8,128], index: 8, kind: output, shape index: {1}]
  %9 = xla_tuple %s7, %s8
  %s10 = sld [smem:[#allocation0]]
  $region69: #{double_conv.3} parent=0
    _
  %s12 = ssub.s32 1, %s10
  %s13 = scalar_select 0, %s12, %s10
  loop: start=0, step=1, limit=6
  $region2: #{double_conv.3} parent=0 // loop_pre_header
    _
  $region3: #{double_conv.3} parent=0 // loop_header
    %s15 = sphi 0, %s19
    %p16 = scmp.ge.s32.totalorder %s15, 6
    %s22 = sphi 0, %s34
    %s23 = sphi 0, %s30
    %s24 = sphi 0, %s22
    %s25 = sphi 0, %s23
    %s26 = sphi 0, %s24
    %s27 = sphi 0, %s25
    %s47 = sphi 0, %s49
    %s50 = sphi 0, %s47
    %s51 = sphi 0, %s50
    %s67 = sphi 0, %s51
    %s75 = sphi 0, %s77
    %s78 = sphi 0, %s75
    %s79 = sphi 0, %s78
    %s95 = sphi 0, %s79
    %s111 = sphi 0, %s113
    %s114 = sphi 0, %s111
    %s115 = sphi 0, %s114
    %s131 = sphi 0, %s115
    %s135 = sphi 0, %s135
    %s137 = sphi 0, %s135
    %s138 = sphi 0, %s137
    %s152 = sphi 0, %s138
    %s156 = sphi 0, %s156
    %s158 = sphi 0, %s156
    %s159 = sphi 0, %s158
    %s173 = sphi 0, %s159
    %s177 = sphi 0, %s177
    %s179 = sphi 0, %s177
    %s180 = sphi 0, %s179
    %s194 = sphi 0, %s180
    %s198 = sphi 0, %s198
    %s200 = sphi 0, %s198
    %s201 = sphi 0, %s200
    %s215 = sphi 0, %s201
    %s223 = sphi 0, %s225
    %s226 = sphi 0, %s223
    %s227 = sphi 0, %s226
    %s243 = sphi 0, %s227
    %s251 = sphi 0, %s253
    %s254 = sphi 0, %s251
    %s255 = sphi 0, %s254
    %s271 = sphi 0, %s255
  $region4: #{double_conv.3} parent=0 // loop_header_branch
    %18 = sbr.rel (%p16) target = $region8
  $region5: #{double_conv.3} parent=0 // loop_body
    %s20 = ssub.s32 %s15, 1
    %s21 = ssub.s32 %s15, 2
    %s28 = sadd.s32 1, %s23
    %p29 = scmp.ge.s32.totalorder %s28, 2
    %s30 = scalar_select %p29, 0, %s28
    %s31 = sadd.s32 1, %s22
    %s32 = scalar_select %p29, %s31, %s22
    %p33 = scmp.ge.s32.totalorder %s32, 2
    %s34 = scalar_select %p33, 0, %s32
    %s35 = smul.u32 %s23, 8
    %s36 = ssub.s32 %s35, 1
    %p37 = scmp.gt.s32.totalorder %s36, 0
    %s38 = scalar_select %p37, %s36, 0
    %s39 = smul.u32 %s30, 8
    %s40 = ssub.s32 %s39, 1
    %p41 = scmp.gt.s32.totalorder %s40, 0
    %s42 = scalar_select %p41, %s40, 0
    %s43 = ssub.s32 %s22, %s34
    %s44 = ssub.s32 %s38, %s42
    %s45 = sor.u32 %s43, %s44
    %p46 = scmp.eq.s32.totalorder %s45, 0
    %s48 = sadd.s32 %s47, 1
    %s49 = scalar_select %p46, %s47, %s48
    %p52 = pneg %p46
    %p53 = scmp.eq.s32.totalorder %s15, 3
    %p54 = por %p52, %p53
    %p55 = scmp.ne.s32.totalorder %s47, %s50
    %p56 = scmp.eq.s32.totalorder %s15, 0
    %p57 = por %p55, %p56
    %p58 = scmp.ne.s32.totalorder %s47, %s50
    %p59 = scmp.eq.s32.totalorder %s20, 3
    %p60 = por %p58, %p59
    %p61 = scmp.ne.s32.totalorder %s50, %s51
    %p62 = scmp.eq.s32.totalorder %s20, 0
    %p63 = por %p61, %p62
    %p64 = scmp.ne.s32.totalorder %s50, %s51
    %p65 = scmp.eq.s32.totalorder %s21, 3
    %p66 = por %p64, %p65
    %p68 = scmp.ne.s32.totalorder %s51, %s67
    %p69 = scmp.eq.s32.totalorder %s21, 0
    %p70 = por %p68, %p69
    %s71 = ssub.s32 %s22, %s34
    %s72 = ssub.s32 %s23, %s30
    %s73 = sor.u32 %s71, %s72
    %p74 = scmp.eq.s32.totalorder %s73, 0
    %s76 = sadd.s32 %s75, 1
    %s77 = scalar_select %p74, %s75, %s76
    %p80 = pneg %p74
    %p81 = scmp.eq.s32.totalorder %s15, 3
    %p82 = por %p80, %p81
    %p83 = scmp.ne.s32.totalorder %s75, %s78
    %p84 = scmp.eq.s32.totalorder %s15, 0
    %p85 = por %p83, %p84
    %p86 = scmp.ne.s32.totalorder %s75, %s78
    %p87 = scmp.eq.s32.totalorder %s20, 3
    %p88 = por %p86, %p87
    %p89 = scmp.ne.s32.totalorder %s78, %s79
    %p90 = scmp.eq.s32.totalorder %s20, 0
    %p91 = por %p89, %p90
    %p92 = scmp.ne.s32.totalorder %s78, %s79
    %p93 = scmp.eq.s32.totalorder %s21, 3
    %p94 = por %p92, %p93
    %p96 = scmp.ne.s32.totalorder %s79, %s95
    %p97 = scmp.eq.s32.totalorder %s21, 0
    %p98 = por %p96, %p97
    %s99 = sadd.s32 %s23, 1
    %s100 = smul.u32 %s99, 8
    %p101 = scmp.lt.s32.totalorder %s100, 15
    %s102 = scalar_select %p101, %s100, 15
    %s103 = sadd.s32 %s30, 1
    %s104 = smul.u32 %s103, 8
    %p105 = scmp.lt.s32.totalorder %s104, 15
    %s106 = scalar_select %p105, %s104, 15
    %s107 = ssub.s32 %s22, %s34
    %s108 = ssub.s32 %s102, %s106
    %s109 = sor.u32 %s107, %s108
    %p110 = scmp.eq.s32.totalorder %s109, 0
    %s112 = sadd.s32 %s111, 1
    %s113 = scalar_select %p110, %s111, %s112
    %p116 = pneg %p110
    %p117 = scmp.eq.s32.totalorder %s15, 3
    %p118 = por %p116, %p117
    %p119 = scmp.ne.s32.totalorder %s111, %s114
    %p120 = scmp.eq.s32.totalorder %s15, 0
    %p121 = por %p119, %p120
    %p122 = scmp.ne.s32.totalorder %s111, %s114
    %p123 = scmp.eq.s32.totalorder %s20, 3
    %p124 = por %p122, %p123
    %p125 = scmp.ne.s32.totalorder %s114, %s115
    %p126 = scmp.eq.s32.totalorder %s20, 0
    %p127 = por %p125, %p126
    %p128 = scmp.ne.s32.totalorder %s114, %s115
    %p129 = scmp.eq.s32.totalorder %s21, 3
    %p130 = por %p128, %p129
    %p132 = scmp.ne.s32.totalorder %s115, %s131
    %p133 = scmp.eq.s32.totalorder %s21, 0
    %p134 = por %p132, %p133
    %s136 = sadd.s32 %s135, 1
    %p139 = scmp.eq.s32.totalorder %s15, 3
    %p140 = scmp.ne.s32.totalorder %s135, %s137
    %p141 = scmp.eq.s32.totalorder %s15, 0
    %p142 = por %p140, %p141
    %p143 = scmp.ne.s32.totalorder %s135, %s137
    %p144 = scmp.eq.s32.totalorder %s20, 3
    %p145 = por %p143, %p144
    %p146 = scmp.ne.s32.totalorder %s137, %s138
    %p147 = scmp.eq.s32.totalorder %s20, 0
    %p148 = por %p146, %p147
    %p149 = scmp.ne.s32.totalorder %s137, %s138
    %p150 = scmp.eq.s32.totalorder %s21, 3
    %p151 = por %p149, %p150
    %p153 = scmp.ne.s32.totalorder %s138, %s152
    %p154 = scmp.eq.s32.totalorder %s21, 0
    %p155 = por %p153, %p154
    %s157 = sadd.s32 %s156, 1
    %p160 = scmp.eq.s32.totalorder %s15, 3
    %p161 = scmp.ne.s32.totalorder %s156, %s158
    %p162 = scmp.eq.s32.totalorder %s15, 0
    %p163 = por %p161, %p162
    %p164 = scmp.ne.s32.totalorder %s156, %s158
    %p165 = scmp.eq.s32.totalorder %s20, 3
    %p166 = por %p164, %p165
    %p167 = scmp.ne.s32.totalorder %s158, %s159
    %p168 = scmp.eq.s32.totalorder %s20, 0
    %p169 = por %p167, %p168
    %p170 = scmp.ne.s32.totalorder %s158, %s159
    %p171 = scmp.eq.s32.totalorder %s21, 3
    %p172 = por %p170, %p171
    %p174 = scmp.ne.s32.totalorder %s159, %s173
    %p175 = scmp.eq.s32.totalorder %s21, 0
    %p176 = por %p174, %p175
    %s178 = sadd.s32 %s177, 1
    %p181 = scmp.eq.s32.totalorder %s15, 3
    %p182 = scmp.ne.s32.totalorder %s177, %s179
    %p183 = scmp.eq.s32.totalorder %s15, 0
    %p184 = por %p182, %p183
    %p185 = scmp.ne.s32.totalorder %s177, %s179
    %p186 = scmp.eq.s32.totalorder %s20, 3
    %p187 = por %p185, %p186
    %p188 = scmp.ne.s32.totalorder %s179, %s180
    %p189 = scmp.eq.s32.totalorder %s20, 0
    %p190 = por %p188, %p189
    %p191 = scmp.ne.s32.totalorder %s179, %s180
    %p192 = scmp.eq.s32.totalorder %s21, 3
    %p193 = por %p191, %p192
    %p195 = scmp.ne.s32.totalorder %s180, %s194
    %p196 = scmp.eq.s32.totalorder %s21, 0
    %p197 = por %p195, %p196
    %s199 = sadd.s32 %s198, 1
    %p202 = scmp.eq.s32.totalorder %s15, 3
    %p203 = scmp.ne.s32.totalorder %s198, %s200
    %p204 = scmp.eq.s32.totalorder %s15, 0
    %p205 = por %p203, %p204
    %p206 = scmp.ne.s32.totalorder %s198, %s200
    %p207 = scmp.eq.s32.totalorder %s20, 3
    %p208 = por %p206, %p207
    %p209 = scmp.ne.s32.totalorder %s200, %s201
    %p210 = scmp.eq.s32.totalorder %s20, 0
    %p211 = por %p209, %p210
    %p212 = scmp.ne.s32.totalorder %s200, %s201
    %p213 = scmp.eq.s32.totalorder %s21, 3
    %p214 = por %p212, %p213
    %p216 = scmp.ne.s32.totalorder %s201, %s215
    %p217 = scmp.eq.s32.totalorder %s21, 0
    %p218 = por %p216, %p217
    %s219 = ssub.s32 %s22, %s34
    %s220 = ssub.s32 %s23, %s30
    %s221 = sor.u32 %s219, %s220
    %p222 = scmp.eq.s32.totalorder %s221, 0
    %s224 = sadd.s32 %s223, 1
    %s225 = scalar_select %p222, %s223, %s224
    %p228 = pneg %p222
    %p229 = scmp.eq.s32.totalorder %s15, 3
    %p230 = por %p228, %p229
    %p231 = scmp.ne.s32.totalorder %s223, %s226
    %p232 = scmp.eq.s32.totalorder %s15, 0
    %p233 = por %p231, %p232
    %p234 = scmp.ne.s32.totalorder %s223, %s226
    %p235 = scmp.eq.s32.totalorder %s20, 3
    %p236 = por %p234, %p235
    %p237 = scmp.ne.s32.totalorder %s226, %s227
    %p238 = scmp.eq.s32.totalorder %s20, 0
    %p239 = por %p237, %p238
    %p240 = scmp.ne.s32.totalorder %s226, %s227
    %p241 = scmp.eq.s32.totalorder %s21, 3
    %p242 = por %p240, %p241
    %p244 = scmp.ne.s32.totalorder %s227, %s243
    %p245 = scmp.eq.s32.totalorder %s21, 0
    %p246 = por %p244, %p245
    %s247 = ssub.s32 %s22, %s34
    %s248 = ssub.s32 %s23, %s30
    %s249 = sor.u32 %s247, %s248
    %p250 = scmp.eq.s32.totalorder %s249, 0
    %s252 = sadd.s32 %s251, 1
    %s253 = scalar_select %p250, %s251, %s252
    %p256 = pneg %p250
    %p257 = scmp.eq.s32.totalorder %s15, 3
    %p258 = por %p256, %p257
    %p259 = scmp.ne.s32.totalorder %s251, %s254
    %p260 = scmp.eq.s32.totalorder %s15, 0
    %p261 = por %p259, %p260
    %p262 = scmp.ne.s32.totalorder %s251, %s254
    %p263 = scmp.eq.s32.totalorder %s20, 3
    %p264 = por %p262, %p263
    %p265 = scmp.ne.s32.totalorder %s254, %s255
    %p266 = scmp.eq.s32.totalorder %s20, 0
    %p267 = por %p265, %p266
    %p268 = scmp.ne.s32.totalorder %s254, %s255
    %p269 = scmp.eq.s32.totalorder %s21, 3
    %p270 = por %p268, %p269
    %p272 = scmp.ne.s32.totalorder %s255, %s271
    %p273 = scmp.eq.s32.totalorder %s21, 0
    %p274 = por %p272, %p273
    %p275 = scmp.le.s32.totalorder 1, %s15
    %p276 = scmp.lt.s32.totalorder %s15, 5
    %p277 = pnand %p275, %p276
    %p278 = pneg %p277
    // Predicated region
    $region9: #{double_conv.3} parent=5 // pred_check
      _
    $region10: #{double_conv.3} parent=5 // pred_check_branch
      %280 = sbr.rel (%p277) target = $region12
    $region11: #{double_conv.3} parent=5 // pred_region
      %s281 = ssub.s32 %s15, 1
      // Predicated region
      $region13: #{double_conv.3} parent=11 // pred_check
        %p282 = pneg %p148
      $region14: #{double_conv.3} parent=11 // pred_check_branch
        %284 = sbr.rel (%p282) target = $region16
      $region15: #{double_conv.3} parent=11 // pred_region
        _
      $region16: #{double_conv.3} parent=11 // pred_fallthru
        _
      // Predicated region
      $region17: #{double_conv.3} parent=11 // pred_check
        %p285 = pneg %p169
      $region18: #{double_conv.3} parent=11 // pred_check_branch
        %287 = sbr.rel (%p285) target = $region20
      $region19: #{double_conv.3} parent=11 // pred_region
        _
      $region20: #{double_conv.3} parent=11 // pred_fallthru
        _
      // Predicated region
      $region21: #{double_conv.3} parent=11 // pred_check
        %p288 = pneg %p190
      $region22: #{double_conv.3} parent=11 // pred_check_branch
        %290 = sbr.rel (%p288) target = $region24
      $region23: #{double_conv.3} parent=11 // pred_region
        _
      $region24: #{double_conv.3} parent=11 // pred_fallthru
        _
      // Predicated region
      $region25: #{double_conv.3} parent=11 // pred_check
        %p291 = pneg %p211
      $region26: #{double_conv.3} parent=11 // pred_check_branch
        %293 = sbr.rel (%p291) target = $region28
      $region27: #{double_conv.3} parent=11 // pred_region
        _
      $region28: #{double_conv.3} parent=11 // pred_fallthru
        _
    $region12: #{double_conv.3} parent=5 // pred_fallthru
      _
    %p294 = scmp.lt.s32.totalorder %s15, 4
    // Predicated region
    $region29: #{double_conv.3} parent=5 // pred_check
      %p295 = pneg %p294
    $region30: #{double_conv.3} parent=5 // pred_check_branch
      %297 = sbr.rel (%p295) target = $region32
    $region31: #{double_conv.3} parent=5 // pred_region
      // Predicated region
      $region33: #{double_conv.3} parent=31 // pred_check
        %p298 = pneg %p57
      $region34: #{double_conv.3} parent=31 // pred_check_branch
        %300 = sbr.rel (%p298) target = $region36
      $region35: #{double_conv.3} parent=31 // pred_region
        %s301 = smul.u32 %s23, 8
        %s302 = ssub.s32 %s301, 1
        %p303 = scmp.gt.s32.totalorder %s302, 0
        %s304 = scalar_select %p303, %s302, 0
        %p305 = scmp.lt.s32.totalorder %s22, 1
        %s306 = scalar_select %p305, %s22, 1
        %p307 = scmp.lt.s32.totalorder %s304, 15
        %s308 = scalar_select %p307, %s304, 15
        %s309 = smul.addr %s308, 2
        %s310 = smul.addr %s306, 32
        %s311 = sadd.s32 %s309, %s310
        %s312 = smul.addr %s311, 8
        %s313 = scalar_lea.vmem %s0, %s312
        %s314 = smul.u32 %s23, 8
        %s315 = ssub.s32 %s314, 1
        %p316 = scmp.gt.s32.totalorder %s315, 0
        %s317 = scalar_select %p316, %s315, 0
      $region36: #{double_conv.3} parent=31 // pred_fallthru
        _
      // Predicated region
      $region37: #{double_conv.3} parent=31 // pred_check
        %p318 = pneg %p85
      $region38: #{double_conv.3} parent=31 // pred_check_branch
        %320 = sbr.rel (%p318) target = $region40
      $region39: #{double_conv.3} parent=31 // pred_region
        %s321 = smul.u32 8, %s23
        %p322 = scmp.lt.s32.totalorder %s22, 1
        %s323 = scalar_select %p322, %s22, 1
        %p324 = scmp.lt.s32.totalorder %s321, 15
        %s325 = scalar_select %p324, %s321, 15
        %s326 = smul.addr %s325, 2
        %s327 = smul.addr %s323, 32
        %s328 = sadd.s32 %s326, %s327
        %s329 = smul.addr %s328, 8
        %s330 = scalar_lea.vmem %s1, %s329
        %s331 = smul.u32 8, %s23
      $region40: #{double_conv.3} parent=31 // pred_fallthru
        _
      // Predicated region
      $region41: #{double_conv.3} parent=31 // pred_check
        %p332 = pneg %p121
      $region42: #{double_conv.3} parent=31 // pred_check_branch
        %334 = sbr.rel (%p332) target = $region44
      $region43: #{double_conv.3} parent=31 // pred_region
        %s335 = sadd.s32 %s23, 1
        %s336 = smul.u32 %s335, 8
        %p337 = scmp.lt.s32.totalorder %s336, 15
        %s338 = scalar_select %p337, %s336, 15
        %p339 = scmp.lt.s32.totalorder %s22, 1
        %s340 = scalar_select %p339, %s22, 1
        %p341 = scmp.lt.s32.totalorder %s338, 15
        %s342 = scalar_select %p341, %s338, 15
        %s343 = smul.addr %s342, 2
        %s344 = smul.addr %s340, 32
        %s345 = sadd.s32 %s343, %s344
        %s346 = smul.addr %s345, 8
        %s347 = scalar_lea.vmem %s2, %s346
        %s348 = sadd.s32 %s23, 1
        %s349 = smul.u32 %s348, 8
        %p350 = scmp.lt.s32.totalorder %s349, 15
        %s351 = scalar_select %p350, %s349, 15
      $region44: #{double_conv.3} parent=31 // pred_fallthru
        _
    $region32: #{double_conv.3} parent=5 // pred_fallthru
      _
    %p352 = scmp.le.s32.totalorder 1, %s15
    %p353 = scmp.lt.s32.totalorder %s15, 5
    %p354 = pnand %p352, %p353
    %p355 = pneg %p354
    // Predicated region
    $region45: #{double_conv.3} parent=5 // pred_check
      _
    $region46: #{double_conv.3} parent=5 // pred_check_branch
      %357 = sbr.rel (%p354) target = $region48
    $region47: #{double_conv.3} parent=5 // pred_region
      %s358 = ssub.s32 %s15, 1
      %s359 = smul.u32 %s25, 8
      %s360 = ssub.s32 %s359, 1
      %p361 = scmp.gt.s32.totalorder %s360, 0
      %s362 = scalar_select %p361, %s360, 0
      %p363 = scmp.lt.s32.totalorder %s24, 1
      %s364 = scalar_select %p363, %s24, 1
      %p365 = scmp.lt.s32.totalorder %s362, 15
      %s366 = scalar_select %p365, %s362, 15
      %s367 = smul.addr %s366, 2
      %s368 = smul.addr %s364, 32
      %s369 = sadd.s32 %s367, %s368
      %s370 = smul.addr %s369, 8
      %s371 = scalar_lea.vmem %s0, %s370
      %p372 = pneg %p63
      %p373 = pneg %p60
      %s374 = smul.u32 8, %s25
      %p375 = scmp.lt.s32.totalorder %s24, 1
      %s376 = scalar_select %p375, %s24, 1
      %p377 = scmp.lt.s32.totalorder %s374, 15
      %s378 = scalar_select %p377, %s374, 15
      %s379 = smul.addr %s378, 2
      %s380 = smul.addr %s376, 32
      %s381 = sadd.s32 %s379, %s380
      %s382 = smul.addr %s381, 8
      %s383 = scalar_lea.vmem %s1, %s382
      %p384 = pneg %p91
      %p385 = pneg %p88
      %s386 = sadd.s32 %s25, 1
      %s387 = smul.u32 %s386, 8
      %p388 = scmp.lt.s32.totalorder %s387, 15
      %s389 = scalar_select %p388, %s387, 15
      %p390 = scmp.lt.s32.totalorder %s24, 1
      %s391 = scalar_select %p390, %s24, 1
      %p392 = scmp.lt.s32.totalorder %s389, 15
      %s393 = scalar_select %p392, %s389, 15
      %s394 = smul.addr %s393, 2
      %s395 = smul.addr %s391, 32
      %s396 = sadd.s32 %s394, %s395
      %s397 = smul.addr %s396, 8
      %s398 = scalar_lea.vmem %s2, %s397
      %p399 = pneg %p127
      %p400 = pneg %p124
      %p401 = pneg %p148
      %p402 = pneg %p145
      %p403 = pneg %p169
      %p404 = pneg %p166
      %p405 = pneg %p190
      %p406 = pneg %p187
      %p407 = pneg %p211
      %p408 = pneg %p208
      %p409 = pneg %p239
      %p410 = pneg %p236
      %s411 = smul.u32 8, %s25
      %p412 = scmp.lt.s32.totalorder %s24, 1
      %s413 = scalar_select %p412, %s24, 1
      %p414 = scmp.lt.s32.totalorder %s411, 15
      %s415 = scalar_select %p414, %s411, 15
      %s416 = smul.addr %s415, 2
      %s417 = smul.addr %s413, 32
      %s418 = sadd.s32 %s416, %s417
      %s419 = smul.addr %s418, 8
      %s420 = scalar_lea.vmem %s7, %s419
      %p421 = pneg %p267
      %p422 = pneg %p264
      %p423 = scmp.lt.s32.totalorder %s24, 1
      %s424 = scalar_select %p423, %s24, 1
      %p425 = scmp.lt.s32.totalorder %s25, 1
      %s426 = scalar_select %p425, %s25, 1
      %s427 = smul.addr %s424, 2
      %s428 = sadd.s32 %s426, %s427
      %s429 = smul.addr %s428, 8
      %s430 = scalar_lea.vmem %s8, %s429
      %s431 = smul.u32 %s25, 8
      %s432 = ssub.s32 %s431, 1
      %p433 = scmp.gt.s32.totalorder %s432, 0
      %s434 = scalar_select %p433, %s432, 0
      %p435 = scmp.lt.s32.totalorder %s24, 1
      %s436 = scalar_select %p435, %s24, 1
      %p437 = scmp.lt.s32.totalorder %s434, 15
      %s438 = scalar_select %p437, %s434, 15
      %s439 = smul.addr %s438, 2
      %s440 = smul.addr %s436, 32
      %s441 = sadd.s32 %s439, %s440
      %s442 = smul.addr %s441, 8
      %s443 = scalar_lea.vmem %s0, %s442
      %s444 = smul.u32 %s25, 8
      %s445 = ssub.s32 %s444, 1
      %p446 = scmp.gt.s32.totalorder %s445, 0
      %s447 = scalar_select %p446, %s445, 0
      %s448 = smul.u32 8, %s25
      %p449 = scmp.lt.s32.totalorder %s24, 1
      %s450 = scalar_select %p449, %s24, 1
      %p451 = scmp.lt.s32.totalorder %s448, 15
      %s452 = scalar_select %p451, %s448, 15
      %s453 = smul.addr %s452, 2
      %s454 = smul.addr %s450, 32
      %s455 = sadd.s32 %s453, %s454
      %s456 = smul.addr %s455, 8
      %s457 = scalar_lea.vmem %s1, %s456
      %s458 = smul.u32 8, %s25
      %s459 = sadd.s32 %s25, 1
      %s460 = smul.u32 %s459, 8
      %p461 = scmp.lt.s32.totalorder %s460, 15
      %s462 = scalar_select %p461, %s460, 15
      %p463 = scmp.lt.s32.totalorder %s24, 1
      %s464 = scalar_select %p463, %s24, 1
      %p465 = scmp.lt.s32.totalorder %s462, 15
      %s466 = scalar_select %p465, %s462, 15
      %s467 = smul.addr %s466, 2
      %s468 = smul.addr %s464, 32
      %s469 = sadd.s32 %s467, %s468
      %s470 = smul.addr %s469, 8
      %s471 = scalar_lea.vmem %s2, %s470
      %s472 = sadd.s32 %s25, 1
      %s473 = smul.u32 %s472, 8
      %p474 = scmp.lt.s32.totalorder %s473, 15
      %s475 = scalar_select %p474, %s473, 15
      %s476 = smul.u32 8, %s25
      %p477 = scmp.lt.s32.totalorder %s24, 1
      %s478 = scalar_select %p477, %s24, 1
      %p479 = scmp.lt.s32.totalorder %s476, 15
      %s480 = scalar_select %p479, %s476, 15
      %s481 = smul.addr %s480, 2
      %s482 = smul.addr %s478, 32
      %s483 = sadd.s32 %s481, %s482
      %s484 = smul.addr %s483, 8
      %s485 = scalar_lea.vmem %s7, %s484
      %s486 = smul.u32 8, %s25
      %p487 = scmp.lt.s32.totalorder %s24, 1
      %s488 = scalar_select %p487, %s24, 1
      %p489 = scmp.lt.s32.totalorder %s25, 1
      %s490 = scalar_select %p489, %s25, 1
      %s491 = smul.addr %s488, 2
      %s492 = sadd.s32 %s490, %s491
      %s493 = smul.addr %s492, 8
      %s494 = scalar_lea.vmem %s8, %s493
      %v495 = vld [vmem:[%s457] sm:$0xff]
      %v496 = vld [vmem:[%s457 + $0x8] sm:$0xff]
      %v497 = vld [vmem:[%s457 + $0x10] sm:$0xff]
      %v498 = vld [vmem:[%s457 + $0x18] sm:$0xff]
      %v499 = vld [vmem:[%s457 + $0x20] sm:$0xff]
      %v500 = vld [vmem:[%s457 + $0x28] sm:$0xff]
      %v501 = vld [vmem:[%s457 + $0x30] sm:$0xff]
      %v502 = vld [vmem:[%s457 + $0x38] sm:$0xff]
      %v503 = vld [vmem:[%s457 + $0x40] sm:$0xff]
      %v504 = vld [vmem:[%s457 + $0x48] sm:$0xff]
      %v505 = vld [vmem:[%s457 + $0x50] sm:$0xff]
      %v506 = vld [vmem:[%s457 + $0x58] sm:$0xff]
      %v507 = vld [vmem:[%s457 + $0x60] sm:$0xff]
      %v508 = vld [vmem:[%s457 + $0x68] sm:$0xff]
      %v509 = vld [vmem:[%s457 + $0x70] sm:$0xff]
      %v510 = vld [vmem:[%s457 + $0x78] sm:$0xff]
      %v511 = vld [vmem:[%s443] sm:$0xff]
      %v512 = vld [vmem:[%s443 + $0x8] sm:$0xff]
      %v513 = vld [vmem:[%s471] sm:$0xff]
      %v514 = vld [vmem:[%s471 + $0x8] sm:$0xff]
      %p515 = scmp.gt.s32.totalorder %s25, 0
      %s516 = scalar_select %p515, 1, 0
      %v517 = vstv %s516
      %vm518 = vcmp.eq.s32.totalorder %v517, 1
      %v519 = vsel %vm518, %v511, 0.0
      %v520 = vsel %vm518, %v512, 0.0
      %p521 = scmp.lt.s32.totalorder %s25, 1
      %s522 = scalar_select %p521, 1, 0
      %v523 = vstv %s522
      %vm524 = vcmp.eq.s32.totalorder %v523, 1
      %v525 = vsel %vm524, %v513, 0.0
      %v526 = vsel %vm524, %v514, 0.0
      %vm547 = vcmask 1040384
      %v548 = vrot.slane %v519, 7
      %v549 = vrot.slane %v520, 7
      %v550 = vsel %vm547, %v548, %v549
      %v551 = vrot.slane %v495, 7
      %v552 = vrot.slane %v496, 7
      %v553 = vsel %vm547, %v551, %v552
      %v554 = vrot.slane %v497, 7
      %v555 = vrot.slane %v498, 7
      %v556 = vsel %vm547, %v554, %v555
      %v557 = vrot.slane %v499, 7
      %v558 = vrot.slane %v500, 7
      %v559 = vsel %vm547, %v557, %v558
      %v560 = vrot.slane %v501, 7
      %v561 = vrot.slane %v502, 7
      %v562 = vsel %vm547, %v560, %v561
      %v563 = vrot.slane %v503, 7
      %v564 = vrot.slane %v504, 7
      %v565 = vsel %vm547, %v563, %v564
      %v566 = vrot.slane %v505, 7
      %v567 = vrot.slane %v506, 7
      %v568 = vsel %vm547, %v566, %v567
      %v569 = vrot.slane %v507, 7
      %v570 = vrot.slane %v508, 7
      %v571 = vsel %vm547, %v569, %v570
      %v572 = vrot.slane %v509, 7
      %v573 = vrot.slane %v510, 7
      %v574 = vsel %vm547, %v572, %v573
      %v575 = vrot.slane %v525, 7
      %v576 = vrot.slane %v526, 7
      %v577 = vsel %vm547, %v575, %v576
      %v608 = vsel %vm547, 0.0, %v548
      %v609 = vsel %vm547, 0.0, %v551
      %v610 = vsel %vm547, 0.0, %v554
      %v611 = vsel %vm547, 0.0, %v557
      %v612 = vsel %vm547, 0.0, %v560
      %v613 = vsel %vm547, 0.0, %v563
      %v614 = vsel %vm547, 0.0, %v566
      %v615 = vsel %vm547, 0.0, %v569
      %v616 = vsel %vm547, 0.0, %v572
      %v617 = vsel %vm547, 0.0, %v575
      %v618 = vsel %vm547, %v549, 0.0
      %v619 = vsel %vm547, %v552, 0.0
      %v620 = vsel %vm547, %v555, 0.0
      %v621 = vsel %vm547, %v558, 0.0
      %v622 = vsel %vm547, %v561, 0.0
      %v623 = vsel %vm547, %v564, 0.0
      %v624 = vsel %vm547, %v567, 0.0
      %v625 = vsel %vm547, %v570, 0.0
      %v626 = vsel %vm547, %v573, 0.0
      %v627 = vsel %vm547, %v576, 0.0
      %vm644 = vcmask 1046528
      %v645 = vrot.slane %v608, 1
      %v646 = vrot.slane %v550, 1
      %v647 = vsel %vm644, %v645, %v646
      %v648 = vrot.slane %v618, 1
      %v649 = vsel %vm644, %v646, %v648
      %v650 = vrot.slane %v609, 1
      %v651 = vrot.slane %v553, 1
      %v652 = vsel %vm644, %v650, %v651
      %v653 = vrot.slane %v619, 1
      %v654 = vsel %vm644, %v651, %v653
      %v655 = vrot.slane %v610, 1
      %v656 = vrot.slane %v556, 1
      %v657 = vsel %vm644, %v655, %v656
      %v658 = vrot.slane %v620, 1
      %v659 = vsel %vm644, %v656, %v658
      %v660 = vrot.slane %v611, 1
      %v661 = vrot.slane %v559, 1
      %v662 = vsel %vm644, %v660, %v661
      %v663 = vrot.slane %v621, 1
      %v664 = vsel %vm644, %v661, %v663
      %v665 = vrot.slane %v612, 1
      %v666 = vrot.slane %v562, 1
      %v667 = vsel %vm644, %v665, %v666
      %v668 = vrot.slane %v622, 1
      %v669 = vsel %vm644, %v666, %v668
      %v670 = vrot.slane %v613, 1
      %v671 = vrot.slane %v565, 1
      %v672 = vsel %vm644, %v670, %v671
      %v673 = vrot.slane %v623, 1
      %v674 = vsel %vm644, %v671, %v673
      %v675 = vrot.slane %v614, 1
      %v676 = vrot.slane %v568, 1
      %v677 = vsel %vm644, %v675, %v676
      %v678 = vrot.slane %v624, 1
      %v679 = vsel %vm644, %v676, %v678
      %v680 = vrot.slane %v615, 1
      %v681 = vrot.slane %v571, 1
      %v682 = vsel %vm644, %v680, %v681
      %v683 = vrot.slane %v625, 1
      %v684 = vsel %vm644, %v681, %v683
      %vm701 = vcmask 1045504
      %v702 = vrot.slane %v608, 2
      %v703 = vrot.slane %v550, 2
      %v704 = vsel %vm701, %v702, %v703
      %v705 = vrot.slane %v618, 2
      %v706 = vsel %vm701, %v703, %v705
      %v707 = vrot.slane %v609, 2
      %v708 = vrot.slane %v553, 2
      %v709 = vsel %vm701, %v707, %v708
      %v710 = vrot.slane %v619, 2
      %v711 = vsel %vm701, %v708, %v710
      %v712 = vrot.slane %v610, 2
      %v713 = vrot.slane %v556, 2
      %v714 = vsel %vm701, %v712, %v713
      %v715 = vrot.slane %v620, 2
      %v716 = vsel %vm701, %v713, %v715
      %v717 = vrot.slane %v611, 2
      %v718 = vrot.slane %v559, 2
      %v719 = vsel %vm701, %v717, %v718
      %v720 = vrot.slane %v621, 2
      %v721 = vsel %vm701, %v718, %v720
      %v722 = vrot.slane %v612, 2
      %v723 = vrot.slane %v562, 2
      %v724 = vsel %vm701, %v722, %v723
      %v725 = vrot.slane %v622, 2
      %v726 = vsel %vm701, %v723, %v725
      %v727 = vrot.slane %v613, 2
      %v728 = vrot.slane %v565, 2
      %v729 = vsel %vm701, %v727, %v728
      %v730 = vrot.slane %v623, 2
      %v731 = vsel %vm701, %v728, %v730
      %v732 = vrot.slane %v614, 2
      %v733 = vrot.slane %v568, 2
      %v734 = vsel %vm701, %v732, %v733
      %v735 = vrot.slane %v624, 2
      %v736 = vsel %vm701, %v733, %v735
      %v737 = vrot.slane %v615, 2
      %v738 = vrot.slane %v571, 2
      %v739 = vsel %vm701, %v737, %v738
      %v740 = vrot.slane %v625, 2
      %v741 = vsel %vm701, %v738, %v740
      %v760 = vrot.slane %v616, 1
      %v761 = vrot.slane %v574, 1
      %v762 = vsel %vm644, %v760, %v761
      %v763 = vrot.slane %v626, 1
      %v764 = vsel %vm644, %v761, %v763
      %v767 = vrot.slane %v616, 2
      %v768 = vrot.slane %v574, 2
      %v769 = vsel %vm701, %v767, %v768
      %v770 = vrot.slane %v626, 2
      %v771 = vsel %vm701, %v768, %v770
      %v776 = vrot.slane %v617, 1
      %v777 = vrot.slane %v577, 1
      %v778 = vsel %vm644, %v776, %v777
      %v779 = vrot.slane %v627, 1
      %v780 = vsel %vm644, %v777, %v779
      %v783 = vrot.slane %v617, 2
      %v784 = vrot.slane %v577, 2
      %v785 = vsel %vm701, %v783, %v784
      %v786 = vrot.slane %v627, 2
      %v787 = vsel %vm701, %v784, %v786
      %v790 = vld [vmem:[%s3] sm:$0xff]
      %v791 = vld [vmem:[%s3 + $0x8] sm:$0xff]
      %v792 = vld [vmem:[%s3 + $0x10] sm:$0xff]
      %v793 = vld [vmem:[%s3 + $0x18] sm:$0xff]
      %v794 = vld [vmem:[%s3 + $0x20] sm:$0xff]
      %v795 = vld [vmem:[%s3 + $0x28] sm:$0xff]
      %v796 = vld [vmem:[%s3 + $0x30] sm:$0xff]
      %v797 = vld [vmem:[%s3 + $0x38] sm:$0xff]
      %v798 = vld [vmem:[%s3 + $0x40] sm:$0xff]
      %v799 = vld [vmem:[%s3 + $0x48] sm:$0xff]
      %v800 = vld [vmem:[%s3 + $0x50] sm:$0xff]
      %v801 = vld [vmem:[%s3 + $0x58] sm:$0xff]
      %v802 = vld [vmem:[%s3 + $0x60] sm:$0xff]
      %v803 = vld [vmem:[%s3 + $0x68] sm:$0xff]
      %v804 = vld [vmem:[%s3 + $0x70] sm:$0xff]
      %v805 = vld [vmem:[%s3 + $0x78] sm:$0xff]
      %v806 = vld [vmem:[%s3 + $0x80] sm:$0xff]
      %v807 = vld [vmem:[%s3 + $0x88] sm:$0xff]
      %v808 = vld [vmem:[%s3 + $0x90] sm:$0xff]
      %v809 = vld [vmem:[%s3 + $0x98] sm:$0xff]
      %v810 = vld [vmem:[%s3 + $0xa0] sm:$0xff]
      %v811 = vld [vmem:[%s3 + $0xa8] sm:$0xff]
      %v812 = vld [vmem:[%s3 + $0xb0] sm:$0xff]
      %v813 = vld [vmem:[%s3 + $0xb8] sm:$0xff]
      %v814 = vld [vmem:[%s3 + $0xc0] sm:$0xff]
      %v815 = vld [vmem:[%s3 + $0xc8] sm:$0xff]
      %v816 = vld [vmem:[%s3 + $0xd0] sm:$0xff]
      %v817 = vld [vmem:[%s3 + $0xd8] sm:$0xff]
      %v818 = vld [vmem:[%s3 + $0xe0] sm:$0xff]
      %v819 = vld [vmem:[%s3 + $0xe8] sm:$0xff]
      %v820 = vld [vmem:[%s3 + $0xf0] sm:$0xff]
      %v821 = vld [vmem:[%s3 + $0xf8] sm:$0xff]
      %v822 = vld [vmem:[%s3 + $0x100] sm:$0xff]
      %v823 = vld [vmem:[%s3 + $0x108] sm:$0xff]
      %v824 = vld [vmem:[%s3 + $0x110] sm:$0xff]
      %v825 = vld [vmem:[%s3 + $0x118] sm:$0xff]
      %v826 = vld [vmem:[%s3 + $0x120] sm:$0xff]
      %v827 = vld [vmem:[%s3 + $0x128] sm:$0xff]
      %v828 = vld [vmem:[%s3 + $0x130] sm:$0xff]
      %v829 = vld [vmem:[%s3 + $0x138] sm:$0xff]
      %v830 = vld [vmem:[%s3 + $0x140] sm:$0xff]
      %v831 = vld [vmem:[%s3 + $0x148] sm:$0xff]
      %v832 = vld [vmem:[%s3 + $0x150] sm:$0xff]
      %v833 = vld [vmem:[%s3 + $0x158] sm:$0xff]
      %v834 = vld [vmem:[%s3 + $0x160] sm:$0xff]
      %v835 = vld [vmem:[%s3 + $0x168] sm:$0xff]
      %v836 = vld [vmem:[%s3 + $0x170] sm:$0xff]
      %v837 = vld [vmem:[%s3 + $0x178] sm:$0xff]
      %v838 = vld [vmem:[%s3 + $0x180] sm:$0xff]
      %v839 = vld [vmem:[%s3 + $0x188] sm:$0xff]
      %v840 = vld [vmem:[%s3 + $0x190] sm:$0xff]
      %v841 = vld [vmem:[%s3 + $0x198] sm:$0xff]
      %v842 = vld [vmem:[%s3 + $0x1a0] sm:$0xff]
      %v843 = vld [vmem:[%s3 + $0x1a8] sm:$0xff]
      %v844 = vld [vmem:[%s3 + $0x1b0] sm:$0xff]
      %v845 = vld [vmem:[%s3 + $0x1b8] sm:$0xff]
      %v846 = vld [vmem:[%s3 + $0x1c0] sm:$0xff]
      %v847 = vld [vmem:[%s3 + $0x1c8] sm:$0xff]
      %v848 = vld [vmem:[%s3 + $0x1d0] sm:$0xff]
      %v849 = vld [vmem:[%s3 + $0x1d8] sm:$0xff]
      %v850 = vld [vmem:[%s3 + $0x1e0] sm:$0xff]
      %v851 = vld [vmem:[%s3 + $0x1e8] sm:$0xff]
      %v852 = vld [vmem:[%s3 + $0x1f0] sm:$0xff]
      %v853 = vld [vmem:[%s3 + $0x1f8] sm:$0xff]
      %v854 = vld [vmem:[%s3 + $0x200] sm:$0xff]
      %v855 = vld [vmem:[%s3 + $0x208] sm:$0xff]
      %v856 = vld [vmem:[%s3 + $0x210] sm:$0xff]
      %v857 = vld [vmem:[%s3 + $0x218] sm:$0xff]
      %v858 = vld [vmem:[%s3 + $0x220] sm:$0xff]
      %v859 = vld [vmem:[%s3 + $0x228] sm:$0xff]
      %v860 = vld [vmem:[%s3 + $0x230] sm:$0xff]
      %v861 = vld [vmem:[%s3 + $0x238] sm:$0xff]
      %v862 = vld [vmem:[%s3 + $0x240] sm:$0xff]
      %v863 = vld [vmem:[%s3 + $0x248] sm:$0xff]
      %v864 = vld [vmem:[%s3 + $0x250] sm:$0xff]
      %v865 = vld [vmem:[%s3 + $0x258] sm:$0xff]
      %v866 = vld [vmem:[%s3 + $0x260] sm:$0xff]
      %v867 = vld [vmem:[%s3 + $0x268] sm:$0xff]
      %v868 = vld [vmem:[%s3 + $0x270] sm:$0xff]
      %v869 = vld [vmem:[%s3 + $0x278] sm:$0xff]
      %v870 = vld [vmem:[%s3 + $0x280] sm:$0xff]
      %v871 = vld [vmem:[%s3 + $0x288] sm:$0xff]
      %v872 = vld [vmem:[%s3 + $0x290] sm:$0xff]
      %v873 = vld [vmem:[%s3 + $0x298] sm:$0xff]
      %v874 = vld [vmem:[%s3 + $0x2a0] sm:$0xff]
      %v875 = vld [vmem:[%s3 + $0x2a8] sm:$0xff]
      %v876 = vld [vmem:[%s3 + $0x2b0] sm:$0xff]
      %v877 = vld [vmem:[%s3 + $0x2b8] sm:$0xff]
      %v878 = vld [vmem:[%s3 + $0x2c0] sm:$0xff]
      %v879 = vld [vmem:[%s3 + $0x2c8] sm:$0xff]
      %v880 = vld [vmem:[%s3 + $0x2d0] sm:$0xff]
      %v881 = vld [vmem:[%s3 + $0x2d8] sm:$0xff]
      %v882 = vld [vmem:[%s3 + $0x2e0] sm:$0xff]
      %v883 = vld [vmem:[%s3 + $0x2e8] sm:$0xff]
      %v884 = vld [vmem:[%s3 + $0x2f0] sm:$0xff]
      %v885 = vld [vmem:[%s3 + $0x2f8] sm:$0xff]
      %v886 = vld [vmem:[%s3 + $0x300] sm:$0xff]
      %v887 = vld [vmem:[%s3 + $0x308] sm:$0xff]
      %v888 = vld [vmem:[%s3 + $0x310] sm:$0xff]
      %v889 = vld [vmem:[%s3 + $0x318] sm:$0xff]
      %v890 = vld [vmem:[%s3 + $0x320] sm:$0xff]
      %v891 = vld [vmem:[%s3 + $0x328] sm:$0xff]
      %v892 = vld [vmem:[%s3 + $0x330] sm:$0xff]
      %v893 = vld [vmem:[%s3 + $0x338] sm:$0xff]
      %v894 = vld [vmem:[%s3 + $0x340] sm:$0xff]
      %v895 = vld [vmem:[%s3 + $0x348] sm:$0xff]
      %v896 = vld [vmem:[%s3 + $0x350] sm:$0xff]
      %v897 = vld [vmem:[%s3 + $0x358] sm:$0xff]
      %v898 = vld [vmem:[%s3 + $0x360] sm:$0xff]
      %v899 = vld [vmem:[%s3 + $0x368] sm:$0xff]
      %v900 = vld [vmem:[%s3 + $0x370] sm:$0xff]
      %v901 = vld [vmem:[%s3 + $0x378] sm:$0xff]
      %v902 = vld [vmem:[%s3 + $0x380] sm:$0xff]
      %v903 = vld [vmem:[%s3 + $0x388] sm:$0xff]
      %v904 = vld [vmem:[%s3 + $0x390] sm:$0xff]
      %v905 = vld [vmem:[%s3 + $0x398] sm:$0xff]
      %v906 = vld [vmem:[%s3 + $0x3a0] sm:$0xff]
      %v907 = vld [vmem:[%s3 + $0x3a8] sm:$0xff]
      %v908 = vld [vmem:[%s3 + $0x3b0] sm:$0xff]
      %v909 = vld [vmem:[%s3 + $0x3b8] sm:$0xff]
      %v910 = vld [vmem:[%s3 + $0x3c0] sm:$0xff]
      %v911 = vld [vmem:[%s3 + $0x3c8] sm:$0xff]
      %v912 = vld [vmem:[%s3 + $0x3d0] sm:$0xff]
      %v913 = vld [vmem:[%s3 + $0x3d8] sm:$0xff]
      %v914 = vld [vmem:[%s3 + $0x3e0] sm:$0xff]
      %v915 = vld [vmem:[%s3 + $0x3e8] sm:$0xff]
      %v916 = vld [vmem:[%s3 + $0x3f0] sm:$0xff]
      %v917 = vld [vmem:[%s3 + $0x3f8] sm:$0xff]
      %v918 = vld [vmem:[%s3 + $0x400] sm:$0xff]
      %v919 = vld [vmem:[%s3 + $0x408] sm:$0xff]
      %v920 = vld [vmem:[%s3 + $0x410] sm:$0xff]
      %v921 = vld [vmem:[%s3 + $0x418] sm:$0xff]
      %v922 = vld [vmem:[%s3 + $0x420] sm:$0xff]
      %v923 = vld [vmem:[%s3 + $0x428] sm:$0xff]
      %v924 = vld [vmem:[%s3 + $0x430] sm:$0xff]
      %v925 = vld [vmem:[%s3 + $0x438] sm:$0xff]
      %v926 = vld [vmem:[%s3 + $0x440] sm:$0xff]
      %v927 = vld [vmem:[%s3 + $0x448] sm:$0xff]
      %v928 = vld [vmem:[%s3 + $0x450] sm:$0xff]
      %v929 = vld [vmem:[%s3 + $0x458] sm:$0xff]
      %v930 = vld [vmem:[%s3 + $0x460] sm:$0xff]
      %v931 = vld [vmem:[%s3 + $0x468] sm:$0xff]
      %v932 = vld [vmem:[%s3 + $0x470] sm:$0xff]
      %v933 = vld [vmem:[%s3 + $0x478] sm:$0xff]
      %v934 = vld [vmem:[%s4] sm:$0x1]
      %v936 = vperm.slane %v934, 0
      %938 = vmatpush.msra.mxu0 %v805
      %939 = vmatpush.msra.mxu0 %v804
      %940 = vmatpush.msra.mxu0 %v803
      %941 = vmatpush.msra.mxu0 %v802
      %942 = vmatpush.msra.mxu0 %v801
      %943 = vmatpush.msra.mxu0 %v800
      %944 = vmatpush.msra.mxu0 %v799
      %945 = vmatpush.msra.mxu0 %v798
      %946 = vmatpush.msra.mxu0 %v797
      %947 = vmatpush.msra.mxu0 %v796
      %948 = vmatpush.msra.mxu0 %v795
      %949 = vmatpush.msra.mxu0 %v794
      %950 = vmatpush.msra.mxu0 %v793
      %951 = vmatpush.msra.mxu0 %v792
      %952 = vmatpush.msra.mxu0 %v791
      %953 = vmatpush.msra.mxu0 %v790
      %954 = vmatmul.f32.gmra.mxu0 %v608
      %v955 = vpop.f32.mrf.mxu0
      %v956 = vadd.f32 %v936, %v955
      %957 = vmatmul.f32.gmra.mxu0 %v550
      %v958 = vpop.f32.mrf.mxu0
      %v959 = vadd.f32 %v936, %v958
      %960 = vmatmul.f32.gmra.mxu0 %v609
      %v961 = vpop.f32.mrf.mxu0
      %v962 = vadd.f32 %v936, %v961
      %963 = vmatmul.f32.gmra.mxu0 %v553
      %v964 = vpop.f32.mrf.mxu0
      %v965 = vadd.f32 %v936, %v964
      %966 = vmatmul.f32.gmra.mxu0 %v610
      %v967 = vpop.f32.mrf.mxu0
      %v968 = vadd.f32 %v936, %v967
      %969 = vmatmul.f32.gmra.mxu0 %v556
      %v970 = vpop.f32.mrf.mxu0
      %v971 = vadd.f32 %v936, %v970
      %972 = vmatmul.f32.gmra.mxu0 %v611
      %v973 = vpop.f32.mrf.mxu0
      %v974 = vadd.f32 %v936, %v973
      %975 = vmatmul.f32.gmra.mxu0 %v559
      %v976 = vpop.f32.mrf.mxu0
      %v977 = vadd.f32 %v936, %v976
      %978 = vmatmul.f32.gmra.mxu0 %v612
      %v979 = vpop.f32.mrf.mxu0
      %v980 = vadd.f32 %v936, %v979
      %981 = vmatmul.f32.gmra.mxu0 %v562
      %v982 = vpop.f32.mrf.mxu0
      %v983 = vadd.f32 %v936, %v982
      %984 = vmatmul.f32.gmra.mxu0 %v613
      %v985 = vpop.f32.mrf.mxu0
      %v986 = vadd.f32 %v936, %v985
      %987 = vmatmul.f32.gmra.mxu0 %v565
      %v988 = vpop.f32.mrf.mxu0
      %v989 = vadd.f32 %v936, %v988
      %990 = vmatmul.f32.gmra.mxu0 %v614
      %v991 = vpop.f32.mrf.mxu0
      %v992 = vadd.f32 %v936, %v991
      %993 = vmatmul.f32.gmra.mxu0 %v568
      %v994 = vpop.f32.mrf.mxu0
      %v995 = vadd.f32 %v936, %v994
      %996 = vmatmul.f32.gmra.mxu0 %v615
      %v997 = vpop.f32.mrf.mxu0
      %v998 = vadd.f32 %v936, %v997
      %999 = vmatmul.f32.gmra.mxu0 %v571
      %v1000 = vpop.f32.mrf.mxu0
      %v1001 = vadd.f32 %v936, %v1000
      %1002 = vdwg.mxu0
      %1003 = vmatpush.msra.mxu0 %v821
      %1004 = vmatpush.msra.mxu0 %v820
      %1005 = vmatpush.msra.mxu0 %v819
      %1006 = vmatpush.msra.mxu0 %v818
      %1007 = vmatpush.msra.mxu0 %v817
      %1008 = vmatpush.msra.mxu0 %v816
      %1009 = vmatpush.msra.mxu0 %v815
      %1010 = vmatpush.msra.mxu0 %v814
      %1011 = vmatpush.msra.mxu0 %v813
      %1012 = vmatpush.msra.mxu0 %v812
      %1013 = vmatpush.msra.mxu0 %v811
      %1014 = vmatpush.msra.mxu0 %v810
      %1015 = vmatpush.msra.mxu0 %v809
      %1016 = vmatpush.msra.mxu0 %v808
      %1017 = vmatpush.msra.mxu0 %v807
      %1018 = vmatpush.msra.mxu0 %v806
      %1019 = vmatmul.f32.gmra.mxu0 %v647
      %v1020 = vpop.f32.mrf.mxu0
      %v1021 = vadd.f32 %v956, %v1020
      %1022 = vmatmul.f32.gmra.mxu0 %v649
      %v1023 = vpop.f32.mrf.mxu0
      %v1024 = vadd.f32 %v959, %v1023
      %1025 = vmatmul.f32.gmra.mxu0 %v652
      %v1026 = vpop.f32.mrf.mxu0
      %v1027 = vadd.f32 %v962, %v1026
      %1028 = vmatmul.f32.gmra.mxu0 %v654
      %v1029 = vpop.f32.mrf.mxu0
      %v1030 = vadd.f32 %v965, %v1029
      %1031 = vmatmul.f32.gmra.mxu0 %v657
      %v1032 = vpop.f32.mrf.mxu0
      %v1033 = vadd.f32 %v968, %v1032
      %1034 = vmatmul.f32.gmra.mxu0 %v659
      %v1035 = vpop.f32.mrf.mxu0
      %v1036 = vadd.f32 %v971, %v1035
      %1037 = vmatmul.f32.gmra.mxu0 %v662
      %v1038 = vpop.f32.mrf.mxu0
      %v1039 = vadd.f32 %v974, %v1038
      %1040 = vmatmul.f32.gmra.mxu0 %v664
      %v1041 = vpop.f32.mrf.mxu0
      %v1042 = vadd.f32 %v977, %v1041
      %1043 = vmatmul.f32.gmra.mxu0 %v667
      %v1044 = vpop.f32.mrf.mxu0
      %v1045 = vadd.f32 %v980, %v1044
      %1046 = vmatmul.f32.gmra.mxu0 %v669
      %v1047 = vpop.f32.mrf.mxu0
      %v1048 = vadd.f32 %v983, %v1047
      %1049 = vmatmul.f32.gmra.mxu0 %v672
      %v1050 = vpop.f32.mrf.mxu0
      %v1051 = vadd.f32 %v986, %v1050
      %1052 = vmatmul.f32.gmra.mxu0 %v674
      %v1053 = vpop.f32.mrf.mxu0
      %v1054 = vadd.f32 %v989, %v1053
      %1055 = vmatmul.f32.gmra.mxu0 %v677
      %v1056 = vpop.f32.mrf.mxu0
      %v1057 = vadd.f32 %v992, %v1056
      %1058 = vmatmul.f32.gmra.mxu0 %v679
      %v1059 = vpop.f32.mrf.mxu0
      %v1060 = vadd.f32 %v995, %v1059
      %1061 = vmatmul.f32.gmra.mxu0 %v682
      %v1062 = vpop.f32.mrf.mxu0
      %v1063 = vadd.f32 %v998, %v1062
      %1064 = vmatmul.f32.gmra.mxu0 %v684
      %v1065 = vpop.f32.mrf.mxu0
      %v1066 = vadd.f32 %v1001, %v1065
      %1067 = vdwg.mxu0
      %1068 = vmatpush.msra.mxu0 %v837
      %1069 = vmatpush.msra.mxu0 %v836
      %1070 = vmatpush.msra.mxu0 %v835
      %1071 = vmatpush.msra.mxu0 %v834
      %1072 = vmatpush.msra.mxu0 %v833
      %1073 = vmatpush.msra.mxu0 %v832
      %1074 = vmatpush.msra.mxu0 %v831
      %1075 = vmatpush.msra.mxu0 %v830
      %1076 = vmatpush.msra.mxu0 %v829
      %1077 = vmatpush.msra.mxu0 %v828
      %1078 = vmatpush.msra.mxu0 %v827
      %1079 = vmatpush.msra.mxu0 %v826
      %1080 = vmatpush.msra.mxu0 %v825
      %1081 = vmatpush.msra.mxu0 %v824
      %1082 = vmatpush.msra.mxu0 %v823
      %1083 = vmatpush.msra.mxu0 %v822
      %1084 = vmatmul.f32.gmra.mxu0 %v704
      %v1085 = vpop.f32.mrf.mxu0
      %v1086 = vadd.f32 %v1021, %v1085
      %1087 = vmatmul.f32.gmra.mxu0 %v706
      %v1088 = vpop.f32.mrf.mxu0
      %v1089 = vadd.f32 %v1024, %v1088
      %1090 = vmatmul.f32.gmra.mxu0 %v709
      %v1091 = vpop.f32.mrf.mxu0
      %v1092 = vadd.f32 %v1027, %v1091
      %1093 = vmatmul.f32.gmra.mxu0 %v711
      %v1094 = vpop.f32.mrf.mxu0
      %v1095 = vadd.f32 %v1030, %v1094
      %1096 = vmatmul.f32.gmra.mxu0 %v714
      %v1097 = vpop.f32.mrf.mxu0
      %v1098 = vadd.f32 %v1033, %v1097
      %1099 = vmatmul.f32.gmra.mxu0 %v716
      %v1100 = vpop.f32.mrf.mxu0
      %v1101 = vadd.f32 %v1036, %v1100
      %1102 = vmatmul.f32.gmra.mxu0 %v719
      %v1103 = vpop.f32.mrf.mxu0
      %v1104 = vadd.f32 %v1039, %v1103
      %1105 = vmatmul.f32.gmra.mxu0 %v721
      %v1106 = vpop.f32.mrf.mxu0
      %v1107 = vadd.f32 %v1042, %v1106
      %1108 = vmatmul.f32.gmra.mxu0 %v724
      %v1109 = vpop.f32.mrf.mxu0
      %v1110 = vadd.f32 %v1045, %v1109
      %1111 = vmatmul.f32.gmra.mxu0 %v726
      %v1112 = vpop.f32.mrf.mxu0
      %v1113 = vadd.f32 %v1048, %v1112
      %1114 = vmatmul.f32.gmra.mxu0 %v729
      %v1115 = vpop.f32.mrf.mxu0
      %v1116 = vadd.f32 %v1051, %v1115
      %1117 = vmatmul.f32.gmra.mxu0 %v731
      %v1118 = vpop.f32.mrf.mxu0
      %v1119 = vadd.f32 %v1054, %v1118
      %1120 = vmatmul.f32.gmra.mxu0 %v734
      %v1121 = vpop.f32.mrf.mxu0
      %v1122 = vadd.f32 %v1057, %v1121
      %1123 = vmatmul.f32.gmra.mxu0 %v736
      %v1124 = vpop.f32.mrf.mxu0
      %v1125 = vadd.f32 %v1060, %v1124
      %1126 = vmatmul.f32.gmra.mxu0 %v739
      %v1127 = vpop.f32.mrf.mxu0
      %v1128 = vadd.f32 %v1063, %v1127
      %1129 = vmatmul.f32.gmra.mxu0 %v741
      %v1130 = vpop.f32.mrf.mxu0
      %v1131 = vadd.f32 %v1066, %v1130
      %1132 = vdwg.mxu0
      %1133 = vmatpush.msra.mxu0 %v853
      %1134 = vmatpush.msra.mxu0 %v852
      %1135 = vmatpush.msra.mxu0 %v851
      %1136 = vmatpush.msra.mxu0 %v850
      %1137 = vmatpush.msra.mxu0 %v849
      %1138 = vmatpush.msra.mxu0 %v848
      %1139 = vmatpush.msra.mxu0 %v847
      %1140 = vmatpush.msra.mxu0 %v846
      %1141 = vmatpush.msra.mxu0 %v845
      %1142 = vmatpush.msra.mxu0 %v844
      %1143 = vmatpush.msra.mxu0 %v843
      %1144 = vmatpush.msra.mxu0 %v842
      %1145 = vmatpush.msra.mxu0 %v841
      %1146 = vmatpush.msra.mxu0 %v840
      %1147 = vmatpush.msra.mxu0 %v839
      %1148 = vmatpush.msra.mxu0 %v838
      %1149 = vmatmul.f32.gmra.mxu0 %v609
      %v1150 = vpop.f32.mrf.mxu0
      %v1151 = vadd.f32 %v1086, %v1150
      %1152 = vmatmul.f32.gmra.mxu0 %v553
      %v1153 = vpop.f32.mrf.mxu0
      %v1154 = vadd.f32 %v1089, %v1153
      %1155 = vmatmul.f32.gmra.mxu0 %v610
      %v1156 = vpop.f32.mrf.mxu0
      %v1157 = vadd.f32 %v1092, %v1156
      %1158 = vmatmul.f32.gmra.mxu0 %v556
      %v1159 = vpop.f32.mrf.mxu0
      %v1160 = vadd.f32 %v1095, %v1159
      %1161 = vmatmul.f32.gmra.mxu0 %v611
      %v1162 = vpop.f32.mrf.mxu0
      %v1163 = vadd.f32 %v1098, %v1162
      %1164 = vmatmul.f32.gmra.mxu0 %v559
      %v1165 = vpop.f32.mrf.mxu0
      %v1166 = vadd.f32 %v1101, %v1165
      %1167 = vmatmul.f32.gmra.mxu0 %v612
      %v1168 = vpop.f32.mrf.mxu0
      %v1169 = vadd.f32 %v1104, %v1168
      %1170 = vmatmul.f32.gmra.mxu0 %v562
      %v1171 = vpop.f32.mrf.mxu0
      %v1172 = vadd.f32 %v1107, %v1171
      %1173 = vmatmul.f32.gmra.mxu0 %v613
      %v1174 = vpop.f32.mrf.mxu0
      %v1175 = vadd.f32 %v1110, %v1174
      %1176 = vmatmul.f32.gmra.mxu0 %v565
      %v1177 = vpop.f32.mrf.mxu0
      %v1178 = vadd.f32 %v1113, %v1177
      %1179 = vmatmul.f32.gmra.mxu0 %v614
      %v1180 = vpop.f32.mrf.mxu0
      %v1181 = vadd.f32 %v1116, %v1180
      %1182 = vmatmul.f32.gmra.mxu0 %v568
      %v1183 = vpop.f32.mrf.mxu0
      %v1184 = vadd.f32 %v1119, %v1183
      %1185 = vmatmul.f32.gmra.mxu0 %v615
      %v1186 = vpop.f32.mrf.mxu0
      %v1187 = vadd.f32 %v1122, %v1186
      %1188 = vmatmul.f32.gmra.mxu0 %v571
      %v1189 = vpop.f32.mrf.mxu0
      %v1190 = vadd.f32 %v1125, %v1189
      %1191 = vmatmul.f32.gmra.mxu0 %v616
      %v1192 = vpop.f32.mrf.mxu0
      %v1193 = vadd.f32 %v1128, %v1192
      %1194 = vmatmul.f32.gmra.mxu0 %v574
      %v1195 = vpop.f32.mrf.mxu0
      %v1196 = vadd.f32 %v1131, %v1195
      %1197 = vdwg.mxu0
      %1198 = vmatpush.msra.mxu0 %v869
      %1199 = vmatpush.msra.mxu0 %v868
      %1200 = vmatpush.msra.mxu0 %v867
      %1201 = vmatpush.msra.mxu0 %v866
      %1202 = vmatpush.msra.mxu0 %v865
      %1203 = vmatpush.msra.mxu0 %v864
      %1204 = vmatpush.msra.mxu0 %v863
      %1205 = vmatpush.msra.mxu0 %v862
      %1206 = vmatpush.msra.mxu0 %v861
      %1207 = vmatpush.msra.mxu0 %v860
      %1208 = vmatpush.msra.mxu0 %v859
      %1209 = vmatpush.msra.mxu0 %v858
      %1210 = vmatpush.msra.mxu0 %v857
      %1211 = vmatpush.msra.mxu0 %v856
      %1212 = vmatpush.msra.mxu0 %v855
      %1213 = vmatpush.msra.mxu0 %v854
      %1214 = vmatmul.f32.gmra.mxu0 %v652
      %v1215 = vpop.f32.mrf.mxu0
      %v1216 = vadd.f32 %v1151, %v1215
      %1217 = vmatmul.f32.gmra.mxu0 %v654
      %v1218 = vpop.f32.mrf.mxu0
      %v1219 = vadd.f32 %v1154, %v1218
      %1220 = vmatmul.f32.gmra.mxu0 %v657
      %v1221 = vpop.f32.mrf.mxu0
      %v1222 = vadd.f32 %v1157, %v1221
      %1223 = vmatmul.f32.gmra.mxu0 %v659
      %v1224 = vpop.f32.mrf.mxu0
      %v1225 = vadd.f32 %v1160, %v1224
      %1226 = vmatmul.f32.gmra.mxu0 %v662
      %v1227 = vpop.f32.mrf.mxu0
      %v1228 = vadd.f32 %v1163, %v1227
      %1229 = vmatmul.f32.gmra.mxu0 %v664
      %v1230 = vpop.f32.mrf.mxu0
      %v1231 = vadd.f32 %v1166, %v1230
      %1232 = vmatmul.f32.gmra.mxu0 %v667
      %v1233 = vpop.f32.mrf.mxu0
      %v1234 = vadd.f32 %v1169, %v1233
      %1235 = vmatmul.f32.gmra.mxu0 %v669
      %v1236 = vpop.f32.mrf.mxu0
      %v1237 = vadd.f32 %v1172, %v1236
      %1238 = vmatmul.f32.gmra.mxu0 %v672
      %v1239 = vpop.f32.mrf.mxu0
      %v1240 = vadd.f32 %v1175, %v1239
      %1241 = vmatmul.f32.gmra.mxu0 %v674
      %v1242 = vpop.f32.mrf.mxu0
      %v1243 = vadd.f32 %v1178, %v1242
      %1244 = vmatmul.f32.gmra.mxu0 %v677
      %v1245 = vpop.f32.mrf.mxu0
      %v1246 = vadd.f32 %v1181, %v1245
      %1247 = vmatmul.f32.gmra.mxu0 %v679
      %v1248 = vpop.f32.mrf.mxu0
      %v1249 = vadd.f32 %v1184, %v1248
      %1250 = vmatmul.f32.gmra.mxu0 %v682
      %v1251 = vpop.f32.mrf.mxu0
      %v1252 = vadd.f32 %v1187, %v1251
      %1253 = vmatmul.f32.gmra.mxu0 %v684
      %v1254 = vpop.f32.mrf.mxu0
      %v1255 = vadd.f32 %v1190, %v1254
      %1256 = vmatmul.f32.gmra.mxu0 %v762
      %v1257 = vpop.f32.mrf.mxu0
      %v1258 = vadd.f32 %v1193, %v1257
      %1259 = vmatmul.f32.gmra.mxu0 %v764
      %v1260 = vpop.f32.mrf.mxu0
      %v1261 = vadd.f32 %v1196, %v1260
      %1262 = vdwg.mxu0
      %1263 = vmatpush.msra.mxu0 %v885
      %1264 = vmatpush.msra.mxu0 %v884
      %1265 = vmatpush.msra.mxu0 %v883
      %1266 = vmatpush.msra.mxu0 %v882
      %1267 = vmatpush.msra.mxu0 %v881
      %1268 = vmatpush.msra.mxu0 %v880
      %1269 = vmatpush.msra.mxu0 %v879
      %1270 = vmatpush.msra.mxu0 %v878
      %1271 = vmatpush.msra.mxu0 %v877
      %1272 = vmatpush.msra.mxu0 %v876
      %1273 = vmatpush.msra.mxu0 %v875
      %1274 = vmatpush.msra.mxu0 %v874
      %1275 = vmatpush.msra.mxu0 %v873
      %1276 = vmatpush.msra.mxu0 %v872
      %1277 = vmatpush.msra.mxu0 %v871
      %1278 = vmatpush.msra.mxu0 %v870
      %1279 = vmatmul.f32.gmra.mxu0 %v709
      %v1280 = vpop.f32.mrf.mxu0
      %v1281 = vadd.f32 %v1216, %v1280
      %1282 = vmatmul.f32.gmra.mxu0 %v711
      %v1283 = vpop.f32.mrf.mxu0
      %v1284 = vadd.f32 %v1219, %v1283
      %1285 = vmatmul.f32.gmra.mxu0 %v714
      %v1286 = vpop.f32.mrf.mxu0
      %v1287 = vadd.f32 %v1222, %v1286
      %1288 = vmatmul.f32.gmra.mxu0 %v716
      %v1289 = vpop.f32.mrf.mxu0
      %v1290 = vadd.f32 %v1225, %v1289
      %1291 = vmatmul.f32.gmra.mxu0 %v719
      %v1292 = vpop.f32.mrf.mxu0
      %v1293 = vadd.f32 %v1228, %v1292
      %1294 = vmatmul.f32.gmra.mxu0 %v721
      %v1295 = vpop.f32.mrf.mxu0
      %v1296 = vadd.f32 %v1231, %v1295
      %1297 = vmatmul.f32.gmra.mxu0 %v724
      %v1298 = vpop.f32.mrf.mxu0
      %v1299 = vadd.f32 %v1234, %v1298
      %1300 = vmatmul.f32.gmra.mxu0 %v726
      %v1301 = vpop.f32.mrf.mxu0
      %v1302 = vadd.f32 %v1237, %v1301
      %1303 = vmatmul.f32.gmra.mxu0 %v729
      %v1304 = vpop.f32.mrf.mxu0
      %v1305 = vadd.f32 %v1240, %v1304
      %1306 = vmatmul.f32.gmra.mxu0 %v731
      %v1307 = vpop.f32.mrf.mxu0
      %v1308 = vadd.f32 %v1243, %v1307
      %1309 = vmatmul.f32.gmra.mxu0 %v734
      %v1310 = vpop.f32.mrf.mxu0
      %v1311 = vadd.f32 %v1246, %v1310
      %1312 = vmatmul.f32.gmra.mxu0 %v736
      %v1313 = vpop.f32.mrf.mxu0
      %v1314 = vadd.f32 %v1249, %v1313
      %1315 = vmatmul.f32.gmra.mxu0 %v739
      %v1316 = vpop.f32.mrf.mxu0
      %v1317 = vadd.f32 %v1252, %v1316
      %1318 = vmatmul.f32.gmra.mxu0 %v741
      %v1319 = vpop.f32.mrf.mxu0
      %v1320 = vadd.f32 %v1255, %v1319
      %1321 = vmatmul.f32.gmra.mxu0 %v769
      %v1322 = vpop.f32.mrf.mxu0
      %v1323 = vadd.f32 %v1258, %v1322
      %1324 = vmatmul.f32.gmra.mxu0 %v771
      %v1325 = vpop.f32.mrf.mxu0
      %v1326 = vadd.f32 %v1261, %v1325
      %1327 = vdwg.mxu0
      %1328 = vmatpush.msra.mxu0 %v901
      %1329 = vmatpush.msra.mxu0 %v900
      %1330 = vmatpush.msra.mxu0 %v899
      %1331 = vmatpush.msra.mxu0 %v898
      %1332 = vmatpush.msra.mxu0 %v897
      %1333 = vmatpush.msra.mxu0 %v896
      %1334 = vmatpush.msra.mxu0 %v895
      %1335 = vmatpush.msra.mxu0 %v894
      %1336 = vmatpush.msra.mxu0 %v893
      %1337 = vmatpush.msra.mxu0 %v892
      %1338 = vmatpush.msra.mxu0 %v891
      %1339 = vmatpush.msra.mxu0 %v890
      %1340 = vmatpush.msra.mxu0 %v889
      %1341 = vmatpush.msra.mxu0 %v888
      %1342 = vmatpush.msra.mxu0 %v887
      %1343 = vmatpush.msra.mxu0 %v886
      %1344 = vmatmul.f32.gmra.mxu0 %v610
      %v1345 = vpop.f32.mrf.mxu0
      %v1346 = vadd.f32 %v1281, %v1345
      %1347 = vmatmul.f32.gmra.mxu0 %v556
      %v1348 = vpop.f32.mrf.mxu0
      %v1349 = vadd.f32 %v1284, %v1348
      %1350 = vmatmul.f32.gmra.mxu0 %v611
      %v1351 = vpop.f32.mrf.mxu0
      %v1352 = vadd.f32 %v1287, %v1351
      %1353 = vmatmul.f32.gmra.mxu0 %v559
      %v1354 = vpop.f32.mrf.mxu0
      %v1355 = vadd.f32 %v1290, %v1354
      %1356 = vmatmul.f32.gmra.mxu0 %v612
      %v1357 = vpop.f32.mrf.mxu0
      %v1358 = vadd.f32 %v1293, %v1357
      %1359 = vmatmul.f32.gmra.mxu0 %v562
      %v1360 = vpop.f32.mrf.mxu0
      %v1361 = vadd.f32 %v1296, %v1360
      %1362 = vmatmul.f32.gmra.mxu0 %v613
      %v1363 = vpop.f32.mrf.mxu0
      %v1364 = vadd.f32 %v1299, %v1363
      %1365 = vmatmul.f32.gmra.mxu0 %v565
      %v1366 = vpop.f32.mrf.mxu0
      %v1367 = vadd.f32 %v1302, %v1366
      %1368 = vmatmul.f32.gmra.mxu0 %v614
      %v1369 = vpop.f32.mrf.mxu0
      %v1370 = vadd.f32 %v1305, %v1369
      %1371 = vmatmul.f32.gmra.mxu0 %v568
      %v1372 = vpop.f32.mrf.mxu0
      %v1373 = vadd.f32 %v1308, %v1372
      %1374 = vmatmul.f32.gmra.mxu0 %v615
      %v1375 = vpop.f32.mrf.mxu0
      %v1376 = vadd.f32 %v1311, %v1375
      %1377 = vmatmul.f32.gmra.mxu0 %v571
      %v1378 = vpop.f32.mrf.mxu0
      %v1379 = vadd.f32 %v1314, %v1378
      %1380 = vmatmul.f32.gmra.mxu0 %v616
      %v1381 = vpop.f32.mrf.mxu0
      %v1382 = vadd.f32 %v1317, %v1381
      %1383 = vmatmul.f32.gmra.mxu0 %v574
      %v1384 = vpop.f32.mrf.mxu0
      %v1385 = vadd.f32 %v1320, %v1384
      %1386 = vmatmul.f32.gmra.mxu0 %v617
      %v1387 = vpop.f32.mrf.mxu0
      %v1388 = vadd.f32 %v1323, %v1387
      %1389 = vmatmul.f32.gmra.mxu0 %v577
      %v1390 = vpop.f32.mrf.mxu0
      %v1391 = vadd.f32 %v1326, %v1390
      %1392 = vdwg.mxu0
      %1393 = vmatpush.msra.mxu0 %v917
      %1394 = vmatpush.msra.mxu0 %v916
      %1395 = vmatpush.msra.mxu0 %v915
      %1396 = vmatpush.msra.mxu0 %v914
      %1397 = vmatpush.msra.mxu0 %v913
      %1398 = vmatpush.msra.mxu0 %v912
      %1399 = vmatpush.msra.mxu0 %v911
      %1400 = vmatpush.msra.mxu0 %v910
      %1401 = vmatpush.msra.mxu0 %v909
      %1402 = vmatpush.msra.mxu0 %v908
      %1403 = vmatpush.msra.mxu0 %v907
      %1404 = vmatpush.msra.mxu0 %v906
      %1405 = vmatpush.msra.mxu0 %v905
      %1406 = vmatpush.msra.mxu0 %v904
      %1407 = vmatpush.msra.mxu0 %v903
      %1408 = vmatpush.msra.mxu0 %v902
      %1409 = vmatmul.f32.gmra.mxu0 %v657
      %v1410 = vpop.f32.mrf.mxu0
      %v1411 = vadd.f32 %v1346, %v1410
      %1412 = vmatmul.f32.gmra.mxu0 %v659
      %v1413 = vpop.f32.mrf.mxu0
      %v1414 = vadd.f32 %v1349, %v1413
      %1415 = vmatmul.f32.gmra.mxu0 %v662
      %v1416 = vpop.f32.mrf.mxu0
      %v1417 = vadd.f32 %v1352, %v1416
      %1418 = vmatmul.f32.gmra.mxu0 %v664
      %v1419 = vpop.f32.mrf.mxu0
      %v1420 = vadd.f32 %v1355, %v1419
      %1421 = vmatmul.f32.gmra.mxu0 %v667
      %v1422 = vpop.f32.mrf.mxu0
      %v1423 = vadd.f32 %v1358, %v1422
      %1424 = vmatmul.f32.gmra.mxu0 %v669
      %v1425 = vpop.f32.mrf.mxu0
      %v1426 = vadd.f32 %v1361, %v1425
      %1427 = vmatmul.f32.gmra.mxu0 %v672
      %v1428 = vpop.f32.mrf.mxu0
      %v1429 = vadd.f32 %v1364, %v1428
      %1430 = vmatmul.f32.gmra.mxu0 %v674
      %v1431 = vpop.f32.mrf.mxu0
      %v1432 = vadd.f32 %v1367, %v1431
      %1433 = vmatmul.f32.gmra.mxu0 %v677
      %v1434 = vpop.f32.mrf.mxu0
      %v1435 = vadd.f32 %v1370, %v1434
      %1436 = vmatmul.f32.gmra.mxu0 %v679
      %v1437 = vpop.f32.mrf.mxu0
      %v1438 = vadd.f32 %v1373, %v1437
      %1439 = vmatmul.f32.gmra.mxu0 %v682
      %v1440 = vpop.f32.mrf.mxu0
      %v1441 = vadd.f32 %v1376, %v1440
      %1442 = vmatmul.f32.gmra.mxu0 %v684
      %v1443 = vpop.f32.mrf.mxu0
      %v1444 = vadd.f32 %v1379, %v1443
      %1445 = vmatmul.f32.gmra.mxu0 %v762
      %v1446 = vpop.f32.mrf.mxu0
      %v1447 = vadd.f32 %v1382, %v1446
      %1448 = vmatmul.f32.gmra.mxu0 %v764
      %v1449 = vpop.f32.mrf.mxu0
      %v1450 = vadd.f32 %v1385, %v1449
      %1451 = vmatmul.f32.gmra.mxu0 %v778
      %v1452 = vpop.f32.mrf.mxu0
      %v1453 = vadd.f32 %v1388, %v1452
      %1454 = vmatmul.f32.gmra.mxu0 %v780
      %v1455 = vpop.f32.mrf.mxu0
      %v1456 = vadd.f32 %v1391, %v1455
      %1457 = vdwg.mxu0
      %1458 = vmatpush.msra.mxu0 %v933
      %1459 = vmatpush.msra.mxu0 %v932
      %1460 = vmatpush.msra.mxu0 %v931
      %1461 = vmatpush.msra.mxu0 %v930
      %1462 = vmatpush.msra.mxu0 %v929
      %1463 = vmatpush.msra.mxu0 %v928
      %1464 = vmatpush.msra.mxu0 %v927
      %1465 = vmatpush.msra.mxu0 %v926
      %1466 = vmatpush.msra.mxu0 %v925
      %1467 = vmatpush.msra.mxu0 %v924
      %1468 = vmatpush.msra.mxu0 %v923
      %1469 = vmatpush.msra.mxu0 %v922
      %1470 = vmatpush.msra.mxu0 %v921
      %1471 = vmatpush.msra.mxu0 %v920
      %1472 = vmatpush.msra.mxu0 %v919
      %1473 = vmatpush.msra.mxu0 %v918
      %1474 = vmatmul.f32.gmra.mxu0 %v714
      %v1475 = vpop.f32.mrf.mxu0
      %v1476 = vadd.f32 %v1411, %v1475
      %1477 = vmatmul.f32.gmra.mxu0 %v716
      %v1478 = vpop.f32.mrf.mxu0
      %v1479 = vadd.f32 %v1414, %v1478
      %1480 = vmatmul.f32.gmra.mxu0 %v719
      %v1481 = vpop.f32.mrf.mxu0
      %v1482 = vadd.f32 %v1417, %v1481
      %1483 = vmatmul.f32.gmra.mxu0 %v721
      %v1484 = vpop.f32.mrf.mxu0
      %v1485 = vadd.f32 %v1420, %v1484
      %1486 = vmatmul.f32.gmra.mxu0 %v724
      %v1487 = vpop.f32.mrf.mxu0
      %v1488 = vadd.f32 %v1423, %v1487
      %1489 = vmatmul.f32.gmra.mxu0 %v726
      %v1490 = vpop.f32.mrf.mxu0
      %v1491 = vadd.f32 %v1426, %v1490
      %1492 = vmatmul.f32.gmra.mxu0 %v729
      %v1493 = vpop.f32.mrf.mxu0
      %v1494 = vadd.f32 %v1429, %v1493
      %1495 = vmatmul.f32.gmra.mxu0 %v731
      %v1496 = vpop.f32.mrf.mxu0
      %v1497 = vadd.f32 %v1432, %v1496
      %1498 = vmatmul.f32.gmra.mxu0 %v734
      %v1499 = vpop.f32.mrf.mxu0
      %v1500 = vadd.f32 %v1435, %v1499
      %1501 = vmatmul.f32.gmra.mxu0 %v736
      %v1502 = vpop.f32.mrf.mxu0
      %v1503 = vadd.f32 %v1438, %v1502
      %1504 = vmatmul.f32.gmra.mxu0 %v739
      %v1505 = vpop.f32.mrf.mxu0
      %v1506 = vadd.f32 %v1441, %v1505
      %1507 = vmatmul.f32.gmra.mxu0 %v741
      %v1508 = vpop.f32.mrf.mxu0
      %v1509 = vadd.f32 %v1444, %v1508
      %1510 = vmatmul.f32.gmra.mxu0 %v769
      %v1511 = vpop.f32.mrf.mxu0
      %v1512 = vadd.f32 %v1447, %v1511
      %1513 = vmatmul.f32.gmra.mxu0 %v771
      %v1514 = vpop.f32.mrf.mxu0
      %v1515 = vadd.f32 %v1450, %v1514
      %1516 = vmatmul.f32.gmra.mxu0 %v785
      %v1517 = vpop.f32.mrf.mxu0
      %v1518 = vadd.f32 %v1453, %v1517
      %1519 = vmatmul.f32.gmra.mxu0 %v787
      %v1520 = vpop.f32.mrf.mxu0
      %v1521 = vadd.f32 %v1456, %v1520
      %1522 = vdwg.mxu0
      %1523 = vst [vmem:[%s485] sm:$0xff] %v1476
      %1524 = vst [vmem:[%s485 + $0x8] sm:$0xff] %v1479
      %1525 = vst [vmem:[%s485 + $0x10] sm:$0xff] %v1482
      %1526 = vst [vmem:[%s485 + $0x18] sm:$0xff] %v1485
      %1527 = vst [vmem:[%s485 + $0x20] sm:$0xff] %v1488
      %1528 = vst [vmem:[%s485 + $0x28] sm:$0xff] %v1491
      %1529 = vst [vmem:[%s485 + $0x30] sm:$0xff] %v1494
      %1530 = vst [vmem:[%s485 + $0x38] sm:$0xff] %v1497
      %1531 = vst [vmem:[%s485 + $0x40] sm:$0xff] %v1500
      %1532 = vst [vmem:[%s485 + $0x48] sm:$0xff] %v1503
      %1533 = vst [vmem:[%s485 + $0x50] sm:$0xff] %v1506
      %1534 = vst [vmem:[%s485 + $0x58] sm:$0xff] %v1509
      %1535 = vst [vmem:[%s485 + $0x60] sm:$0xff] %v1512
      %1536 = vst [vmem:[%s485 + $0x68] sm:$0xff] %v1515
      %1537 = vst [vmem:[%s485 + $0x70] sm:$0xff] %v1518
      %1538 = vst [vmem:[%s485 + $0x78] sm:$0xff] %v1521
      %v1539 = vadd.f32 %v1476, %v1479
      %v1540 = vadd.f32 %v1539, %v1482
      %v1541 = vadd.f32 %v1540, %v1485
      %v1542 = vadd.f32 %v1541, %v1488
      %v1543 = vadd.f32 %v1542, %v1491
      %v1544 = vadd.f32 %v1543, %v1494
      %v1545 = vadd.f32 %v1544, %v1497
      %v1546 = vadd.f32 %v1545, %v1500
      %v1547 = vadd.f32 %v1546, %v1503
      %v1548 = vadd.f32 %v1547, %v1506
      %v1549 = vadd.f32 %v1548, %v1509
      %v1550 = vadd.f32 %v1549, %v1512
      %v1551 = vadd.f32 %v1550, %v1515
      %v1552 = vadd.f32 %v1551, %v1518
      %v1553 = vadd.f32 %v1552, %v1521
      %v1554 = vrot.slane %v1553, 4
      %v1555 = vadd.f32 %v1553, %v1554
      %v1556 = vrot.slane %v1555, 2
      %v1557 = vadd.f32 %v1555, %v1556
      %v1558 = vrot.slane %v1557, 1
      %v1559 = vadd.f32 %v1557, %v1558
      %v1560 = vmul.f32 %v1476, %v1476
      %v1561 = vmul.f32 %v1479, %v1479
      %v1562 = vmul.f32 %v1482, %v1482
      %v1563 = vmul.f32 %v1485, %v1485
      %v1564 = vmul.f32 %v1488, %v1488
      %v1565 = vmul.f32 %v1491, %v1491
      %v1566 = vmul.f32 %v1494, %v1494
      %v1567 = vmul.f32 %v1497, %v1497
      %v1568 = vmul.f32 %v1500, %v1500
      %v1569 = vmul.f32 %v1503, %v1503
      %v1570 = vmul.f32 %v1506, %v1506
      %v1571 = vmul.f32 %v1509, %v1509
      %v1572 = vmul.f32 %v1512, %v1512
      %v1573 = vmul.f32 %v1515, %v1515
      %v1574 = vmul.f32 %v1518, %v1518
      %v1575 = vmul.f32 %v1521, %v1521
      %v1576 = vadd.f32 %v1560, %v1561
      %v1577 = vadd.f32 %v1576, %v1562
      %v1578 = vadd.f32 %v1577, %v1563
      %v1579 = vadd.f32 %v1578, %v1564
      %v1580 = vadd.f32 %v1579, %v1565
      %v1581 = vadd.f32 %v1580, %v1566
      %v1582 = vadd.f32 %v1581, %v1567
      %v1583 = vadd.f32 %v1582, %v1568
      %v1584 = vadd.f32 %v1583, %v1569
      %v1585 = vadd.f32 %v1584, %v1570
      %v1586 = vadd.f32 %v1585, %v1571
      %v1587 = vadd.f32 %v1586, %v1572
      %v1588 = vadd.f32 %v1587, %v1573
      %v1589 = vadd.f32 %v1588, %v1574
      %v1590 = vadd.f32 %v1589, %v1575
      %v1591 = vrot.slane %v1590, 4
      %v1592 = vadd.f32 %v1590, %v1591
      %v1593 = vrot.slane %v1592, 2
      %v1594 = vadd.f32 %v1592, %v1593
      %v1595 = vrot.slane %v1594, 1
      %v1596 = vadd.f32 %v1594, %v1595
      %v1597 = vsel %vm547, %v1559, %v1596
      %vm1598 = vcmask 1041408
      %v1599 = vsel %vm1598, %v1597, 0.0
      %1600 = vst [vmem:[%s494] sm:$0xff] %v1599
      %s1601 = smul.u32 8, %s25
      %p1602 = scmp.lt.s32.totalorder %s24, 1
      %s1603 = scalar_select %p1602, %s24, 1
      %p1604 = scmp.lt.s32.totalorder %s1601, 15
      %s1605 = scalar_select %p1604, %s1601, 15
      %s1606 = smul.addr %s1605, 2
      %s1607 = smul.addr %s1603, 32
      %s1608 = sadd.s32 %s1606, %s1607
      %s1609 = smul.addr %s1608, 8
      %s1610 = scalar_lea.vmem %s7, %s1609
      %p1611 = scmp.lt.s32.totalorder %s24, 1
      %s1612 = scalar_select %p1611, %s24, 1
      %p1613 = scmp.lt.s32.totalorder %s25, 1
      %s1614 = scalar_select %p1613, %s25, 1
      %s1615 = smul.addr %s1612, 2
      %s1616 = sadd.s32 %s1614, %s1615
      %s1617 = smul.addr %s1616, 8
      %s1618 = scalar_lea.vmem %s8, %s1617
      // Predicated region
      $region49: #{double_conv.3} parent=47 // pred_check
        %p1619 = pneg %p236
      $region50: #{double_conv.3} parent=47 // pred_check_branch
        %1621 = sbr.rel (%p1619) target = $region52
      $region51: #{double_conv.3} parent=47 // pred_region
        %s1622 = smul.u32 8, %s25
      $region52: #{double_conv.3} parent=47 // pred_fallthru
        _
      // Predicated region
      $region53: #{double_conv.3} parent=47 // pred_check
        %p1623 = pneg %p264
      $region54: #{double_conv.3} parent=47 // pred_check_branch
        %1625 = sbr.rel (%p1623) target = $region56
      $region55: #{double_conv.3} parent=47 // pred_region
        _
      $region56: #{double_conv.3} parent=47 // pred_fallthru
        _
    $region48: #{double_conv.3} parent=5 // pred_fallthru
      _
    %p1626 = scmp.le.s32.totalorder 2, %s15
    // Predicated region
    $region57: #{double_conv.3} parent=5 // pred_check
      %p1627 = pneg %p1626
    $region58: #{double_conv.3} parent=5 // pred_check_branch
      %1629 = sbr.rel (%p1627) target = $region60
    $region59: #{double_conv.3} parent=5 // pred_region
      %s1630 = ssub.s32 %s15, 2
      // Predicated region
      $region61: #{double_conv.3} parent=59 // pred_check
        %p1631 = pneg %p242
      $region62: #{double_conv.3} parent=59 // pred_check_branch
        %1633 = sbr.rel (%p1631) target = $region64
      $region63: #{double_conv.3} parent=59 // pred_region
        %s1634 = smul.u32 8, %s27
        %p1635 = scmp.lt.s32.totalorder %s26, 1
        %s1636 = scalar_select %p1635, %s26, 1
        %p1637 = scmp.lt.s32.totalorder %s1634, 15
        %s1638 = scalar_select %p1637, %s1634, 15
        %s1639 = smul.addr %s1638, 2
        %s1640 = smul.addr %s1636, 32
        %s1641 = sadd.s32 %s1639, %s1640
        %s1642 = smul.addr %s1641, 8
        %s1643 = scalar_lea.vmem %s7, %s1642
      $region64: #{double_conv.3} parent=59 // pred_fallthru
        _
      // Predicated region
      $region65: #{double_conv.3} parent=59 // pred_check
        %p1644 = pneg %p270
      $region66: #{double_conv.3} parent=59 // pred_check_branch
        %1646 = sbr.rel (%p1644) target = $region68
      $region67: #{double_conv.3} parent=59 // pred_region
        %p1647 = scmp.lt.s32.totalorder %s26, 1
        %s1648 = scalar_select %p1647, %s26, 1
        %p1649 = scmp.lt.s32.totalorder %s27, 1
        %s1650 = scalar_select %p1649, %s27, 1
        %s1651 = smul.addr %s1648, 2
        %s1652 = sadd.s32 %s1650, %s1651
        %s1653 = smul.addr %s1652, 8
        %s1654 = scalar_lea.vmem %s8, %s1653
      $region68: #{double_conv.3} parent=59 // pred_fallthru
        _
    $region60: #{double_conv.3} parent=5 // pred_fallthru
      _
  $region6: #{double_conv.3} parent=0 // loop_footer
    %s19 = sadd.s32 1, %s15
  $region7: #{double_conv.3} parent=0 // loop_footer_branch
    %14 = sbr.rel target = $region3
  $region8: #{double_conv.3} parent=0 // loop_exit
    _

</llo_original>
